<compile_context>
chip_gen: v7x
topology: tpu7x:2x2x1
jax: 0.10.0
libtpu: 0.0.40
codegen_flags: <defaults>
</compile_context>

<pallas_src>
import functools

import jax
import jax.numpy as jnp
from jax.experimental import pallas as pl
from jax.experimental.pallas import tpu as pltpu

EPS = 1e-5  # PyTorch InstanceNorm2d default eps


def _decompress_kernel(x_ref, w_ref, out_ref, acc_ref, *, h, w, ci, co):
    # x_ref:   (1, H+2, W+2, Ci)  NHWC input, spatially zero-padded by 1
    # w_ref:   (4, 4*Ci, Co)      per-phase im2col weights, phase p = 2*a + b
    # out_ref: (1, 4, H*W, Co)    per-phase normalized+ReLU'd outputs
    # acc_ref: (4, H*W, Co) f32   VMEM scratch with raw conv results
    x = x_ref[0]  # keep native dtype; MXU accumulates in f32 below

    # Only 3 sublane-shifted copies are needed (column shifts 0/1/2); all remaining
    # slices below are cheap leading-dim (slab) slices.
    xcols = (x[:, 0:w, :], x[:, 1:1 + w, :], x[:, 2:2 + w, :])  # each (H+2, W, Ci)

    s = jnp.zeros((1, co), jnp.float32)
    sq = jnp.zeros((1, co), jnp.float32)
    for a in (0, 1):
        for b in (0, 1):
            p = 2 * a + b
            # im2col for this output-parity phase: fold the 2x2 window taps into the
            # contraction dim -> single MXU matmul with K = 4*Ci.
            taps = [xcols[b + dw][a + dh:a + dh + h]
                    for dh in (0, 1) for dw in (0, 1)]          # 4 x (H, W, Ci)
            patch = jnp.concatenate(taps, axis=-1).reshape(h * w, 4 * ci)
            y = jnp.dot(patch, w_ref[p], preferred_element_type=jnp.float32)
            acc_ref[p] = y
            s = s + jnp.sum(y, axis=0, keepdims=True)
            sq = sq + jnp.sum(y * y, axis=0, keepdims=True)

    # InstanceNorm2d (affine=False, biased variance) over all 4 phases, one-pass in f32.
    inv_n = 1.0 / (4 * h * w)
    mean = s * inv_n
    var = sq * inv_n - mean * mean
    scale = jax.lax.rsqrt(var + EPS)
    for p in range(4):
        yp = acc_ref[p]
        out_ref[0, p] = jnp.maximum((yp - mean) * scale, 0.0).astype(out_ref.dtype)


def unet_decompress(x, skip, weight):
    """x: (N, Ci, H, W); skip: (N, Cs, 2H, 2W); weight: (Ci, Co, 4, 4) PyTorch ConvT layout."""
    n, ci, h, w = x.shape
    co = weight.shape[1]

    # NCHW -> NHWC + zero-pad spatially by 1 (covers the transposed-conv halo).
    x_pad = jnp.pad(jnp.transpose(x, (0, 2, 3, 1)),
                    ((0, 0), (1, 1), (1, 1), (0, 0)))            # (N, H+2, W+2, Ci)

    # Matmul-ready per-phase weights: phase p = 2*a + b; rows ordered (dh, dw, ci) to
    # match the in-kernel im2col concat order.
    blocks = []
    for a in (0, 1):
        for b in (0, 1):
            taps = []
            for dh in (0, 1):
                kh = 3 - 2 * dh if a == 0 else 2 - 2 * dh
                for dw in (0, 1):
                    kw = 3 - 2 * dw if b == 0 else 2 - 2 * dw
                    taps.append(weight[:, :, kh, kw])            # (Ci, Co)
            blocks.append(jnp.concatenate(taps, axis=0))         # (4*Ci, Co)
    w_phase = jnp.stack(blocks, axis=0)                          # (4, 4*Ci, Co)

    hp, wp = h + 2, w + 2
    out = pl.pallas_call(
        functools.partial(_decompress_kernel, h=h, w=w, ci=ci, co=co),
        out_shape=jax.ShapeDtypeStruct((n, 4, h * w, co), x.dtype),
        grid_spec=pltpu.PrefetchScalarGridSpec(
            num_scalar_prefetch=0,
            grid=(n,),  # one sample per grid step
            in_specs=[
                pl.BlockSpec((1, hp, wp, ci), lambda bi: (bi, 0, 0, 0)),
                pl.BlockSpec((4, 4 * ci, co), lambda bi: (0, 0, 0)),
            ],
            out_specs=pl.BlockSpec((1, 4, h * w, co), lambda bi: (bi, 0, 0, 0)),
            scratch_shapes=[pltpu.VMEM((4, h * w, co), jnp.float32)],
        ),
        compiler_params=pltpu.CompilerParams(dimension_semantics=("parallel",)),
    )(x_pad, w_phase)

    # Pixel-shuffle the 4 parity phases back to (N, Co, 2H, 2W) in the wrapper and do the
    # channel concat with skip directly in NCHW (contiguous block concat; skip untouched).
    f = out.reshape(n, 2, 2, h, w, co)                      # (N, a, b, r, c, Co)
    f = jnp.transpose(f, (0, 5, 3, 1, 4, 2)).reshape(n, co, 2 * h, 2 * w)
    return jnp.concatenate([f, skip], axis=1)


def ref_forward(x, skip, weight):
    """Pure-JAX reference matching the PyTorch module (NCHW)."""
    wk = jnp.transpose(weight[:, :, ::-1, ::-1], (1, 0, 2, 3))  # (Co, Ci, 4, 4)
    f = jax.lax.conv_general_dilated(
        x, wk, window_strides=(1, 1), padding=((2, 2), (2, 2)),
        lhs_dilation=(2, 2), dimension_numbers=("NCHW", "OIHW", "NCHW"))
    mean = jnp.mean(f, axis=(2, 3), keepdims=True)
    var = jnp.mean((f - mean) ** 2, axis=(2, 3), keepdims=True)
    f = jnp.maximum((f - mean) / jnp.sqrt(var + EPS), 0.0)
    return jnp.concatenate([f, skip], axis=1)


if __name__ == "__main__":
    # dropout=0.0 module default -> no Dropout layer (identity); nothing to implement.
    key = jax.random.PRNGKey(0)
    k1, k2, k3 = jax.random.split(key, 3)

    N, Ci, Co, H, W = 2, 8, 4, 16, 16
    Cs = Co  # typical UNet skip channel count
    x = jax.random.normal(k1, (N, Ci, H, W), jnp.float32)
    skip = jax.random.normal(k2, (N, Cs, 2 * H, 2 * W), jnp.float32)
    # Deterministic synthetic ConvTranspose2d weight: (in_size, out_size, 4, 4), bias=False.
    weight = 0.1 * jax.random.normal(k3, (Ci, Co, 4, 4), jnp.float32)

    out = jax.jit(unet_decompress)(x, skip, weight)
    out = jax.block_until_ready(out)

    ref = ref_forward(x, skip, weight)
    assert out.shape == (N, Co + Cs, 2 * H, 2 * W), out.shape
    max_err = float(jnp.max(jnp.abs(out - ref)))
    assert jnp.allclose(out, ref, atol=1e-4, rtol=1e-4), max_err
    print("KERNEL_OK")
</pallas_src>

<mosaic_0001>
module attributes {stable_mosaic.version = 11 : i64} {
  func.func @_decompress_kernel(%arg0: i32, %arg1: memref<1x18x18x8xf32, #tpu.memory_space<vmem>>, %arg2: memref<4x32x4xf32, #tpu.memory_space<vmem>>, %arg3: memref<1x4x256x4xf32, #tpu.memory_space<vmem>>, %arg4: memref<4x256x4xf32, #tpu.memory_space<vmem>>) attributes {dimension_semantics = [#tpu.dimension_semantics<parallel>], iteration_bounds = array<i64: 2>, scalar_prefetch = 0 : i64, scratch_operands = 1 : i64, tpu.core_type = #tpu.core_type<tc>, window_params = [{transform_indices = @transform_0, window_bounds = array<i64: 1, 18, 18, 8>}, {pipeline_mode = #tpu.pipeline_mode<synchronous>, transform_indices = @transform_1, window_bounds = array<i64: 4, 32, 4>}, {transform_indices = @transform_2, window_bounds = array<i64: 1, 4, 256, 4>}]} {
    %c0 = arith.constant 0 : index
    %c0_0 = arith.constant 0 : index
    %c0_1 = arith.constant 0 : index
    %c0_2 = arith.constant 0 : index
    %0 = vector.load %arg1[%c0, %c0_0, %c0_1, %c0_2] : memref<1x18x18x8xf32, #tpu.memory_space<vmem>>, vector<1x18x18x8xf32>
    %1 = vector.shape_cast %0 : vector<1x18x18x8xf32> to vector<18x18x8xf32>
    %2 = vector.extract_strided_slice %1 {offsets = [0, 0, 0], sizes = [18, 16, 8], strides = [1, 1, 1]} : vector<18x18x8xf32> to vector<18x16x8xf32>
    %3 = vector.extract_strided_slice %1 {offsets = [0, 1, 0], sizes = [18, 16, 8], strides = [1, 1, 1]} : vector<18x18x8xf32> to vector<18x16x8xf32>
    %4 = vector.extract_strided_slice %1 {offsets = [0, 2, 0], sizes = [18, 16, 8], strides = [1, 1, 1]} : vector<18x18x8xf32> to vector<18x16x8xf32>
    %cst = arith.constant 0.000000e+00 : f32
    %5 = vector.broadcast %cst : f32 to vector<1x4xf32>
    %cst_3 = arith.constant 0.000000e+00 : f32
    %6 = vector.broadcast %cst_3 : f32 to vector<1x4xf32>
    %7 = vector.extract_strided_slice %2 {offsets = [0, 0, 0], sizes = [16, 16, 8], strides = [1, 1, 1]} : vector<18x16x8xf32> to vector<16x16x8xf32>
    %8 = vector.extract_strided_slice %3 {offsets = [0, 0, 0], sizes = [16, 16, 8], strides = [1, 1, 1]} : vector<18x16x8xf32> to vector<16x16x8xf32>
    %9 = vector.extract_strided_slice %2 {offsets = [1, 0, 0], sizes = [16, 16, 8], strides = [1, 1, 1]} : vector<18x16x8xf32> to vector<16x16x8xf32>
    %10 = vector.extract_strided_slice %3 {offsets = [1, 0, 0], sizes = [16, 16, 8], strides = [1, 1, 1]} : vector<18x16x8xf32> to vector<16x16x8xf32>
    %11 = tpu.concatenate %7, %8, %9, %10 in 2 : vector<16x16x8xf32>, vector<16x16x8xf32>, vector<16x16x8xf32>, vector<16x16x8xf32> -> vector<16x16x32xf32>
    %12 = vector.shape_cast %11 : vector<16x16x32xf32> to vector<256x32xf32>
    %c0_4 = arith.constant 0 : index
    %c0_5 = arith.constant 0 : index
    %c0_6 = arith.constant 0 : index
    %13 = vector.load %arg2[%c0_4, %c0_5, %c0_6] : memref<4x32x4xf32, #tpu.memory_space<vmem>>, vector<1x32x4xf32>
    %14 = vector.shape_cast %13 : vector<1x32x4xf32> to vector<32x4xf32>
    %cst_7 = arith.constant dense<0.000000e+00> : vector<256x4xf32>
    %15 = tpu.matmul %12, %14, %cst_7 {dimension_numbers = #tpu.dot_dimension_numbers<[1], [0], [0], [1], [0, 0, 1, 1], [], []>} : vector<256x32xf32>, vector<32x4xf32>, vector<256x4xf32> -> vector<256x4xf32>
    %c0_8 = arith.constant 0 : index
    %c0_9 = arith.constant 0 : index
    %c0_10 = arith.constant 0 : index
    %16 = vector.load %arg4[%c0_8, %c0_9, %c0_10] : memref<4x256x4xf32, #tpu.memory_space<vmem>>, vector<1x256x4xf32>
    %17 = vector.shape_cast %16 : vector<1x256x4xf32> to vector<256x4xf32>
    %18 = vector.shape_cast %15 : vector<256x4xf32> to vector<1x256x4xf32>
    tpu.vector_store %arg4[%c0_8, %c0_9, %c0_10], %18 {strides = array<i32>} : memref<4x256x4xf32, #tpu.memory_space<vmem>>, vector<1x256x4xf32>,
    %cst_11 = arith.constant dense<0.000000e+00> : vector<4xf32>
    %19 = vector.multi_reduction <add>, %15, %cst_11 [0] : vector<256x4xf32> to vector<4xf32>
    %20 = vector.shape_cast %19 : vector<4xf32> to vector<1x4xf32>
    %21 = arith.addf %5, %20 : vector<1x4xf32>
    %22 = arith.mulf %15, %15 : vector<256x4xf32>
    %cst_12 = arith.constant dense<0.000000e+00> : vector<4xf32>
    %23 = vector.multi_reduction <add>, %22, %cst_12 [0] : vector<256x4xf32> to vector<4xf32>
    %24 = vector.shape_cast %23 : vector<4xf32> to vector<1x4xf32>
    %25 = arith.addf %6, %24 : vector<1x4xf32>
    %26 = vector.extract_strided_slice %3 {offsets = [0, 0, 0], sizes = [16, 16, 8], strides = [1, 1, 1]} : vector<18x16x8xf32> to vector<16x16x8xf32>
    %27 = vector.extract_strided_slice %4 {offsets = [0, 0, 0], sizes = [16, 16, 8], strides = [1, 1, 1]} : vector<18x16x8xf32> to vector<16x16x8xf32>
    %28 = vector.extract_strided_slice %3 {offsets = [1, 0, 0], sizes = [16, 16, 8], strides = [1, 1, 1]} : vector<18x16x8xf32> to vector<16x16x8xf32>
    %29 = vector.extract_strided_slice %4 {offsets = [1, 0, 0], sizes = [16, 16, 8], strides = [1, 1, 1]} : vector<18x16x8xf32> to vector<16x16x8xf32>
    %30 = tpu.concatenate %26, %27, %28, %29 in 2 : vector<16x16x8xf32>, vector<16x16x8xf32>, vector<16x16x8xf32>, vector<16x16x8xf32> -> vector<16x16x32xf32>
    %31 = vector.shape_cast %30 : vector<16x16x32xf32> to vector<256x32xf32>
    %c1 = arith.constant 1 : index
    %c0_13 = arith.constant 0 : index
    %c0_14 = arith.constant 0 : index
    %32 = vector.load %arg2[%c1, %c0_13, %c0_14] : memref<4x32x4xf32, #tpu.memory_space<vmem>>, vector<1x32x4xf32>
    %33 = vector.shape_cast %32 : vector<1x32x4xf32> to vector<32x4xf32>
    %cst_15 = arith.constant dense<0.000000e+00> : vector<256x4xf32>
    %34 = tpu.matmul %31, %33, %cst_15 {dimension_numbers = #tpu.dot_dimension_numbers<[1], [0], [0], [1], [0, 0, 1, 1], [], []>} : vector<256x32xf32>, vector<32x4xf32>, vector<256x4xf32> -> vector<256x4xf32>
    %c1_16 = arith.constant 1 : index
    %c0_17 = arith.constant 0 : index
    %c0_18 = arith.constant 0 : index
    %35 = vector.load %arg4[%c1_16, %c0_17, %c0_18] : memref<4x256x4xf32, #tpu.memory_space<vmem>>, vector<1x256x4xf32>
    %36 = vector.shape_cast %35 : vector<1x256x4xf32> to vector<256x4xf32>
    %37 = vector.shape_cast %34 : vector<256x4xf32> to vector<1x256x4xf32>
    tpu.vector_store %arg4[%c1_16, %c0_17, %c0_18], %37 {strides = array<i32>} : memref<4x256x4xf32, #tpu.memory_space<vmem>>, vector<1x256x4xf32>,
    %cst_19 = arith.constant dense<0.000000e+00> : vector<4xf32>
    %38 = vector.multi_reduction <add>, %34, %cst_19 [0] : vector<256x4xf32> to vector<4xf32>
    %39 = vector.shape_cast %38 : vector<4xf32> to vector<1x4xf32>
    %40 = arith.addf %21, %39 : vector<1x4xf32>
    %41 = arith.mulf %34, %34 : vector<256x4xf32>
    %cst_20 = arith.constant dense<0.000000e+00> : vector<4xf32>
    %42 = vector.multi_reduction <add>, %41, %cst_20 [0] : vector<256x4xf32> to vector<4xf32>
    %43 = vector.shape_cast %42 : vector<4xf32> to vector<1x4xf32>
    %44 = arith.addf %25, %43 : vector<1x4xf32>
    %45 = vector.extract_strided_slice %2 {offsets = [1, 0, 0], sizes = [16, 16, 8], strides = [1, 1, 1]} : vector<18x16x8xf32> to vector<16x16x8xf32>
    %46 = vector.extract_strided_slice %3 {offsets = [1, 0, 0], sizes = [16, 16, 8], strides = [1, 1, 1]} : vector<18x16x8xf32> to vector<16x16x8xf32>
    %47 = vector.extract_strided_slice %2 {offsets = [2, 0, 0], sizes = [16, 16, 8], strides = [1, 1, 1]} : vector<18x16x8xf32> to vector<16x16x8xf32>
    %48 = vector.extract_strided_slice %3 {offsets = [2, 0, 0], sizes = [16, 16, 8], strides = [1, 1, 1]} : vector<18x16x8xf32> to vector<16x16x8xf32>
    %49 = tpu.concatenate %45, %46, %47, %48 in 2 : vector<16x16x8xf32>, vector<16x16x8xf32>, vector<16x16x8xf32>, vector<16x16x8xf32> -> vector<16x16x32xf32>
    %50 = vector.shape_cast %49 : vector<16x16x32xf32> to vector<256x32xf32>
    %c2 = arith.constant 2 : index
    %c0_21 = arith.constant 0 : index
    %c0_22 = arith.constant 0 : index
    %51 = vector.load %arg2[%c2, %c0_21, %c0_22] : memref<4x32x4xf32, #tpu.memory_space<vmem>>, vector<1x32x4xf32>
    %52 = vector.shape_cast %51 : vector<1x32x4xf32> to vector<32x4xf32>
    %cst_23 = arith.constant dense<0.000000e+00> : vector<256x4xf32>
    %53 = tpu.matmul %50, %52, %cst_23 {dimension_numbers = #tpu.dot_dimension_numbers<[1], [0], [0], [1], [0, 0, 1, 1], [], []>} : vector<256x32xf32>, vector<32x4xf32>, vector<256x4xf32> -> vector<256x4xf32>
    %c2_24 = arith.constant 2 : index
    %c0_25 = arith.constant 0 : index
    %c0_26 = arith.constant 0 : index
    %54 = vector.load %arg4[%c2_24, %c0_25, %c0_26] : memref<4x256x4xf32, #tpu.memory_space<vmem>>, vector<1x256x4xf32>
    %55 = vector.shape_cast %54 : vector<1x256x4xf32> to vector<256x4xf32>
    %56 = vector.shape_cast %53 : vector<256x4xf32> to vector<1x256x4xf32>
    tpu.vector_store %arg4[%c2_24, %c0_25, %c0_26], %56 {strides = array<i32>} : memref<4x256x4xf32, #tpu.memory_space<vmem>>, vector<1x256x4xf32>,
    %cst_27 = arith.constant dense<0.000000e+00> : vector<4xf32>
    %57 = vector.multi_reduction <add>, %53, %cst_27 [0] : vector<256x4xf32> to vector<4xf32>
    %58 = vector.shape_cast %57 : vector<4xf32> to vector<1x4xf32>
    %59 = arith.addf %40, %58 : vector<1x4xf32>
    %60 = arith.mulf %53, %53 : vector<256x4xf32>
    %cst_28 = arith.constant dense<0.000000e+00> : vector<4xf32>
    %61 = vector.multi_reduction <add>, %60, %cst_28 [0] : vector<256x4xf32> to vector<4xf32>
    %62 = vector.shape_cast %61 : vector<4xf32> to vector<1x4xf32>
    %63 = arith.addf %44, %62 : vector<1x4xf32>
    %64 = vector.extract_strided_slice %3 {offsets = [1, 0, 0], sizes = [16, 16, 8], strides = [1, 1, 1]} : vector<18x16x8xf32> to vector<16x16x8xf32>
    %65 = vector.extract_strided_slice %4 {offsets = [1, 0, 0], sizes = [16, 16, 8], strides = [1, 1, 1]} : vector<18x16x8xf32> to vector<16x16x8xf32>
    %66 = vector.extract_strided_slice %3 {offsets = [2, 0, 0], sizes = [16, 16, 8], strides = [1, 1, 1]} : vector<18x16x8xf32> to vector<16x16x8xf32>
    %67 = vector.extract_strided_slice %4 {offsets = [2, 0, 0], sizes = [16, 16, 8], strides = [1, 1, 1]} : vector<18x16x8xf32> to vector<16x16x8xf32>
    %68 = tpu.concatenate %64, %65, %66, %67 in 2 : vector<16x16x8xf32>, vector<16x16x8xf32>, vector<16x16x8xf32>, vector<16x16x8xf32> -> vector<16x16x32xf32>
    %69 = vector.shape_cast %68 : vector<16x16x32xf32> to vector<256x32xf32>
    %c3 = arith.constant 3 : index
    %c0_29 = arith.constant 0 : index
    %c0_30 = arith.constant 0 : index
    %70 = vector.load %arg2[%c3, %c0_29, %c0_30] : memref<4x32x4xf32, #tpu.memory_space<vmem>>, vector<1x32x4xf32>
    %71 = vector.shape_cast %70 : vector<1x32x4xf32> to vector<32x4xf32>
    %cst_31 = arith.constant dense<0.000000e+00> : vector<256x4xf32>
    %72 = tpu.matmul %69, %71, %cst_31 {dimension_numbers = #tpu.dot_dimension_numbers<[1], [0], [0], [1], [0, 0, 1, 1], [], []>} : vector<256x32xf32>, vector<32x4xf32>, vector<256x4xf32> -> vector<256x4xf32>
    %c3_32 = arith.constant 3 : index
    %c0_33 = arith.constant 0 : index
    %c0_34 = arith.constant 0 : index
    %73 = vector.load %arg4[%c3_32, %c0_33, %c0_34] : memref<4x256x4xf32, #tpu.memory_space<vmem>>, vector<1x256x4xf32>
    %74 = vector.shape_cast %73 : vector<1x256x4xf32> to vector<256x4xf32>
    %75 = vector.shape_cast %72 : vector<256x4xf32> to vector<1x256x4xf32>
    tpu.vector_store %arg4[%c3_32, %c0_33, %c0_34], %75 {strides = array<i32>} : memref<4x256x4xf32, #tpu.memory_space<vmem>>, vector<1x256x4xf32>,
    %cst_35 = arith.constant dense<0.000000e+00> : vector<4xf32>
    %76 = vector.multi_reduction <add>, %72, %cst_35 [0] : vector<256x4xf32> to vector<4xf32>
    %77 = vector.shape_cast %76 : vector<4xf32> to vector<1x4xf32>
    %78 = arith.addf %59, %77 : vector<1x4xf32>
    %79 = arith.mulf %72, %72 : vector<256x4xf32>
    %cst_36 = arith.constant dense<0.000000e+00> : vector<4xf32>
    %80 = vector.multi_reduction <add>, %79, %cst_36 [0] : vector<256x4xf32> to vector<4xf32>
    %81 = vector.shape_cast %80 : vector<4xf32> to vector<1x4xf32>
    %82 = arith.addf %63, %81 : vector<1x4xf32>
    %cst_37 = arith.constant 9.765625E-4 : f32
    %83 = vector.broadcast %cst_37 : f32 to vector<1x4xf32>
    %84 = arith.mulf %78, %83 : vector<1x4xf32>
    %cst_38 = arith.constant 9.765625E-4 : f32
    %85 = vector.broadcast %cst_38 : f32 to vector<1x4xf32>
    %86 = arith.mulf %82, %85 : vector<1x4xf32>
    %87 = arith.mulf %84, %84 : vector<1x4xf32>
    %88 = arith.subf %86, %87 : vector<1x4xf32>
    %cst_39 = arith.constant 9.99999974E-6 : f32
    %89 = vector.broadcast %cst_39 : f32 to vector<1x4xf32>
    %90 = arith.addf %88, %89 : vector<1x4xf32>
    %91 = math.rsqrt %90 : vector<1x4xf32>
    %c0_40 = arith.constant 0 : index
    %c0_41 = arith.constant 0 : index
    %c0_42 = arith.constant 0 : index
    %92 = vector.load %arg4[%c0_40, %c0_41, %c0_42] : memref<4x256x4xf32, #tpu.memory_space<vmem>>, vector<1x256x4xf32>
    %93 = vector.shape_cast %92 : vector<1x256x4xf32> to vector<256x4xf32>
    %94 = vector.broadcast %84 : vector<1x4xf32> to vector<256x4xf32>
    %95 = arith.subf %93, %94 : vector<256x4xf32>
    %96 = vector.broadcast %91 : vector<1x4xf32> to vector<256x4xf32>
    %97 = arith.mulf %95, %96 : vector<256x4xf32>
    %cst_43 = arith.constant 0.000000e+00 : f32
    %98 = vector.broadcast %cst_43 : f32 to vector<256x4xf32>
    %99 = arith.maximumf %97, %98 : vector<256x4xf32>
    %c0_44 = arith.constant 0 : index
    %c0_45 = arith.constant 0 : index
    %c0_46 = arith.constant 0 : index
    %c0_47 = arith.constant 0 : index
    %100 = vector.load %arg3[%c0_44, %c0_45, %c0_46, %c0_47] : memref<1x4x256x4xf32, #tpu.memory_space<vmem>>, vector<1x1x256x4xf32>
    %101 = vector.shape_cast %100 : vector<1x1x256x4xf32> to vector<256x4xf32>
    %102 = vector.shape_cast %99 : vector<256x4xf32> to vector<1x1x256x4xf32>
    tpu.vector_store %arg3[%c0_44, %c0_45, %c0_46, %c0_47], %102 {strides = array<i32>} : memref<1x4x256x4xf32, #tpu.memory_space<vmem>>, vector<1x1x256x4xf32>,
    %c1_48 = arith.constant 1 : index
    %c0_49 = arith.constant 0 : index
    %c0_50 = arith.constant 0 : index
    %103 = vector.load %arg4[%c1_48, %c0_49, %c0_50] : memref<4x256x4xf32, #tpu.memory_space<vmem>>, vector<1x256x4xf32>
    %104 = vector.shape_cast %103 : vector<1x256x4xf32> to vector<256x4xf32>
    %105 = vector.broadcast %84 : vector<1x4xf32> to vector<256x4xf32>
    %106 = arith.subf %104, %105 : vector<256x4xf32>
    %107 = vector.broadcast %91 : vector<1x4xf32> to vector<256x4xf32>
    %108 = arith.mulf %106, %107 : vector<256x4xf32>
    %cst_51 = arith.constant 0.000000e+00 : f32
    %109 = vector.broadcast %cst_51 : f32 to vector<256x4xf32>
    %110 = arith.maximumf %108, %109 : vector<256x4xf32>
    %c0_52 = arith.constant 0 : index
    %c1_53 = arith.constant 1 : index
    %c0_54 = arith.constant 0 : index
    %c0_55 = arith.constant 0 : index
    %111 = vector.load %arg3[%c0_52, %c1_53, %c0_54, %c0_55] : memref<1x4x256x4xf32, #tpu.memory_space<vmem>>, vector<1x1x256x4xf32>
    %112 = vector.shape_cast %111 : vector<1x1x256x4xf32> to vector<256x4xf32>
    %113 = vector.shape_cast %110 : vector<256x4xf32> to vector<1x1x256x4xf32>
    tpu.vector_store %arg3[%c0_52, %c1_53, %c0_54, %c0_55], %113 {strides = array<i32>} : memref<1x4x256x4xf32, #tpu.memory_space<vmem>>, vector<1x1x256x4xf32>,
    %c2_56 = arith.constant 2 : index
    %c0_57 = arith.constant 0 : index
    %c0_58 = arith.constant 0 : index
    %114 = vector.load %arg4[%c2_56, %c0_57, %c0_58] : memref<4x256x4xf32, #tpu.memory_space<vmem>>, vector<1x256x4xf32>
    %115 = vector.shape_cast %114 : vector<1x256x4xf32> to vector<256x4xf32>
    %116 = vector.broadcast %84 : vector<1x4xf32> to vector<256x4xf32>
    %117 = arith.subf %115, %116 : vector<256x4xf32>
    %118 = vector.broadcast %91 : vector<1x4xf32> to vector<256x4xf32>
    %119 = arith.mulf %117, %118 : vector<256x4xf32>
    %cst_59 = arith.constant 0.000000e+00 : f32
    %120 = vector.broadcast %cst_59 : f32 to vector<256x4xf32>
    %121 = arith.maximumf %119, %120 : vector<256x4xf32>
    %c0_60 = arith.constant 0 : index
    %c2_61 = arith.constant 2 : index
    %c0_62 = arith.constant 0 : index
    %c0_63 = arith.constant 0 : index
    %122 = vector.load %arg3[%c0_60, %c2_61, %c0_62, %c0_63] : memref<1x4x256x4xf32, #tpu.memory_space<vmem>>, vector<1x1x256x4xf32>
    %123 = vector.shape_cast %122 : vector<1x1x256x4xf32> to vector<256x4xf32>
    %124 = vector.shape_cast %121 : vector<256x4xf32> to vector<1x1x256x4xf32>
    tpu.vector_store %arg3[%c0_60, %c2_61, %c0_62, %c0_63], %124 {strides = array<i32>} : memref<1x4x256x4xf32, #tpu.memory_space<vmem>>, vector<1x1x256x4xf32>,
    %c3_64 = arith.constant 3 : index
    %c0_65 = arith.constant 0 : index
    %c0_66 = arith.constant 0 : index
    %125 = vector.load %arg4[%c3_64, %c0_65, %c0_66] : memref<4x256x4xf32, #tpu.memory_space<vmem>>, vector<1x256x4xf32>
    %126 = vector.shape_cast %125 : vector<1x256x4xf32> to vector<256x4xf32>
    %127 = vector.broadcast %84 : vector<1x4xf32> to vector<256x4xf32>
    %128 = arith.subf %126, %127 : vector<256x4xf32>
    %129 = vector.broadcast %91 : vector<1x4xf32> to vector<256x4xf32>
    %130 = arith.mulf %128, %129 : vector<256x4xf32>
    %cst_67 = arith.constant 0.000000e+00 : f32
    %131 = vector.broadcast %cst_67 : f32 to vector<256x4xf32>
    %132 = arith.maximumf %130, %131 : vector<256x4xf32>
    %c0_68 = arith.constant 0 : index
    %c3_69 = arith.constant 3 : index
    %c0_70 = arith.constant 0 : index
    %c0_71 = arith.constant 0 : index
    %133 = vector.load %arg3[%c0_68, %c3_69, %c0_70, %c0_71] : memref<1x4x256x4xf32, #tpu.memory_space<vmem>>, vector<1x1x256x4xf32>
    %134 = vector.shape_cast %133 : vector<1x1x256x4xf32> to vector<256x4xf32>
    %135 = vector.shape_cast %132 : vector<256x4xf32> to vector<1x1x256x4xf32>
    tpu.vector_store %arg3[%c0_68, %c3_69, %c0_70, %c0_71], %135 {strides = array<i32>} : memref<1x4x256x4xf32, #tpu.memory_space<vmem>>, vector<1x1x256x4xf32>,
    return
  }
  func.func @transform_0(%arg0: i32) -> (i32, i32, i32, i32) {
    %c0_i32 = arith.constant 0 : i32
    %c0_i32_0 = arith.constant 0 : i32
    %c0_i32_1 = arith.constant 0 : i32
    %c0_i32_2 = arith.constant 0 : i32
    return %arg0, %c0_i32, %c0_i32_0, %c0_i32_1 : i32, i32, i32, i32
  }
  func.func @transform_1(%arg0: i32) -> (i32, i32, i32) {
    %c0_i32 = arith.constant 0 : i32
    %c0_i32_0 = arith.constant 0 : i32
    %c0_i32_1 = arith.constant 0 : i32
    %c0_i32_2 = arith.constant 0 : i32
    return %c0_i32, %c0_i32_0, %c0_i32_1 : i32, i32, i32
  }
  func.func @transform_2(%arg0: i32) -> (i32, i32, i32, i32) {
    %c0_i32 = arith.constant 0 : i32
    %c0_i32_0 = arith.constant 0 : i32
    %c0_i32_1 = arith.constant 0 : i32
    %c0_i32_2 = arith.constant 0 : i32
    return %arg0, %c0_i32, %c0_i32_0, %c0_i32_1 : i32, i32, i32, i32
  }
}

</mosaic_0001>

<llo_original>
// kernel: unet_decompress.1
$region0: #{unet_decompress.1}
  #allocation0 [shape = 'u32[]', space=smem, size = 0x4, offset = 0x4, fixed_abs, tag = 'smem constant byte address 0x4 - core index']
  #allocation1 [shape = 'u32[144,128]{1,0:T(1,128)}', space=vmem, size = 0x12000, scoped, tag = 'internal scratch']
  #allocation2 [shape = 'f32[4,256,4]{2,1,0:T(8,128)}', space=vmem, size = 0x80000, scoped, tag = 'scratch operand']
  %s0 = inlined_call_operand.vmem [shape: f32[2,18,18,8], index: 0, kind: input, shape index: {}]
  %s1 = inlined_call_operand.vmem [shape: f32[4,32,4], index: 1, kind: input, shape index: {}]
  %s2 = inlined_call_operand.vmem [shape: f32[2,4,256,4], index: 2, kind: output, shape index: {}]
  %s3 = sld [smem:[#allocation0]]
  $region41: #{unet_decompress.1} parent=0
    _
  %s5 = ssub.s32 1, %s3
  %s6 = scalar_select 0, %s5, %s3
  loop: start=0, step=1, limit=4
  $region2: #{unet_decompress.1} parent=0 // loop_pre_header
    _
  $region3: #{unet_decompress.1} parent=0 // loop_header
    %s8 = sphi 0, %s12
    %p9 = scmp.ge.s32.totalorder %s8, 4
    %s18 = sphi 0, %s20
    %s21 = sphi 0, %s18
    %s22 = sphi 0, %s21
    %s38 = sphi 0, %s22
    %s42 = sphi 0, %s42
    %s44 = sphi 0, %s42
    %s45 = sphi 0, %s44
    %s59 = sphi 0, %s45
    %s65 = sphi 0, %s67
    %s68 = sphi 0, %s65
    %s69 = sphi 0, %s68
    %s85 = sphi 0, %s69
  $region4: #{unet_decompress.1} parent=0 // loop_header_branch
    %11 = sbr.rel (%p9) target = $region8
  $region5: #{unet_decompress.1} parent=0 // loop_body
    %s13 = ssub.s32 %s8, 1
    %s14 = ssub.s32 %s8, 2
    %s15 = sadd.s32 %s8, 1
    %s16 = ssub.s32 %s8, %s15
    %p17 = scmp.eq.s32.totalorder %s16, 0
    %s19 = sadd.s32 %s18, 1
    %s20 = scalar_select %p17, %s18, %s19
    %p23 = pneg %p17
    %p24 = scmp.eq.s32.totalorder %s8, 1
    %p25 = por %p23, %p24
    %p26 = scmp.ne.s32.totalorder %s18, %s21
    %p27 = scmp.eq.s32.totalorder %s8, 0
    %p28 = por %p26, %p27
    %p29 = scmp.ne.s32.totalorder %s18, %s21
    %p30 = scmp.eq.s32.totalorder %s13, 1
    %p31 = por %p29, %p30
    %p32 = scmp.ne.s32.totalorder %s21, %s22
    %p33 = scmp.eq.s32.totalorder %s13, 0
    %p34 = por %p32, %p33
    %p35 = scmp.ne.s32.totalorder %s21, %s22
    %p36 = scmp.eq.s32.totalorder %s14, 1
    %p37 = por %p35, %p36
    %p39 = scmp.ne.s32.totalorder %s22, %s38
    %p40 = scmp.eq.s32.totalorder %s14, 0
    %p41 = por %p39, %p40
    %s43 = sadd.s32 %s42, 1
    %p46 = scmp.eq.s32.totalorder %s8, 1
    %p47 = scmp.ne.s32.totalorder %s42, %s44
    %p48 = scmp.eq.s32.totalorder %s8, 0
    %p49 = por %p47, %p48
    %p50 = scmp.ne.s32.totalorder %s42, %s44
    %p51 = scmp.eq.s32.totalorder %s13, 1
    %p52 = por %p50, %p51
    %p53 = scmp.ne.s32.totalorder %s44, %s45
    %p54 = scmp.eq.s32.totalorder %s13, 0
    %p55 = por %p53, %p54
    %p56 = scmp.ne.s32.totalorder %s44, %s45
    %p57 = scmp.eq.s32.totalorder %s14, 1
    %p58 = por %p56, %p57
    %p60 = scmp.ne.s32.totalorder %s45, %s59
    %p61 = scmp.eq.s32.totalorder %s14, 0
    %p62 = por %p60, %p61
    %s63 = ssub.s32 %s8, %s15
    %p64 = scmp.eq.s32.totalorder %s63, 0
    %s66 = sadd.s32 %s65, 1
    %s67 = scalar_select %p64, %s65, %s66
    %p70 = pneg %p64
    %p71 = scmp.eq.s32.totalorder %s8, 1
    %p72 = por %p70, %p71
    %p73 = scmp.ne.s32.totalorder %s65, %s68
    %p74 = scmp.eq.s32.totalorder %s8, 0
    %p75 = por %p73, %p74
    %p76 = scmp.ne.s32.totalorder %s65, %s68
    %p77 = scmp.eq.s32.totalorder %s13, 1
    %p78 = por %p76, %p77
    %p79 = scmp.ne.s32.totalorder %s68, %s69
    %p80 = scmp.eq.s32.totalorder %s13, 0
    %p81 = por %p79, %p80
    %p82 = scmp.ne.s32.totalorder %s68, %s69
    %p83 = scmp.eq.s32.totalorder %s14, 1
    %p84 = por %p82, %p83
    %p86 = scmp.ne.s32.totalorder %s69, %s85
    %p87 = scmp.eq.s32.totalorder %s14, 0
    %p88 = por %p86, %p87
    %p89 = scmp.le.s32.totalorder 1, %s8
    %p90 = scmp.lt.s32.totalorder %s8, 3
    %p91 = pnand %p89, %p90
    %p92 = pneg %p91
    // Predicated region
    $region9: #{unet_decompress.1} parent=5 // pred_check
      _
    $region10: #{unet_decompress.1} parent=5 // pred_check_branch
      %94 = sbr.rel (%p91) target = $region12
    $region11: #{unet_decompress.1} parent=5 // pred_region
      %s95 = ssub.s32 %s8, 1
      // Predicated region
      $region13: #{unet_decompress.1} parent=11 // pred_check
        %p96 = pneg %p55
      $region14: #{unet_decompress.1} parent=11 // pred_check_branch
        %98 = sbr.rel (%p96) target = $region16
      $region15: #{unet_decompress.1} parent=11 // pred_region
        _
      $region16: #{unet_decompress.1} parent=11 // pred_fallthru
        _
    $region12: #{unet_decompress.1} parent=5 // pred_fallthru
      _
    %p99 = scmp.lt.s32.totalorder %s8, 2
    // Predicated region
    $region17: #{unet_decompress.1} parent=5 // pred_check
      %p100 = pneg %p99
    $region18: #{unet_decompress.1} parent=5 // pred_check_branch
      %102 = sbr.rel (%p100) target = $region20
    $region19: #{unet_decompress.1} parent=5 // pred_region
      // Predicated region
      $region21: #{unet_decompress.1} parent=19 // pred_check
        %p103 = pneg %p28
      $region22: #{unet_decompress.1} parent=19 // pred_check_branch
        %105 = sbr.rel (%p103) target = $region24
      $region23: #{unet_decompress.1} parent=19 // pred_region
        %p106 = scmp.lt.s32.totalorder %s8, 1
        %s107 = scalar_select %p106, %s8, 1
        %s108 = smul.addr %s107, 54
        %s109 = smul.addr %s108, 8
        %s110 = scalar_lea.vmem %s0, %s109
      $region24: #{unet_decompress.1} parent=19 // pred_fallthru
        _
    $region20: #{unet_decompress.1} parent=5 // pred_fallthru
      _
    %p111 = scmp.le.s32.totalorder 1, %s8
    %p112 = scmp.lt.s32.totalorder %s8, 3
    %p113 = pnand %p111, %p112
    %p114 = pneg %p113
    // Predicated region
    $region25: #{unet_decompress.1} parent=5 // pred_check
      _
    $region26: #{unet_decompress.1} parent=5 // pred_check_branch
      %116 = sbr.rel (%p113) target = $region28
    $region27: #{unet_decompress.1} parent=5 // pred_region
      %s117 = ssub.s32 %s8, 1
      %p118 = scmp.lt.s32.totalorder %s13, 1
      %s119 = scalar_select %p118, %s13, 1
      %s120 = smul.addr %s119, 54
      %s121 = smul.addr %s120, 8
      %s122 = scalar_lea.vmem %s0, %s121
      %p123 = pneg %p34
      %p124 = pneg %p31
      %p125 = pneg %p55
      %p126 = pneg %p52
      %p127 = pneg %p81
      %p128 = pneg %p78
      %p129 = scmp.lt.s32.totalorder %s13, 1
      %s130 = scalar_select %p129, %s13, 1
      %s131 = smul.addr %s130, 128
      %s132 = smul.addr %s131, 8
      %s133 = scalar_lea.vmem %s2, %s132
      %p134 = scmp.lt.s32.totalorder %s13, 1
      %s135 = scalar_select %p134, %s13, 1
      %s136 = smul.addr %s135, 54
      %s137 = smul.addr %s136, 8
      %s138 = scalar_lea.vmem %s0, %s137
      %p139 = scmp.lt.s32.totalorder %s13, 1
      %s140 = scalar_select %p139, %s13, 1
      %s141 = smul.addr %s140, 128
      %s142 = smul.addr %s141, 8
      %s143 = scalar_lea.vmem %s2, %s142
      %v144 = vld [vmem:[%s138] sm:$0xff]
      %v145 = vld [vmem:[%s138 + $0x8] sm:$0xff]
      %v146 = vld [vmem:[%s138 + $0x10] sm:$0x3]
      %v147 = vld [vmem:[%s138 + $0x18] sm:$0xff]
      %v148 = vld [vmem:[%s138 + $0x20] sm:$0xff]
      %v149 = vld [vmem:[%s138 + $0x28] sm:$0x3]
      %v150 = vld [vmem:[%s138 + $0x30] sm:$0xff]
      %v151 = vld [vmem:[%s138 + $0x38] sm:$0xff]
      %v152 = vld [vmem:[%s138 + $0x40] sm:$0x3]
      %v153 = vld [vmem:[%s138 + $0x48] sm:$0xff]
      %v154 = vld [vmem:[%s138 + $0x50] sm:$0xff]
      %v155 = vld [vmem:[%s138 + $0x58] sm:$0x3]
      %v156 = vld [vmem:[%s138 + $0x60] sm:$0xff]
      %v157 = vld [vmem:[%s138 + $0x68] sm:$0xff]
      %v158 = vld [vmem:[%s138 + $0x70] sm:$0x3]
      %v159 = vld [vmem:[%s138 + $0x78] sm:$0xff]
      %v160 = vld [vmem:[%s138 + $0x80] sm:$0xff]
      %v161 = vld [vmem:[%s138 + $0x88] sm:$0x3]
      %v162 = vld [vmem:[%s138 + $0x90] sm:$0xff]
      %v163 = vld [vmem:[%s138 + $0x98] sm:$0xff]
      %v164 = vld [vmem:[%s138 + $0xa0] sm:$0x3]
      %v165 = vld [vmem:[%s138 + $0xa8] sm:$0xff]
      %v166 = vld [vmem:[%s138 + $0xb0] sm:$0xff]
      %v167 = vld [vmem:[%s138 + $0xb8] sm:$0x3]
      %v168 = vld [vmem:[%s138 + $0xc0] sm:$0xff]
      %v169 = vld [vmem:[%s138 + $0xc8] sm:$0xff]
      %v170 = vld [vmem:[%s138 + $0xd0] sm:$0x3]
      %v171 = vld [vmem:[%s138 + $0xd8] sm:$0xff]
      %v172 = vld [vmem:[%s138 + $0xe0] sm:$0xff]
      %v173 = vld [vmem:[%s138 + $0xe8] sm:$0x3]
      %v174 = vld [vmem:[%s138 + $0xf0] sm:$0xff]
      %v175 = vld [vmem:[%s138 + $0xf8] sm:$0xff]
      %v176 = vld [vmem:[%s138 + $0x100] sm:$0x3]
      %v177 = vld [vmem:[%s138 + $0x108] sm:$0xff]
      %v178 = vld [vmem:[%s138 + $0x110] sm:$0xff]
      %v179 = vld [vmem:[%s138 + $0x118] sm:$0x3]
      %v180 = vld [vmem:[%s138 + $0x120] sm:$0xff]
      %v181 = vld [vmem:[%s138 + $0x128] sm:$0xff]
      %v182 = vld [vmem:[%s138 + $0x130] sm:$0x3]
      %v183 = vld [vmem:[%s138 + $0x138] sm:$0xff]
      %v184 = vld [vmem:[%s138 + $0x140] sm:$0xff]
      %v185 = vld [vmem:[%s138 + $0x148] sm:$0x3]
      %v186 = vld [vmem:[%s138 + $0x150] sm:$0xff]
      %v187 = vld [vmem:[%s138 + $0x158] sm:$0xff]
      %v188 = vld [vmem:[%s138 + $0x160] sm:$0x3]
      %v189 = vld [vmem:[%s138 + $0x168] sm:$0xff]
      %v190 = vld [vmem:[%s138 + $0x170] sm:$0xff]
      %v191 = vld [vmem:[%s138 + $0x178] sm:$0x3]
      %v192 = vld [vmem:[%s138 + $0x180] sm:$0xff]
      %v193 = vld [vmem:[%s138 + $0x188] sm:$0xff]
      %v194 = vld [vmem:[%s138 + $0x190] sm:$0x3]
      %v195 = vld [vmem:[%s138 + $0x198] sm:$0xff]
      %v196 = vld [vmem:[%s138 + $0x1a0] sm:$0xff]
      %v197 = vld [vmem:[%s138 + $0x1a8] sm:$0x3]
      %vm246 = vcmask 1046528
      %v247 = vrot.slane %v144, 1
      %v248 = vrot.slane %v145, 1
      %v249 = vsel %vm246, %v247, %v248
      %v250 = vrot.slane %v146, 1
      %v251 = vsel %vm246, %v248, %v250
      %v252 = vrot.slane %v147, 1
      %v253 = vrot.slane %v148, 1
      %v254 = vsel %vm246, %v252, %v253
      %v255 = vrot.slane %v149, 1
      %v256 = vsel %vm246, %v253, %v255
      %v257 = vrot.slane %v150, 1
      %v258 = vrot.slane %v151, 1
      %v259 = vsel %vm246, %v257, %v258
      %v260 = vrot.slane %v152, 1
      %v261 = vsel %vm246, %v258, %v260
      %v262 = vrot.slane %v153, 1
      %v263 = vrot.slane %v154, 1
      %v264 = vsel %vm246, %v262, %v263
      %v265 = vrot.slane %v155, 1
      %v266 = vsel %vm246, %v263, %v265
      %v267 = vrot.slane %v156, 1
      %v268 = vrot.slane %v157, 1
      %v269 = vsel %vm246, %v267, %v268
      %v270 = vrot.slane %v158, 1
      %v271 = vsel %vm246, %v268, %v270
      %v272 = vrot.slane %v159, 1
      %v273 = vrot.slane %v160, 1
      %v274 = vsel %vm246, %v272, %v273
      %v275 = vrot.slane %v161, 1
      %v276 = vsel %vm246, %v273, %v275
      %v277 = vrot.slane %v162, 1
      %v278 = vrot.slane %v163, 1
      %v279 = vsel %vm246, %v277, %v278
      %v280 = vrot.slane %v164, 1
      %v281 = vsel %vm246, %v278, %v280
      %v282 = vrot.slane %v165, 1
      %v283 = vrot.slane %v166, 1
      %v284 = vsel %vm246, %v282, %v283
      %v285 = vrot.slane %v167, 1
      %v286 = vsel %vm246, %v283, %v285
      %v287 = vrot.slane %v168, 1
      %v288 = vrot.slane %v169, 1
      %v289 = vsel %vm246, %v287, %v288
      %v290 = vrot.slane %v170, 1
      %v291 = vsel %vm246, %v288, %v290
      %v292 = vrot.slane %v171, 1
      %v293 = vrot.slane %v172, 1
      %v294 = vsel %vm246, %v292, %v293
      %v295 = vrot.slane %v173, 1
      %v296 = vsel %vm246, %v293, %v295
      %v297 = vrot.slane %v174, 1
      %v298 = vrot.slane %v175, 1
      %v299 = vsel %vm246, %v297, %v298
      %v300 = vrot.slane %v176, 1
      %v301 = vsel %vm246, %v298, %v300
      %v302 = vrot.slane %v177, 1
      %v303 = vrot.slane %v178, 1
      %v304 = vsel %vm246, %v302, %v303
      %v305 = vrot.slane %v179, 1
      %v306 = vsel %vm246, %v303, %v305
      %v307 = vrot.slane %v180, 1
      %v308 = vrot.slane %v181, 1
      %v309 = vsel %vm246, %v307, %v308
      %v310 = vrot.slane %v182, 1
      %v311 = vsel %vm246, %v308, %v310
      %v312 = vrot.slane %v183, 1
      %v313 = vrot.slane %v184, 1
      %v314 = vsel %vm246, %v312, %v313
      %v315 = vrot.slane %v185, 1
      %v316 = vsel %vm246, %v313, %v315
      %v317 = vrot.slane %v186, 1
      %v318 = vrot.slane %v187, 1
      %v319 = vsel %vm246, %v317, %v318
      %v320 = vrot.slane %v188, 1
      %v321 = vsel %vm246, %v318, %v320
      %v322 = vrot.slane %v189, 1
      %v323 = vrot.slane %v190, 1
      %v324 = vsel %vm246, %v322, %v323
      %v325 = vrot.slane %v191, 1
      %v326 = vsel %vm246, %v323, %v325
      %327 = vrot.lane.b32.xlu0 %v249, 8
      %v328 = vpop.permute.xlu0 %327
      %329 = vrot.lane.b32.xlu0 %v251, 8
      %v330 = vpop.permute.xlu0 %329
      %331 = vrot.lane.b32.xlu0 %v254, 8
      %v332 = vpop.permute.xlu0 %331
      %333 = vrot.lane.b32.xlu0 %v256, 8
      %v334 = vpop.permute.xlu0 %333
      %335 = vrot.lane.b32.xlu0 %v259, 8
      %v336 = vpop.permute.xlu0 %335
      %337 = vrot.lane.b32.xlu0 %v261, 8
      %v338 = vpop.permute.xlu0 %337
      %339 = vrot.lane.b32.xlu0 %v264, 8
      %v340 = vpop.permute.xlu0 %339
      %341 = vrot.lane.b32.xlu0 %v266, 8
      %v342 = vpop.permute.xlu0 %341
      %343 = vrot.lane.b32.xlu0 %v269, 8
      %v344 = vpop.permute.xlu0 %343
      %345 = vrot.lane.b32.xlu0 %v271, 8
      %v346 = vpop.permute.xlu0 %345
      %347 = vrot.lane.b32.xlu0 %v274, 8
      %v348 = vpop.permute.xlu0 %347
      %349 = vrot.lane.b32.xlu0 %v276, 8
      %v350 = vpop.permute.xlu0 %349
      %351 = vrot.lane.b32.xlu0 %v279, 8
      %v352 = vpop.permute.xlu0 %351
      %353 = vrot.lane.b32.xlu0 %v281, 8
      %v354 = vpop.permute.xlu0 %353
      %355 = vrot.lane.b32.xlu0 %v284, 8
      %v356 = vpop.permute.xlu0 %355
      %357 = vrot.lane.b32.xlu0 %v286, 8
      %v358 = vpop.permute.xlu0 %357
      %359 = vrot.lane.b32.xlu0 %v289, 8
      %v360 = vpop.permute.xlu0 %359
      %361 = vrot.lane.b32.xlu0 %v291, 8
      %v362 = vpop.permute.xlu0 %361
      %363 = vrot.lane.b32.xlu0 %v294, 8
      %v364 = vpop.permute.xlu0 %363
      %365 = vrot.lane.b32.xlu0 %v296, 8
      %v366 = vpop.permute.xlu0 %365
      %367 = vrot.lane.b32.xlu0 %v299, 8
      %v368 = vpop.permute.xlu0 %367
      %369 = vrot.lane.b32.xlu0 %v301, 8
      %v370 = vpop.permute.xlu0 %369
      %371 = vrot.lane.b32.xlu0 %v304, 8
      %v372 = vpop.permute.xlu0 %371
      %373 = vrot.lane.b32.xlu0 %v306, 8
      %v374 = vpop.permute.xlu0 %373
      %375 = vrot.lane.b32.xlu0 %v309, 8
      %v376 = vpop.permute.xlu0 %375
      %377 = vrot.lane.b32.xlu0 %v311, 8
      %v378 = vpop.permute.xlu0 %377
      %379 = vrot.lane.b32.xlu0 %v314, 8
      %v380 = vpop.permute.xlu0 %379
      %381 = vrot.lane.b32.xlu0 %v316, 8
      %v382 = vpop.permute.xlu0 %381
      %383 = vrot.lane.b32.xlu0 %v319, 8
      %v384 = vpop.permute.xlu0 %383
      %385 = vrot.lane.b32.xlu0 %v321, 8
      %v386 = vpop.permute.xlu0 %385
      %387 = vrot.lane.b32.xlu0 %v324, 8
      %v388 = vpop.permute.xlu0 %387
      %389 = vrot.lane.b32.xlu0 %v326, 8
      %v390 = vpop.permute.xlu0 %389
      %425 = vrot.lane.b32.xlu0 %v147, 16
      %v426 = vpop.permute.xlu0 %425
      %427 = vrot.lane.b32.xlu0 %v148, 16
      %v428 = vpop.permute.xlu0 %427
      %429 = vrot.lane.b32.xlu0 %v150, 16
      %v430 = vpop.permute.xlu0 %429
      %431 = vrot.lane.b32.xlu0 %v151, 16
      %v432 = vpop.permute.xlu0 %431
      %433 = vrot.lane.b32.xlu0 %v153, 16
      %v434 = vpop.permute.xlu0 %433
      %435 = vrot.lane.b32.xlu0 %v154, 16
      %v436 = vpop.permute.xlu0 %435
      %437 = vrot.lane.b32.xlu0 %v156, 16
      %v438 = vpop.permute.xlu0 %437
      %439 = vrot.lane.b32.xlu0 %v157, 16
      %v440 = vpop.permute.xlu0 %439
      %441 = vrot.lane.b32.xlu0 %v159, 16
      %v442 = vpop.permute.xlu0 %441
      %443 = vrot.lane.b32.xlu0 %v160, 16
      %v444 = vpop.permute.xlu0 %443
      %445 = vrot.lane.b32.xlu0 %v162, 16
      %v446 = vpop.permute.xlu0 %445
      %447 = vrot.lane.b32.xlu0 %v163, 16
      %v448 = vpop.permute.xlu0 %447
      %449 = vrot.lane.b32.xlu0 %v165, 16
      %v450 = vpop.permute.xlu0 %449
      %451 = vrot.lane.b32.xlu0 %v166, 16
      %v452 = vpop.permute.xlu0 %451
      %453 = vrot.lane.b32.xlu0 %v168, 16
      %v454 = vpop.permute.xlu0 %453
      %455 = vrot.lane.b32.xlu0 %v169, 16
      %v456 = vpop.permute.xlu0 %455
      %457 = vrot.lane.b32.xlu0 %v171, 16
      %v458 = vpop.permute.xlu0 %457
      %459 = vrot.lane.b32.xlu0 %v172, 16
      %v460 = vpop.permute.xlu0 %459
      %461 = vrot.lane.b32.xlu0 %v174, 16
      %v462 = vpop.permute.xlu0 %461
      %463 = vrot.lane.b32.xlu0 %v175, 16
      %v464 = vpop.permute.xlu0 %463
      %465 = vrot.lane.b32.xlu0 %v177, 16
      %v466 = vpop.permute.xlu0 %465
      %467 = vrot.lane.b32.xlu0 %v178, 16
      %v468 = vpop.permute.xlu0 %467
      %469 = vrot.lane.b32.xlu0 %v180, 16
      %v470 = vpop.permute.xlu0 %469
      %471 = vrot.lane.b32.xlu0 %v181, 16
      %v472 = vpop.permute.xlu0 %471
      %473 = vrot.lane.b32.xlu0 %v183, 16
      %v474 = vpop.permute.xlu0 %473
      %475 = vrot.lane.b32.xlu0 %v184, 16
      %v476 = vpop.permute.xlu0 %475
      %477 = vrot.lane.b32.xlu0 %v186, 16
      %v478 = vpop.permute.xlu0 %477
      %479 = vrot.lane.b32.xlu0 %v187, 16
      %v480 = vpop.permute.xlu0 %479
      %481 = vrot.lane.b32.xlu0 %v189, 16
      %v482 = vpop.permute.xlu0 %481
      %483 = vrot.lane.b32.xlu0 %v190, 16
      %v484 = vpop.permute.xlu0 %483
      %485 = vrot.lane.b32.xlu0 %v192, 16
      %v486 = vpop.permute.xlu0 %485
      %487 = vrot.lane.b32.xlu0 %v193, 16
      %v488 = vpop.permute.xlu0 %487
      %v522 = vrot.slane %v192, 1
      %v523 = vrot.slane %v193, 1
      %v524 = vsel %vm246, %v522, %v523
      %v525 = vrot.slane %v194, 1
      %v526 = vsel %vm246, %v523, %v525
      %527 = vrot.lane.b32.xlu0 %v254, 24
      %v528 = vpop.permute.xlu0 %527
      %529 = vrot.lane.b32.xlu0 %v256, 24
      %v530 = vpop.permute.xlu0 %529
      %531 = vrot.lane.b32.xlu0 %v259, 24
      %v532 = vpop.permute.xlu0 %531
      %533 = vrot.lane.b32.xlu0 %v261, 24
      %v534 = vpop.permute.xlu0 %533
      %535 = vrot.lane.b32.xlu0 %v264, 24
      %v536 = vpop.permute.xlu0 %535
      %537 = vrot.lane.b32.xlu0 %v266, 24
      %v538 = vpop.permute.xlu0 %537
      %539 = vrot.lane.b32.xlu0 %v269, 24
      %v540 = vpop.permute.xlu0 %539
      %541 = vrot.lane.b32.xlu0 %v271, 24
      %v542 = vpop.permute.xlu0 %541
      %543 = vrot.lane.b32.xlu0 %v274, 24
      %v544 = vpop.permute.xlu0 %543
      %545 = vrot.lane.b32.xlu0 %v276, 24
      %v546 = vpop.permute.xlu0 %545
      %547 = vrot.lane.b32.xlu0 %v279, 24
      %v548 = vpop.permute.xlu0 %547
      %549 = vrot.lane.b32.xlu0 %v281, 24
      %v550 = vpop.permute.xlu0 %549
      %551 = vrot.lane.b32.xlu0 %v284, 24
      %v552 = vpop.permute.xlu0 %551
      %553 = vrot.lane.b32.xlu0 %v286, 24
      %v554 = vpop.permute.xlu0 %553
      %555 = vrot.lane.b32.xlu0 %v289, 24
      %v556 = vpop.permute.xlu0 %555
      %557 = vrot.lane.b32.xlu0 %v291, 24
      %v558 = vpop.permute.xlu0 %557
      %559 = vrot.lane.b32.xlu0 %v294, 24
      %v560 = vpop.permute.xlu0 %559
      %561 = vrot.lane.b32.xlu0 %v296, 24
      %v562 = vpop.permute.xlu0 %561
      %563 = vrot.lane.b32.xlu0 %v299, 24
      %v564 = vpop.permute.xlu0 %563
      %565 = vrot.lane.b32.xlu0 %v301, 24
      %v566 = vpop.permute.xlu0 %565
      %567 = vrot.lane.b32.xlu0 %v304, 24
      %v568 = vpop.permute.xlu0 %567
      %569 = vrot.lane.b32.xlu0 %v306, 24
      %v570 = vpop.permute.xlu0 %569
      %571 = vrot.lane.b32.xlu0 %v309, 24
      %v572 = vpop.permute.xlu0 %571
      %573 = vrot.lane.b32.xlu0 %v311, 24
      %v574 = vpop.permute.xlu0 %573
      %575 = vrot.lane.b32.xlu0 %v314, 24
      %v576 = vpop.permute.xlu0 %575
      %577 = vrot.lane.b32.xlu0 %v316, 24
      %v578 = vpop.permute.xlu0 %577
      %579 = vrot.lane.b32.xlu0 %v319, 24
      %v580 = vpop.permute.xlu0 %579
      %581 = vrot.lane.b32.xlu0 %v321, 24
      %v582 = vpop.permute.xlu0 %581
      %583 = vrot.lane.b32.xlu0 %v324, 24
      %v584 = vpop.permute.xlu0 %583
      %585 = vrot.lane.b32.xlu0 %v326, 24
      %v586 = vpop.permute.xlu0 %585
      %587 = vrot.lane.b32.xlu0 %v524, 24
      %v588 = vpop.permute.xlu0 %587
      %589 = vrot.lane.b32.xlu0 %v526, 24
      %v590 = vpop.permute.xlu0 %589
      %vm623 = vcmask 64512
      %v624 = vsel %vm623, %v144, %v328
      %v625 = vsel %vm623, %v145, %v330
      %v626 = vsel %vm623, %v147, %v332
      %v627 = vsel %vm623, %v148, %v334
      %v628 = vsel %vm623, %v150, %v336
      %v629 = vsel %vm623, %v151, %v338
      %v630 = vsel %vm623, %v153, %v340
      %v631 = vsel %vm623, %v154, %v342
      %v632 = vsel %vm623, %v156, %v344
      %v633 = vsel %vm623, %v157, %v346
      %v634 = vsel %vm623, %v159, %v348
      %v635 = vsel %vm623, %v160, %v350
      %v636 = vsel %vm623, %v162, %v352
      %v637 = vsel %vm623, %v163, %v354
      %v638 = vsel %vm623, %v165, %v356
      %v639 = vsel %vm623, %v166, %v358
      %v640 = vsel %vm623, %v168, %v360
      %v641 = vsel %vm623, %v169, %v362
      %v642 = vsel %vm623, %v171, %v364
      %v643 = vsel %vm623, %v172, %v366
      %v644 = vsel %vm623, %v174, %v368
      %v645 = vsel %vm623, %v175, %v370
      %v646 = vsel %vm623, %v177, %v372
      %v647 = vsel %vm623, %v178, %v374
      %v648 = vsel %vm623, %v180, %v376
      %v649 = vsel %vm623, %v181, %v378
      %v650 = vsel %vm623, %v183, %v380
      %v651 = vsel %vm623, %v184, %v382
      %v652 = vsel %vm623, %v186, %v384
      %v653 = vsel %vm623, %v187, %v386
      %v654 = vsel %vm623, %v189, %v388
      %v655 = vsel %vm623, %v190, %v390
      %vm656 = vcmask 130048
      %v657 = vsel %vm656, %v624, %v426
      %v658 = vsel %vm656, %v625, %v428
      %v659 = vsel %vm656, %v626, %v430
      %v660 = vsel %vm656, %v627, %v432
      %v661 = vsel %vm656, %v628, %v434
      %v662 = vsel %vm656, %v629, %v436
      %v663 = vsel %vm656, %v630, %v438
      %v664 = vsel %vm656, %v631, %v440
      %v665 = vsel %vm656, %v632, %v442
      %v666 = vsel %vm656, %v633, %v444
      %v667 = vsel %vm656, %v634, %v446
      %v668 = vsel %vm656, %v635, %v448
      %v669 = vsel %vm656, %v636, %v450
      %v670 = vsel %vm656, %v637, %v452
      %v671 = vsel %vm656, %v638, %v454
      %v672 = vsel %vm656, %v639, %v456
      %v673 = vsel %vm656, %v640, %v458
      %v674 = vsel %vm656, %v641, %v460
      %v675 = vsel %vm656, %v642, %v462
      %v676 = vsel %vm656, %v643, %v464
      %v677 = vsel %vm656, %v644, %v466
      %v678 = vsel %vm656, %v645, %v468
      %v679 = vsel %vm656, %v646, %v470
      %v680 = vsel %vm656, %v647, %v472
      %v681 = vsel %vm656, %v648, %v474
      %v682 = vsel %vm656, %v649, %v476
      %v683 = vsel %vm656, %v650, %v478
      %v684 = vsel %vm656, %v651, %v480
      %v685 = vsel %vm656, %v652, %v482
      %v686 = vsel %vm656, %v653, %v484
      %v687 = vsel %vm656, %v654, %v486
      %v688 = vsel %vm656, %v655, %v488
      %vm689 = vcmask 195584
      %v690 = vsel %vm689, %v657, %v528
      %v691 = vsel %vm689, %v658, %v530
      %v692 = vsel %vm689, %v659, %v532
      %v693 = vsel %vm689, %v660, %v534
      %v694 = vsel %vm689, %v661, %v536
      %v695 = vsel %vm689, %v662, %v538
      %v696 = vsel %vm689, %v663, %v540
      %v697 = vsel %vm689, %v664, %v542
      %v698 = vsel %vm689, %v665, %v544
      %v699 = vsel %vm689, %v666, %v546
      %v700 = vsel %vm689, %v667, %v548
      %v701 = vsel %vm689, %v668, %v550
      %v702 = vsel %vm689, %v669, %v552
      %v703 = vsel %vm689, %v670, %v554
      %v704 = vsel %vm689, %v671, %v556
      %v705 = vsel %vm689, %v672, %v558
      %v706 = vsel %vm689, %v673, %v560
      %v707 = vsel %vm689, %v674, %v562
      %v708 = vsel %vm689, %v675, %v564
      %v709 = vsel %vm689, %v676, %v566
      %v710 = vsel %vm689, %v677, %v568
      %v711 = vsel %vm689, %v678, %v570
      %v712 = vsel %vm689, %v679, %v572
      %v713 = vsel %vm689, %v680, %v574
      %v714 = vsel %vm689, %v681, %v576
      %v715 = vsel %vm689, %v682, %v578
      %v716 = vsel %vm689, %v683, %v580
      %v717 = vsel %vm689, %v684, %v582
      %v718 = vsel %vm689, %v685, %v584
      %v719 = vsel %vm689, %v686, %v586
      %v720 = vsel %vm689, %v687, %v588
      %v721 = vsel %vm689, %v688, %v590
      %v722 = vld [vmem:[%s1] sm:$0xff]
      %v723 = vld [vmem:[%s1 + $0x8] sm:$0xff]
      %v724 = vld [vmem:[%s1 + $0x10] sm:$0xff]
      %v725 = vld [vmem:[%s1 + $0x18] sm:$0xff]
      %vm726 = vcmask 261120
      %v728 = vsel %vm726, %v690, 0
      %v731 = vsel %vm726, %v691, 0
      %v734 = vsel %vm726, %v692, 0
      %v737 = vsel %vm726, %v693, 0
      %v740 = vsel %vm726, %v694, 0
      %v743 = vsel %vm726, %v695, 0
      %v746 = vsel %vm726, %v696, 0
      %v749 = vsel %vm726, %v697, 0
      %v752 = vsel %vm726, %v698, 0
      %v755 = vsel %vm726, %v699, 0
      %v758 = vsel %vm726, %v700, 0
      %v761 = vsel %vm726, %v701, 0
      %v764 = vsel %vm726, %v702, 0
      %v767 = vsel %vm726, %v703, 0
      %v770 = vsel %vm726, %v704, 0
      %v773 = vsel %vm726, %v705, 0
      %v776 = vsel %vm726, %v706, 0
      %v779 = vsel %vm726, %v707, 0
      %v782 = vsel %vm726, %v708, 0
      %v785 = vsel %vm726, %v709, 0
      %v788 = vsel %vm726, %v710, 0
      %v791 = vsel %vm726, %v711, 0
      %v794 = vsel %vm726, %v712, 0
      %v797 = vsel %vm726, %v713, 0
      %v800 = vsel %vm726, %v714, 0
      %v803 = vsel %vm726, %v715, 0
      %v806 = vsel %vm726, %v716, 0
      %v809 = vsel %vm726, %v717, 0
      %v812 = vsel %vm726, %v718, 0
      %v815 = vsel %vm726, %v719, 0
      %v818 = vsel %vm726, %v720, 0
      %v821 = vsel %vm726, %v721, 0
      %823 = vmatprep.subr.mxu0 0.0
      %824 = vmatpush1.msra.mxu0 %v722
      %825 = vmatprep.subr.mxu0 0.0
      %826 = vmatpush1.msra.mxu0 %v723
      %827 = vmatprep.subr.mxu0 0.0
      %828 = vmatpush1.msra.mxu0 %v724
      %829 = vmatprep.subr.mxu0 0.0
      %830 = vmatpush1.msra.mxu0 %v725
      %831 = vmatprep.subr.mxu0 0.0
      %832 = vmatpush1.msra.mxu0 0.0
      %833 = vmatprep.subr.mxu0 0.0
      %834 = vmatpush1.msra.mxu0 0.0
      %835 = vmatprep.subr.mxu0 0.0
      %836 = vmatpush1.msra.mxu0 0.0
      %837 = vmatprep.subr.mxu0 0.0
      %838 = vmatpush1.msra.mxu0 0.0
      %839 = vmatprep.subr.mxu0 0.0
      %840 = vmatpush1.msra.mxu0 0.0
      %841 = vmatprep.subr.mxu0 0.0
      %842 = vmatpush1.msra.mxu0 0.0
      %843 = vmatprep.subr.mxu0 0.0
      %844 = vmatpush1.msra.mxu0 0.0
      %845 = vmatprep.subr.mxu0 0.0
      %846 = vmatpush1.msra.mxu0 0.0
      %847 = vmatprep.subr.mxu0 0.0
      %848 = vmatpush1.msra.mxu0 0.0
      %849 = vmatprep.subr.mxu0 0.0
      %850 = vmatpush1.msra.mxu0 0.0
      %851 = vmatprep.subr.mxu0 0.0
      %852 = vmatpush1.msra.mxu0 0.0
      %853 = vmatprep.subr.mxu0 0.0
      %854 = vmatpush1.msra.mxu0 0.0
      %855 = vmatprep.subr.mxu0 0.0
      %856 = vmatpush1.msra.mxu0 0.0
      %857 = vmatprep.subr.mxu0 0.0
      %858 = vmatpush1.msra.mxu0 0.0
      %859 = vmatprep.subr.mxu0 0.0
      %860 = vmatpush1.msra.mxu0 0.0
      %861 = vmatprep.subr.mxu0 0.0
      %862 = vmatpush1.msra.mxu0 0.0
      %863 = vmatprep.subr.mxu0 0.0
      %864 = vmatpush1.msra.mxu0 0.0
      %865 = vmatprep.subr.mxu0 0.0
      %866 = vmatpush1.msra.mxu0 0.0
      %867 = vmatprep.subr.mxu0 0.0
      %868 = vmatpush1.msra.mxu0 0.0
      %869 = vmatprep.subr.mxu0 0.0
      %870 = vmatpush1.msra.mxu0 0.0
      %871 = vmatprep.subr.mxu0 0.0
      %872 = vmatpush1.msra.mxu0 0.0
      %873 = vmatprep.subr.mxu0 0.0
      %874 = vmatpush1.msra.mxu0 0.0
      %875 = vmatprep.subr.mxu0 0.0
      %876 = vmatpush1.msra.mxu0 0.0
      %877 = vmatprep.subr.mxu0 0.0
      %878 = vmatpush1.msra.mxu0 0.0
      %879 = vmatprep.subr.mxu0 0.0
      %880 = vmatpush1.msra.mxu0 0.0
      %881 = vmatprep.subr.mxu0 0.0
      %882 = vmatpush1.msra.mxu0 0.0
      %883 = vmatprep.subr.mxu0 0.0
      %884 = vmatpush1.msra.mxu0 0.0
      %885 = vmatprep.subr.mxu0 0.0
      %886 = vmatpush1.msra.mxu0 0.0
      %887 = vmatprep.mubr.f32.mxu0 0.0
      %888 = vmatmul.mubr.f32.gmra.mrb[0].mxu0 %v728
      %v889 = vpop.f32.mrb[0].mxu0
      %v890 = vadd.f32 0.0, %v889
      %v891 = vpop.f32.mrb[0].mxu0
      %892 = vmatprep.mubr.f32.mxu0 0.0
      %893 = vmatmul.mubr.f32.gmra.mrb[0].mxu0 %v731
      %v894 = vpop.f32.mrb[0].mxu0
      %v895 = vadd.f32 0.0, %v894
      %v896 = vpop.f32.mrb[0].mxu0
      %897 = vmatprep.mubr.f32.mxu0 0.0
      %898 = vmatmul.mubr.f32.gmra.mrb[0].mxu0 %v734
      %v899 = vpop.f32.mrb[0].mxu0
      %v900 = vadd.f32 0.0, %v899
      %v901 = vpop.f32.mrb[0].mxu0
      %902 = vmatprep.mubr.f32.mxu0 0.0
      %903 = vmatmul.mubr.f32.gmra.mrb[0].mxu0 %v737
      %v904 = vpop.f32.mrb[0].mxu0
      %v905 = vadd.f32 0.0, %v904
      %v906 = vpop.f32.mrb[0].mxu0
      %907 = vmatprep.mubr.f32.mxu0 0.0
      %908 = vmatmul.mubr.f32.gmra.mrb[0].mxu0 %v740
      %v909 = vpop.f32.mrb[0].mxu0
      %v910 = vadd.f32 0.0, %v909
      %v911 = vpop.f32.mrb[0].mxu0
      %912 = vmatprep.mubr.f32.mxu0 0.0
      %913 = vmatmul.mubr.f32.gmra.mrb[0].mxu0 %v743
      %v914 = vpop.f32.mrb[0].mxu0
      %v915 = vadd.f32 0.0, %v914
      %v916 = vpop.f32.mrb[0].mxu0
      %917 = vmatprep.mubr.f32.mxu0 0.0
      %918 = vmatmul.mubr.f32.gmra.mrb[0].mxu0 %v746
      %v919 = vpop.f32.mrb[0].mxu0
      %v920 = vadd.f32 0.0, %v919
      %v921 = vpop.f32.mrb[0].mxu0
      %922 = vmatprep.mubr.f32.mxu0 0.0
      %923 = vmatmul.mubr.f32.gmra.mrb[0].mxu0 %v749
      %v924 = vpop.f32.mrb[0].mxu0
      %v925 = vadd.f32 0.0, %v924
      %v926 = vpop.f32.mrb[0].mxu0
      %927 = vmatprep.mubr.f32.mxu0 0.0
      %928 = vmatmul.mubr.f32.gmra.mrb[0].mxu0 %v752
      %v929 = vpop.f32.mrb[0].mxu0
      %v930 = vadd.f32 0.0, %v929
      %v931 = vpop.f32.mrb[0].mxu0
      %932 = vmatprep.mubr.f32.mxu0 0.0
      %933 = vmatmul.mubr.f32.gmra.mrb[0].mxu0 %v755
      %v934 = vpop.f32.mrb[0].mxu0
      %v935 = vadd.f32 0.0, %v934
      %v936 = vpop.f32.mrb[0].mxu0
      %937 = vmatprep.mubr.f32.mxu0 0.0
      %938 = vmatmul.mubr.f32.gmra.mrb[0].mxu0 %v758
      %v939 = vpop.f32.mrb[0].mxu0
      %v940 = vadd.f32 0.0, %v939
      %v941 = vpop.f32.mrb[0].mxu0
      %942 = vmatprep.mubr.f32.mxu0 0.0
      %943 = vmatmul.mubr.f32.gmra.mrb[0].mxu0 %v761
      %v944 = vpop.f32.mrb[0].mxu0
      %v945 = vadd.f32 0.0, %v944
      %v946 = vpop.f32.mrb[0].mxu0
      %947 = vmatprep.mubr.f32.mxu0 0.0
      %948 = vmatmul.mubr.f32.gmra.mrb[0].mxu0 %v764
      %v949 = vpop.f32.mrb[0].mxu0
      %v950 = vadd.f32 0.0, %v949
      %v951 = vpop.f32.mrb[0].mxu0
      %952 = vmatprep.mubr.f32.mxu0 0.0
      %953 = vmatmul.mubr.f32.gmra.mrb[0].mxu0 %v767
      %v954 = vpop.f32.mrb[0].mxu0
      %v955 = vadd.f32 0.0, %v954
      %v956 = vpop.f32.mrb[0].mxu0
      %957 = vmatprep.mubr.f32.mxu0 0.0
      %958 = vmatmul.mubr.f32.gmra.mrb[0].mxu0 %v770
      %v959 = vpop.f32.mrb[0].mxu0
      %v960 = vadd.f32 0.0, %v959
      %v961 = vpop.f32.mrb[0].mxu0
      %962 = vmatprep.mubr.f32.mxu0 0.0
      %963 = vmatmul.mubr.f32.gmra.mrb[0].mxu0 %v773
      %v964 = vpop.f32.mrb[0].mxu0
      %v965 = vadd.f32 0.0, %v964
      %v966 = vpop.f32.mrb[0].mxu0
      %967 = vmatprep.mubr.f32.mxu0 0.0
      %968 = vmatmul.mubr.f32.gmra.mrb[0].mxu0 %v776
      %v969 = vpop.f32.mrb[0].mxu0
      %v970 = vadd.f32 0.0, %v969
      %v971 = vpop.f32.mrb[0].mxu0
      %972 = vmatprep.mubr.f32.mxu0 0.0
      %973 = vmatmul.mubr.f32.gmra.mrb[0].mxu0 %v779
      %v974 = vpop.f32.mrb[0].mxu0
      %v975 = vadd.f32 0.0, %v974
      %v976 = vpop.f32.mrb[0].mxu0
      %977 = vmatprep.mubr.f32.mxu0 0.0
      %978 = vmatmul.mubr.f32.gmra.mrb[0].mxu0 %v782
      %v979 = vpop.f32.mrb[0].mxu0
      %v980 = vadd.f32 0.0, %v979
      %v981 = vpop.f32.mrb[0].mxu0
      %982 = vmatprep.mubr.f32.mxu0 0.0
      %983 = vmatmul.mubr.f32.gmra.mrb[0].mxu0 %v785
      %v984 = vpop.f32.mrb[0].mxu0
      %v985 = vadd.f32 0.0, %v984
      %v986 = vpop.f32.mrb[0].mxu0
      %987 = vmatprep.mubr.f32.mxu0 0.0
      %988 = vmatmul.mubr.f32.gmra.mrb[0].mxu0 %v788
      %v989 = vpop.f32.mrb[0].mxu0
      %v990 = vadd.f32 0.0, %v989
      %v991 = vpop.f32.mrb[0].mxu0
      %992 = vmatprep.mubr.f32.mxu0 0.0
      %993 = vmatmul.mubr.f32.gmra.mrb[0].mxu0 %v791
      %v994 = vpop.f32.mrb[0].mxu0
      %v995 = vadd.f32 0.0, %v994
      %v996 = vpop.f32.mrb[0].mxu0
      %997 = vmatprep.mubr.f32.mxu0 0.0
      %998 = vmatmul.mubr.f32.gmra.mrb[0].mxu0 %v794
      %v999 = vpop.f32.mrb[0].mxu0
      %v1000 = vadd.f32 0.0, %v999
      %v1001 = vpop.f32.mrb[0].mxu0
      %1002 = vmatprep.mubr.f32.mxu0 0.0
      %1003 = vmatmul.mubr.f32.gmra.mrb[0].mxu0 %v797
      %v1004 = vpop.f32.mrb[0].mxu0
      %v1005 = vadd.f32 0.0, %v1004
      %v1006 = vpop.f32.mrb[0].mxu0
      %1007 = vmatprep.mubr.f32.mxu0 0.0
      %1008 = vmatmul.mubr.f32.gmra.mrb[0].mxu0 %v800
      %v1009 = vpop.f32.mrb[0].mxu0
      %v1010 = vadd.f32 0.0, %v1009
      %v1011 = vpop.f32.mrb[0].mxu0
      %1012 = vmatprep.mubr.f32.mxu0 0.0
      %1013 = vmatmul.mubr.f32.gmra.mrb[0].mxu0 %v803
      %v1014 = vpop.f32.mrb[0].mxu0
      %v1015 = vadd.f32 0.0, %v1014
      %v1016 = vpop.f32.mrb[0].mxu0
      %1017 = vmatprep.mubr.f32.mxu0 0.0
      %1018 = vmatmul.mubr.f32.gmra.mrb[0].mxu0 %v806
      %v1019 = vpop.f32.mrb[0].mxu0
      %v1020 = vadd.f32 0.0, %v1019
      %v1021 = vpop.f32.mrb[0].mxu0
      %1022 = vmatprep.mubr.f32.mxu0 0.0
      %1023 = vmatmul.mubr.f32.gmra.mrb[0].mxu0 %v809
      %v1024 = vpop.f32.mrb[0].mxu0
      %v1025 = vadd.f32 0.0, %v1024
      %v1026 = vpop.f32.mrb[0].mxu0
      %1027 = vmatprep.mubr.f32.mxu0 0.0
      %1028 = vmatmul.mubr.f32.gmra.mrb[0].mxu0 %v812
      %v1029 = vpop.f32.mrb[0].mxu0
      %v1030 = vadd.f32 0.0, %v1029
      %v1031 = vpop.f32.mrb[0].mxu0
      %1032 = vmatprep.mubr.f32.mxu0 0.0
      %1033 = vmatmul.mubr.f32.gmra.mrb[0].mxu0 %v815
      %v1034 = vpop.f32.mrb[0].mxu0
      %v1035 = vadd.f32 0.0, %v1034
      %v1036 = vpop.f32.mrb[0].mxu0
      %1037 = vmatprep.mubr.f32.mxu0 0.0
      %1038 = vmatmul.mubr.f32.gmra.mrb[0].mxu0 %v818
      %v1039 = vpop.f32.mrb[0].mxu0
      %v1040 = vadd.f32 0.0, %v1039
      %v1041 = vpop.f32.mrb[0].mxu0
      %1042 = vmatprep.mubr.f32.mxu0 0.0
      %1043 = vmatmul.mubr.f32.gmra.mrb[0].mxu0 %v821
      %v1044 = vpop.f32.mrb[0].mxu0
      %v1045 = vadd.f32 0.0, %v1044
      %v1046 = vpop.f32.mrb[0].mxu0
      %1047 = vdwg.mxu0
      %vm1048 = vcmask 31744
      %1049 = vst.msk [vmem:[#allocation2] sm:$0xff] %vm1048, %v890
      %1050 = vst.msk [vmem:[#allocation2 + $0x8] sm:$0xff] %vm1048, %v895
      %1051 = vst.msk [vmem:[#allocation2 + $0x10] sm:$0xff] %vm1048, %v900
      %1052 = vst.msk [vmem:[#allocation2 + $0x18] sm:$0xff] %vm1048, %v905
      %1053 = vst.msk [vmem:[#allocation2 + $0x20] sm:$0xff] %vm1048, %v910
      %1054 = vst.msk [vmem:[#allocation2 + $0x28] sm:$0xff] %vm1048, %v915
      %1055 = vst.msk [vmem:[#allocation2 + $0x30] sm:$0xff] %vm1048, %v920
      %1056 = vst.msk [vmem:[#allocation2 + $0x38] sm:$0xff] %vm1048, %v925
      %1057 = vst.msk [vmem:[#allocation2 + $0x40] sm:$0xff] %vm1048, %v930
      %1058 = vst.msk [vmem:[#allocation2 + $0x48] sm:$0xff] %vm1048, %v935
      %1059 = vst.msk [vmem:[#allocation2 + $0x50] sm:$0xff] %vm1048, %v940
      %1060 = vst.msk [vmem:[#allocation2 + $0x58] sm:$0xff] %vm1048, %v945
      %1061 = vst.msk [vmem:[#allocation2 + $0x60] sm:$0xff] %vm1048, %v950
      %1062 = vst.msk [vmem:[#allocation2 + $0x68] sm:$0xff] %vm1048, %v955
      %1063 = vst.msk [vmem:[#allocation2 + $0x70] sm:$0xff] %vm1048, %v960
      %1064 = vst.msk [vmem:[#allocation2 + $0x78] sm:$0xff] %vm1048, %v965
      %1065 = vst.msk [vmem:[#allocation2 + $0x80] sm:$0xff] %vm1048, %v970
      %1066 = vst.msk [vmem:[#allocation2 + $0x88] sm:$0xff] %vm1048, %v975
      %1067 = vst.msk [vmem:[#allocation2 + $0x90] sm:$0xff] %vm1048, %v980
      %1068 = vst.msk [vmem:[#allocation2 + $0x98] sm:$0xff] %vm1048, %v985
      %1069 = vst.msk [vmem:[#allocation2 + $0xa0] sm:$0xff] %vm1048, %v990
      %1070 = vst.msk [vmem:[#allocation2 + $0xa8] sm:$0xff] %vm1048, %v995
      %1071 = vst.msk [vmem:[#allocation2 + $0xb0] sm:$0xff] %vm1048, %v1000
      %1072 = vst.msk [vmem:[#allocation2 + $0xb8] sm:$0xff] %vm1048, %v1005
      %1073 = vst.msk [vmem:[#allocation2 + $0xc0] sm:$0xff] %vm1048, %v1010
      %1074 = vst.msk [vmem:[#allocation2 + $0xc8] sm:$0xff] %vm1048, %v1015
      %1075 = vst.msk [vmem:[#allocation2 + $0xd0] sm:$0xff] %vm1048, %v1020
      %1076 = vst.msk [vmem:[#allocation2 + $0xd8] sm:$0xff] %vm1048, %v1025
      %1077 = vst.msk [vmem:[#allocation2 + $0xe0] sm:$0xff] %vm1048, %v1030
      %1078 = vst.msk [vmem:[#allocation2 + $0xe8] sm:$0xff] %vm1048, %v1035
      %1079 = vst.msk [vmem:[#allocation2 + $0xf0] sm:$0xff] %vm1048, %v1040
      %1080 = vst.msk [vmem:[#allocation2 + $0xf8] sm:$0xff] %vm1048, %v1045
      %v1081 = vsel %vm1048, %v890, 0.0
      %v1082 = vsel %vm1048, %v895, 0.0
      %v1083 = vadd.f32 %v1081, %v1082
      %v1084 = vsel %vm1048, %v900, 0.0
      %v1085 = vadd.f32 %v1083, %v1084
      %v1086 = vsel %vm1048, %v905, 0.0
      %v1087 = vadd.f32 %v1085, %v1086
      %v1088 = vsel %vm1048, %v910, 0.0
      %v1089 = vadd.f32 %v1087, %v1088
      %v1090 = vsel %vm1048, %v915, 0.0
      %v1091 = vadd.f32 %v1089, %v1090
      %v1092 = vsel %vm1048, %v920, 0.0
      %v1093 = vadd.f32 %v1091, %v1092
      %v1094 = vsel %vm1048, %v925, 0.0
      %v1095 = vadd.f32 %v1093, %v1094
      %v1096 = vsel %vm1048, %v930, 0.0
      %v1097 = vadd.f32 %v1095, %v1096
      %v1098 = vsel %vm1048, %v935, 0.0
      %v1099 = vadd.f32 %v1097, %v1098
      %v1100 = vsel %vm1048, %v940, 0.0
      %v1101 = vadd.f32 %v1099, %v1100
      %v1102 = vsel %vm1048, %v945, 0.0
      %v1103 = vadd.f32 %v1101, %v1102
      %v1104 = vsel %vm1048, %v950, 0.0
      %v1105 = vadd.f32 %v1103, %v1104
      %v1106 = vsel %vm1048, %v955, 0.0
      %v1107 = vadd.f32 %v1105, %v1106
      %v1108 = vsel %vm1048, %v960, 0.0
      %v1109 = vadd.f32 %v1107, %v1108
      %v1110 = vsel %vm1048, %v965, 0.0
      %v1111 = vadd.f32 %v1109, %v1110
      %v1112 = vsel %vm1048, %v970, 0.0
      %v1113 = vadd.f32 %v1111, %v1112
      %v1114 = vsel %vm1048, %v975, 0.0
      %v1115 = vadd.f32 %v1113, %v1114
      %v1116 = vsel %vm1048, %v980, 0.0
      %v1117 = vadd.f32 %v1115, %v1116
      %v1118 = vsel %vm1048, %v985, 0.0
      %v1119 = vadd.f32 %v1117, %v1118
      %v1120 = vsel %vm1048, %v990, 0.0
      %v1121 = vadd.f32 %v1119, %v1120
      %v1122 = vsel %vm1048, %v995, 0.0
      %v1123 = vadd.f32 %v1121, %v1122
      %v1124 = vsel %vm1048, %v1000, 0.0
      %v1125 = vadd.f32 %v1123, %v1124
      %v1126 = vsel %vm1048, %v1005, 0.0
      %v1127 = vadd.f32 %v1125, %v1126
      %v1128 = vsel %vm1048, %v1010, 0.0
      %v1129 = vadd.f32 %v1127, %v1128
      %v1130 = vsel %vm1048, %v1015, 0.0
      %v1131 = vadd.f32 %v1129, %v1130
      %v1132 = vsel %vm1048, %v1020, 0.0
      %v1133 = vadd.f32 %v1131, %v1132
      %v1134 = vsel %vm1048, %v1025, 0.0
      %v1135 = vadd.f32 %v1133, %v1134
      %v1136 = vsel %vm1048, %v1030, 0.0
      %v1137 = vadd.f32 %v1135, %v1136
      %v1138 = vsel %vm1048, %v1035, 0.0
      %v1139 = vadd.f32 %v1137, %v1138
      %v1140 = vsel %vm1048, %v1040, 0.0
      %v1141 = vadd.f32 %v1139, %v1140
      %v1142 = vsel %vm1048, %v1045, 0.0
      %v1143 = vadd.f32 %v1141, %v1142
      %v1144 = vrot.slane %v1143, 4
      %v1145 = vadd.f32 %v1143, %v1144
      %v1146 = vrot.slane %v1145, 2
      %v1147 = vadd.f32 %v1145, %v1146
      %v1148 = vrot.slane %v1147, 1
      %v1149 = vadd.f32 %v1147, %v1148
      %v1150 = vadd.f32 %v1149, 0.0
      %v1151 = vmul.f32 %v890, %v890
      %v1152 = vmul.f32 %v895, %v895
      %v1153 = vmul.f32 %v900, %v900
      %v1154 = vmul.f32 %v905, %v905
      %v1155 = vmul.f32 %v910, %v910
      %v1156 = vmul.f32 %v915, %v915
      %v1157 = vmul.f32 %v920, %v920
      %v1158 = vmul.f32 %v925, %v925
      %v1159 = vmul.f32 %v930, %v930
      %v1160 = vmul.f32 %v935, %v935
      %v1161 = vmul.f32 %v940, %v940
      %v1162 = vmul.f32 %v945, %v945
      %v1163 = vmul.f32 %v950, %v950
      %v1164 = vmul.f32 %v955, %v955
      %v1165 = vmul.f32 %v960, %v960
      %v1166 = vmul.f32 %v965, %v965
      %v1167 = vmul.f32 %v970, %v970
      %v1168 = vmul.f32 %v975, %v975
      %v1169 = vmul.f32 %v980, %v980
      %v1170 = vmul.f32 %v985, %v985
      %v1171 = vmul.f32 %v990, %v990
      %v1172 = vmul.f32 %v995, %v995
      %v1173 = vmul.f32 %v1000, %v1000
      %v1174 = vmul.f32 %v1005, %v1005
      %v1175 = vmul.f32 %v1010, %v1010
      %v1176 = vmul.f32 %v1015, %v1015
      %v1177 = vmul.f32 %v1020, %v1020
      %v1178 = vmul.f32 %v1025, %v1025
      %v1179 = vmul.f32 %v1030, %v1030
      %v1180 = vmul.f32 %v1035, %v1035
      %v1181 = vmul.f32 %v1040, %v1040
      %v1182 = vmul.f32 %v1045, %v1045
      %v1183 = vsel %vm1048, %v1151, 0.0
      %v1184 = vsel %vm1048, %v1152, 0.0
      %v1185 = vadd.f32 %v1183, %v1184
      %v1186 = vsel %vm1048, %v1153, 0.0
      %v1187 = vadd.f32 %v1185, %v1186
      %v1188 = vsel %vm1048, %v1154, 0.0
      %v1189 = vadd.f32 %v1187, %v1188
      %v1190 = vsel %vm1048, %v1155, 0.0
      %v1191 = vadd.f32 %v1189, %v1190
      %v1192 = vsel %vm1048, %v1156, 0.0
      %v1193 = vadd.f32 %v1191, %v1192
      %v1194 = vsel %vm1048, %v1157, 0.0
      %v1195 = vadd.f32 %v1193, %v1194
      %v1196 = vsel %vm1048, %v1158, 0.0
      %v1197 = vadd.f32 %v1195, %v1196
      %v1198 = vsel %vm1048, %v1159, 0.0
      %v1199 = vadd.f32 %v1197, %v1198
      %v1200 = vsel %vm1048, %v1160, 0.0
      %v1201 = vadd.f32 %v1199, %v1200
      %v1202 = vsel %vm1048, %v1161, 0.0
      %v1203 = vadd.f32 %v1201, %v1202
      %v1204 = vsel %vm1048, %v1162, 0.0
      %v1205 = vadd.f32 %v1203, %v1204
      %v1206 = vsel %vm1048, %v1163, 0.0
      %v1207 = vadd.f32 %v1205, %v1206
      %v1208 = vsel %vm1048, %v1164, 0.0
      %v1209 = vadd.f32 %v1207, %v1208
      %v1210 = vsel %vm1048, %v1165, 0.0
      %v1211 = vadd.f32 %v1209, %v1210
      %v1212 = vsel %vm1048, %v1166, 0.0
      %v1213 = vadd.f32 %v1211, %v1212
      %v1214 = vsel %vm1048, %v1167, 0.0
      %v1215 = vadd.f32 %v1213, %v1214
      %v1216 = vsel %vm1048, %v1168, 0.0
      %v1217 = vadd.f32 %v1215, %v1216
      %v1218 = vsel %vm1048, %v1169, 0.0
      %v1219 = vadd.f32 %v1217, %v1218
      %v1220 = vsel %vm1048, %v1170, 0.0
      %v1221 = vadd.f32 %v1219, %v1220
      %v1222 = vsel %vm1048, %v1171, 0.0
      %v1223 = vadd.f32 %v1221, %v1222
      %v1224 = vsel %vm1048, %v1172, 0.0
      %v1225 = vadd.f32 %v1223, %v1224
      %v1226 = vsel %vm1048, %v1173, 0.0
      %v1227 = vadd.f32 %v1225, %v1226
      %v1228 = vsel %vm1048, %v1174, 0.0
      %v1229 = vadd.f32 %v1227, %v1228
      %v1230 = vsel %vm1048, %v1175, 0.0
      %v1231 = vadd.f32 %v1229, %v1230
      %v1232 = vsel %vm1048, %v1176, 0.0
      %v1233 = vadd.f32 %v1231, %v1232
      %v1234 = vsel %vm1048, %v1177, 0.0
      %v1235 = vadd.f32 %v1233, %v1234
      %v1236 = vsel %vm1048, %v1178, 0.0
      %v1237 = vadd.f32 %v1235, %v1236
      %v1238 = vsel %vm1048, %v1179, 0.0
      %v1239 = vadd.f32 %v1237, %v1238
      %v1240 = vsel %vm1048, %v1180, 0.0
      %v1241 = vadd.f32 %v1239, %v1240
      %v1242 = vsel %vm1048, %v1181, 0.0
      %v1243 = vadd.f32 %v1241, %v1242
      %v1244 = vsel %vm1048, %v1182, 0.0
      %v1245 = vadd.f32 %v1243, %v1244
      %v1246 = vrot.slane %v1245, 4
      %v1247 = vadd.f32 %v1245, %v1246
      %v1248 = vrot.slane %v1247, 2
      %v1249 = vadd.f32 %v1247, %v1248
      %v1250 = vrot.slane %v1249, 1
      %v1251 = vadd.f32 %v1249, %v1250
      %v1252 = vadd.f32 %v1251, 0.0
      %1253 = vrot.lane.b32.xlu0 %v250, 8
      %v1254 = vpop.permute.xlu0 %1253
      %1255 = vrot.lane.b32.xlu0 %v255, 8
      %v1256 = vpop.permute.xlu0 %1255
      %1257 = vrot.lane.b32.xlu0 %v260, 8
      %v1258 = vpop.permute.xlu0 %1257
      %1259 = vrot.lane.b32.xlu0 %v265, 8
      %v1260 = vpop.permute.xlu0 %1259
      %1261 = vrot.lane.b32.xlu0 %v270, 8
      %v1262 = vpop.permute.xlu0 %1261
      %1263 = vrot.lane.b32.xlu0 %v275, 8
      %v1264 = vpop.permute.xlu0 %1263
      %1265 = vrot.lane.b32.xlu0 %v280, 8
      %v1266 = vpop.permute.xlu0 %1265
      %1267 = vrot.lane.b32.xlu0 %v285, 8
      %v1268 = vpop.permute.xlu0 %1267
      %1269 = vrot.lane.b32.xlu0 %v290, 8
      %v1270 = vpop.permute.xlu0 %1269
      %1271 = vrot.lane.b32.xlu0 %v295, 8
      %v1272 = vpop.permute.xlu0 %1271
      %1273 = vrot.lane.b32.xlu0 %v300, 8
      %v1274 = vpop.permute.xlu0 %1273
      %1275 = vrot.lane.b32.xlu0 %v305, 8
      %v1276 = vpop.permute.xlu0 %1275
      %1277 = vrot.lane.b32.xlu0 %v310, 8
      %v1278 = vpop.permute.xlu0 %1277
      %1279 = vrot.lane.b32.xlu0 %v315, 8
      %v1280 = vpop.permute.xlu0 %1279
      %1281 = vrot.lane.b32.xlu0 %v320, 8
      %v1282 = vpop.permute.xlu0 %1281
      %1283 = vrot.lane.b32.xlu0 %v325, 8
      %v1284 = vpop.permute.xlu0 %1283
      %1301 = vrot.lane.b32.xlu0 %v149, 16
      %v1302 = vpop.permute.xlu0 %1301
      %1303 = vrot.lane.b32.xlu0 %v152, 16
      %v1304 = vpop.permute.xlu0 %1303
      %1305 = vrot.lane.b32.xlu0 %v155, 16
      %v1306 = vpop.permute.xlu0 %1305
      %1307 = vrot.lane.b32.xlu0 %v158, 16
      %v1308 = vpop.permute.xlu0 %1307
      %1309 = vrot.lane.b32.xlu0 %v161, 16
      %v1310 = vpop.permute.xlu0 %1309
      %1311 = vrot.lane.b32.xlu0 %v164, 16
      %v1312 = vpop.permute.xlu0 %1311
      %1313 = vrot.lane.b32.xlu0 %v167, 16
      %v1314 = vpop.permute.xlu0 %1313
      %1315 = vrot.lane.b32.xlu0 %v170, 16
      %v1316 = vpop.permute.xlu0 %1315
      %1317 = vrot.lane.b32.xlu0 %v173, 16
      %v1318 = vpop.permute.xlu0 %1317
      %1319 = vrot.lane.b32.xlu0 %v176, 16
      %v1320 = vpop.permute.xlu0 %1319
      %1321 = vrot.lane.b32.xlu0 %v179, 16
      %v1322 = vpop.permute.xlu0 %1321
      %1323 = vrot.lane.b32.xlu0 %v182, 16
      %v1324 = vpop.permute.xlu0 %1323
      %1325 = vrot.lane.b32.xlu0 %v185, 16
      %v1326 = vpop.permute.xlu0 %1325
      %1327 = vrot.lane.b32.xlu0 %v188, 16
      %v1328 = vpop.permute.xlu0 %1327
      %1329 = vrot.lane.b32.xlu0 %v191, 16
      %v1330 = vpop.permute.xlu0 %1329
      %1331 = vrot.lane.b32.xlu0 %v194, 16
      %v1332 = vpop.permute.xlu0 %1331
      %1349 = vrot.lane.b32.xlu0 %v255, 24
      %v1350 = vpop.permute.xlu0 %1349
      %1351 = vrot.lane.b32.xlu0 %v260, 24
      %v1352 = vpop.permute.xlu0 %1351
      %1353 = vrot.lane.b32.xlu0 %v265, 24
      %v1354 = vpop.permute.xlu0 %1353
      %1355 = vrot.lane.b32.xlu0 %v270, 24
      %v1356 = vpop.permute.xlu0 %1355
      %1357 = vrot.lane.b32.xlu0 %v275, 24
      %v1358 = vpop.permute.xlu0 %1357
      %1359 = vrot.lane.b32.xlu0 %v280, 24
      %v1360 = vpop.permute.xlu0 %1359
      %1361 = vrot.lane.b32.xlu0 %v285, 24
      %v1362 = vpop.permute.xlu0 %1361
      %1363 = vrot.lane.b32.xlu0 %v290, 24
      %v1364 = vpop.permute.xlu0 %1363
      %1365 = vrot.lane.b32.xlu0 %v295, 24
      %v1366 = vpop.permute.xlu0 %1365
      %1367 = vrot.lane.b32.xlu0 %v300, 24
      %v1368 = vpop.permute.xlu0 %1367
      %1369 = vrot.lane.b32.xlu0 %v305, 24
      %v1370 = vpop.permute.xlu0 %1369
      %1371 = vrot.lane.b32.xlu0 %v310, 24
      %v1372 = vpop.permute.xlu0 %1371
      %1373 = vrot.lane.b32.xlu0 %v315, 24
      %v1374 = vpop.permute.xlu0 %1373
      %1375 = vrot.lane.b32.xlu0 %v320, 24
      %v1376 = vpop.permute.xlu0 %1375
      %1377 = vrot.lane.b32.xlu0 %v325, 24
      %v1378 = vpop.permute.xlu0 %1377
      %1379 = vrot.lane.b32.xlu0 %v525, 24
      %v1380 = vpop.permute.xlu0 %1379
      %v1397 = vsel %vm623, %v146, %v1254
      %v1398 = vsel %vm623, %v149, %v1256
      %v1399 = vsel %vm623, %v152, %v1258
      %v1400 = vsel %vm623, %v155, %v1260
      %v1401 = vsel %vm623, %v158, %v1262
      %v1402 = vsel %vm623, %v161, %v1264
      %v1403 = vsel %vm623, %v164, %v1266
      %v1404 = vsel %vm623, %v167, %v1268
      %v1405 = vsel %vm623, %v170, %v1270
      %v1406 = vsel %vm623, %v173, %v1272
      %v1407 = vsel %vm623, %v176, %v1274
      %v1408 = vsel %vm623, %v179, %v1276
      %v1409 = vsel %vm623, %v182, %v1278
      %v1410 = vsel %vm623, %v185, %v1280
      %v1411 = vsel %vm623, %v188, %v1282
      %v1412 = vsel %vm623, %v191, %v1284
      %v1413 = vsel %vm656, %v1397, %v1302
      %v1414 = vsel %vm656, %v1398, %v1304
      %v1415 = vsel %vm656, %v1399, %v1306
      %v1416 = vsel %vm656, %v1400, %v1308
      %v1417 = vsel %vm656, %v1401, %v1310
      %v1418 = vsel %vm656, %v1402, %v1312
      %v1419 = vsel %vm656, %v1403, %v1314
      %v1420 = vsel %vm656, %v1404, %v1316
      %v1421 = vsel %vm656, %v1405, %v1318
      %v1422 = vsel %vm656, %v1406, %v1320
      %v1423 = vsel %vm656, %v1407, %v1322
      %v1424 = vsel %vm656, %v1408, %v1324
      %v1425 = vsel %vm656, %v1409, %v1326
      %v1426 = vsel %vm656, %v1410, %v1328
      %v1427 = vsel %vm656, %v1411, %v1330
      %v1428 = vsel %vm656, %v1412, %v1332
      %v1429 = vsel %vm689, %v1413, %v1350
      %v1430 = vsel %vm689, %v1414, %v1352
      %v1431 = vsel %vm689, %v1415, %v1354
      %v1432 = vsel %vm689, %v1416, %v1356
      %v1433 = vsel %vm689, %v1417, %v1358
      %v1434 = vsel %vm689, %v1418, %v1360
      %v1435 = vsel %vm689, %v1419, %v1362
      %v1436 = vsel %vm689, %v1420, %v1364
      %v1437 = vsel %vm689, %v1421, %v1366
      %v1438 = vsel %vm689, %v1422, %v1368
      %v1439 = vsel %vm689, %v1423, %v1370
      %v1440 = vsel %vm689, %v1424, %v1372
      %v1441 = vsel %vm689, %v1425, %v1374
      %v1442 = vsel %vm689, %v1426, %v1376
      %v1443 = vsel %vm689, %v1427, %v1378
      %v1444 = vsel %vm689, %v1428, %v1380
      %v1461 = vrot.slane %v690, 1
      %v1462 = vrot.slane %v691, 1
      %v1463 = vsel %vm246, %v1461, %v1462
      %v1464 = vrot.slane %v1429, 1
      %v1465 = vsel %vm246, %v1462, %v1464
      %v1466 = vrot.slane %v692, 1
      %v1467 = vrot.slane %v693, 1
      %v1468 = vsel %vm246, %v1466, %v1467
      %v1469 = vrot.slane %v1430, 1
      %v1470 = vsel %vm246, %v1467, %v1469
      %v1471 = vrot.slane %v694, 1
      %v1472 = vrot.slane %v695, 1
      %v1473 = vsel %vm246, %v1471, %v1472
      %v1474 = vrot.slane %v1431, 1
      %v1475 = vsel %vm246, %v1472, %v1474
      %v1476 = vrot.slane %v696, 1
      %v1477 = vrot.slane %v697, 1
      %v1478 = vsel %vm246, %v1476, %v1477
      %v1479 = vrot.slane %v1432, 1
      %v1480 = vsel %vm246, %v1477, %v1479
      %v1481 = vrot.slane %v698, 1
      %v1482 = vrot.slane %v699, 1
      %v1483 = vsel %vm246, %v1481, %v1482
      %v1484 = vrot.slane %v1433, 1
      %v1485 = vsel %vm246, %v1482, %v1484
      %v1486 = vrot.slane %v700, 1
      %v1487 = vrot.slane %v701, 1
      %v1488 = vsel %vm246, %v1486, %v1487
      %v1489 = vrot.slane %v1434, 1
      %v1490 = vsel %vm246, %v1487, %v1489
      %v1491 = vrot.slane %v702, 1
      %v1492 = vrot.slane %v703, 1
      %v1493 = vsel %vm246, %v1491, %v1492
      %v1494 = vrot.slane %v1435, 1
      %v1495 = vsel %vm246, %v1492, %v1494
      %v1496 = vrot.slane %v704, 1
      %v1497 = vrot.slane %v705, 1
      %v1498 = vsel %vm246, %v1496, %v1497
      %v1499 = vrot.slane %v1436, 1
      %v1500 = vsel %vm246, %v1497, %v1499
      %v1501 = vrot.slane %v706, 1
      %v1502 = vrot.slane %v707, 1
      %v1503 = vsel %vm246, %v1501, %v1502
      %v1504 = vrot.slane %v1437, 1
      %v1505 = vsel %vm246, %v1502, %v1504
      %v1506 = vrot.slane %v708, 1
      %v1507 = vrot.slane %v709, 1
      %v1508 = vsel %vm246, %v1506, %v1507
      %v1509 = vrot.slane %v1438, 1
      %v1510 = vsel %vm246, %v1507, %v1509
      %v1511 = vrot.slane %v710, 1
      %v1512 = vrot.slane %v711, 1
      %v1513 = vsel %vm246, %v1511, %v1512
      %v1514 = vrot.slane %v1439, 1
      %v1515 = vsel %vm246, %v1512, %v1514
      %v1516 = vrot.slane %v712, 1
      %v1517 = vrot.slane %v713, 1
      %v1518 = vsel %vm246, %v1516, %v1517
      %v1519 = vrot.slane %v1440, 1
      %v1520 = vsel %vm246, %v1517, %v1519
      %v1521 = vrot.slane %v714, 1
      %v1522 = vrot.slane %v715, 1
      %v1523 = vsel %vm246, %v1521, %v1522
      %v1524 = vrot.slane %v1441, 1
      %v1525 = vsel %vm246, %v1522, %v1524
      %v1526 = vrot.slane %v716, 1
      %v1527 = vrot.slane %v717, 1
      %v1528 = vsel %vm246, %v1526, %v1527
      %v1529 = vrot.slane %v1442, 1
      %v1530 = vsel %vm246, %v1527, %v1529
      %v1531 = vrot.slane %v718, 1
      %v1532 = vrot.slane %v719, 1
      %v1533 = vsel %vm246, %v1531, %v1532
      %v1534 = vrot.slane %v1443, 1
      %v1535 = vsel %vm246, %v1532, %v1534
      %v1536 = vrot.slane %v720, 1
      %v1537 = vrot.slane %v721, 1
      %v1538 = vsel %vm246, %v1536, %v1537
      %v1539 = vrot.slane %v1444, 1
      %v1540 = vsel %vm246, %v1537, %v1539
      %s1541 = scalar_lea.vmem %s1, 32
      %v1542 = vld [vmem:[%s1541] sm:$0xff]
      %v1543 = vld [vmem:[%s1541 + $0x8] sm:$0xff]
      %v1544 = vld [vmem:[%s1541 + $0x10] sm:$0xff]
      %v1545 = vld [vmem:[%s1541 + $0x18] sm:$0xff]
      %v1546 = vsel %vm726, %v1463, 0
      %v1548 = vsel %vm726, %v1465, 0
      %v1550 = vsel %vm726, %v1468, 0
      %v1552 = vsel %vm726, %v1470, 0
      %v1554 = vsel %vm726, %v1473, 0
      %v1556 = vsel %vm726, %v1475, 0
      %v1558 = vsel %vm726, %v1478, 0
      %v1560 = vsel %vm726, %v1480, 0
      %v1562 = vsel %vm726, %v1483, 0
      %v1564 = vsel %vm726, %v1485, 0
      %v1566 = vsel %vm726, %v1488, 0
      %v1568 = vsel %vm726, %v1490, 0
      %v1570 = vsel %vm726, %v1493, 0
      %v1572 = vsel %vm726, %v1495, 0
      %v1574 = vsel %vm726, %v1498, 0
      %v1576 = vsel %vm726, %v1500, 0
      %v1578 = vsel %vm726, %v1503, 0
      %v1580 = vsel %vm726, %v1505, 0
      %v1582 = vsel %vm726, %v1508, 0
      %v1584 = vsel %vm726, %v1510, 0
      %v1586 = vsel %vm726, %v1513, 0
      %v1588 = vsel %vm726, %v1515, 0
      %v1590 = vsel %vm726, %v1518, 0
      %v1592 = vsel %vm726, %v1520, 0
      %v1594 = vsel %vm726, %v1523, 0
      %v1596 = vsel %vm726, %v1525, 0
      %v1598 = vsel %vm726, %v1528, 0
      %v1600 = vsel %vm726, %v1530, 0
      %v1602 = vsel %vm726, %v1533, 0
      %v1604 = vsel %vm726, %v1535, 0
      %v1606 = vsel %vm726, %v1538, 0
      %v1608 = vsel %vm726, %v1540, 0
      %1610 = vmatprep.subr.mxu0 0.0
      %1611 = vmatpush1.msra.mxu0 %v1542
      %1612 = vmatprep.subr.mxu0 0.0
      %1613 = vmatpush1.msra.mxu0 %v1543
      %1614 = vmatprep.subr.mxu0 0.0
      %1615 = vmatpush1.msra.mxu0 %v1544
      %1616 = vmatprep.subr.mxu0 0.0
      %1617 = vmatpush1.msra.mxu0 %v1545
      %1618 = vmatprep.subr.mxu0 0.0
      %1619 = vmatpush1.msra.mxu0 0.0
      %1620 = vmatprep.subr.mxu0 0.0
      %1621 = vmatpush1.msra.mxu0 0.0
      %1622 = vmatprep.subr.mxu0 0.0
      %1623 = vmatpush1.msra.mxu0 0.0
      %1624 = vmatprep.subr.mxu0 0.0
      %1625 = vmatpush1.msra.mxu0 0.0
      %1626 = vmatprep.subr.mxu0 0.0
      %1627 = vmatpush1.msra.mxu0 0.0
      %1628 = vmatprep.subr.mxu0 0.0
      %1629 = vmatpush1.msra.mxu0 0.0
      %1630 = vmatprep.subr.mxu0 0.0
      %1631 = vmatpush1.msra.mxu0 0.0
      %1632 = vmatprep.subr.mxu0 0.0
      %1633 = vmatpush1.msra.mxu0 0.0
      %1634 = vmatprep.subr.mxu0 0.0
      %1635 = vmatpush1.msra.mxu0 0.0
      %1636 = vmatprep.subr.mxu0 0.0
      %1637 = vmatpush1.msra.mxu0 0.0
      %1638 = vmatprep.subr.mxu0 0.0
      %1639 = vmatpush1.msra.mxu0 0.0
      %1640 = vmatprep.subr.mxu0 0.0
      %1641 = vmatpush1.msra.mxu0 0.0
      %1642 = vmatprep.subr.mxu0 0.0
      %1643 = vmatpush1.msra.mxu0 0.0
      %1644 = vmatprep.subr.mxu0 0.0
      %1645 = vmatpush1.msra.mxu0 0.0
      %1646 = vmatprep.subr.mxu0 0.0
      %1647 = vmatpush1.msra.mxu0 0.0
      %1648 = vmatprep.subr.mxu0 0.0
      %1649 = vmatpush1.msra.mxu0 0.0
      %1650 = vmatprep.subr.mxu0 0.0
      %1651 = vmatpush1.msra.mxu0 0.0
      %1652 = vmatprep.subr.mxu0 0.0
      %1653 = vmatpush1.msra.mxu0 0.0
      %1654 = vmatprep.subr.mxu0 0.0
      %1655 = vmatpush1.msra.mxu0 0.0
      %1656 = vmatprep.subr.mxu0 0.0
      %1657 = vmatpush1.msra.mxu0 0.0
      %1658 = vmatprep.subr.mxu0 0.0
      %1659 = vmatpush1.msra.mxu0 0.0
      %1660 = vmatprep.subr.mxu0 0.0
      %1661 = vmatpush1.msra.mxu0 0.0
      %1662 = vmatprep.subr.mxu0 0.0
      %1663 = vmatpush1.msra.mxu0 0.0
      %1664 = vmatprep.subr.mxu0 0.0
      %1665 = vmatpush1.msra.mxu0 0.0
      %1666 = vmatprep.subr.mxu0 0.0
      %1667 = vmatpush1.msra.mxu0 0.0
      %1668 = vmatprep.subr.mxu0 0.0
      %1669 = vmatpush1.msra.mxu0 0.0
      %1670 = vmatprep.subr.mxu0 0.0
      %1671 = vmatpush1.msra.mxu0 0.0
      %1672 = vmatprep.subr.mxu0 0.0
      %1673 = vmatpush1.msra.mxu0 0.0
      %1674 = vmatprep.mubr.f32.mxu0 0.0
      %1675 = vmatmul.mubr.f32.gmra.mrb[0].mxu0 %v1546
      %v1676 = vpop.f32.mrb[0].mxu0
      %v1677 = vadd.f32 0.0, %v1676
      %v1678 = vpop.f32.mrb[0].mxu0
      %1679 = vmatprep.mubr.f32.mxu0 0.0
      %1680 = vmatmul.mubr.f32.gmra.mrb[0].mxu0 %v1548
      %v1681 = vpop.f32.mrb[0].mxu0
      %v1682 = vadd.f32 0.0, %v1681
      %v1683 = vpop.f32.mrb[0].mxu0
      %1684 = vmatprep.mubr.f32.mxu0 0.0
      %1685 = vmatmul.mubr.f32.gmra.mrb[0].mxu0 %v1550
      %v1686 = vpop.f32.mrb[0].mxu0
      %v1687 = vadd.f32 0.0, %v1686
      %v1688 = vpop.f32.mrb[0].mxu0
      %1689 = vmatprep.mubr.f32.mxu0 0.0
      %1690 = vmatmul.mubr.f32.gmra.mrb[0].mxu0 %v1552
      %v1691 = vpop.f32.mrb[0].mxu0
      %v1692 = vadd.f32 0.0, %v1691
      %v1693 = vpop.f32.mrb[0].mxu0
      %1694 = vmatprep.mubr.f32.mxu0 0.0
      %1695 = vmatmul.mubr.f32.gmra.mrb[0].mxu0 %v1554
      %v1696 = vpop.f32.mrb[0].mxu0
      %v1697 = vadd.f32 0.0, %v1696
      %v1698 = vpop.f32.mrb[0].mxu0
      %1699 = vmatprep.mubr.f32.mxu0 0.0
      %1700 = vmatmul.mubr.f32.gmra.mrb[0].mxu0 %v1556
      %v1701 = vpop.f32.mrb[0].mxu0
      %v1702 = vadd.f32 0.0, %v1701
      %v1703 = vpop.f32.mrb[0].mxu0
      %1704 = vmatprep.mubr.f32.mxu0 0.0
      %1705 = vmatmul.mubr.f32.gmra.mrb[0].mxu0 %v1558
      %v1706 = vpop.f32.mrb[0].mxu0
      %v1707 = vadd.f32 0.0, %v1706
      %v1708 = vpop.f32.mrb[0].mxu0
      %1709 = vmatprep.mubr.f32.mxu0 0.0
      %1710 = vmatmul.mubr.f32.gmra.mrb[0].mxu0 %v1560
      %v1711 = vpop.f32.mrb[0].mxu0
      %v1712 = vadd.f32 0.0, %v1711
      %v1713 = vpop.f32.mrb[0].mxu0
      %1714 = vmatprep.mubr.f32.mxu0 0.0
      %1715 = vmatmul.mubr.f32.gmra.mrb[0].mxu0 %v1562
      %v1716 = vpop.f32.mrb[0].mxu0
      %v1717 = vadd.f32 0.0, %v1716
      %v1718 = vpop.f32.mrb[0].mxu0
      %1719 = vmatprep.mubr.f32.mxu0 0.0
      %1720 = vmatmul.mubr.f32.gmra.mrb[0].mxu0 %v1564
      %v1721 = vpop.f32.mrb[0].mxu0
      %v1722 = vadd.f32 0.0, %v1721
      %v1723 = vpop.f32.mrb[0].mxu0
      %1724 = vmatprep.mubr.f32.mxu0 0.0
      %1725 = vmatmul.mubr.f32.gmra.mrb[0].mxu0 %v1566
      %v1726 = vpop.f32.mrb[0].mxu0
      %v1727 = vadd.f32 0.0, %v1726
      %v1728 = vpop.f32.mrb[0].mxu0
      %1729 = vmatprep.mubr.f32.mxu0 0.0
      %1730 = vmatmul.mubr.f32.gmra.mrb[0].mxu0 %v1568
      %v1731 = vpop.f32.mrb[0].mxu0
      %v1732 = vadd.f32 0.0, %v1731
      %v1733 = vpop.f32.mrb[0].mxu0
      %1734 = vmatprep.mubr.f32.mxu0 0.0
      %1735 = vmatmul.mubr.f32.gmra.mrb[0].mxu0 %v1570
      %v1736 = vpop.f32.mrb[0].mxu0
      %v1737 = vadd.f32 0.0, %v1736
      %v1738 = vpop.f32.mrb[0].mxu0
      %1739 = vmatprep.mubr.f32.mxu0 0.0
      %1740 = vmatmul.mubr.f32.gmra.mrb[0].mxu0 %v1572
      %v1741 = vpop.f32.mrb[0].mxu0
      %v1742 = vadd.f32 0.0, %v1741
      %v1743 = vpop.f32.mrb[0].mxu0
      %1744 = vmatprep.mubr.f32.mxu0 0.0
      %1745 = vmatmul.mubr.f32.gmra.mrb[0].mxu0 %v1574
      %v1746 = vpop.f32.mrb[0].mxu0
      %v1747 = vadd.f32 0.0, %v1746
      %v1748 = vpop.f32.mrb[0].mxu0
      %1749 = vmatprep.mubr.f32.mxu0 0.0
      %1750 = vmatmul.mubr.f32.gmra.mrb[0].mxu0 %v1576
      %v1751 = vpop.f32.mrb[0].mxu0
      %v1752 = vadd.f32 0.0, %v1751
      %v1753 = vpop.f32.mrb[0].mxu0
      %1754 = vmatprep.mubr.f32.mxu0 0.0
      %1755 = vmatmul.mubr.f32.gmra.mrb[0].mxu0 %v1578
      %v1756 = vpop.f32.mrb[0].mxu0
      %v1757 = vadd.f32 0.0, %v1756
      %v1758 = vpop.f32.mrb[0].mxu0
      %1759 = vmatprep.mubr.f32.mxu0 0.0
      %1760 = vmatmul.mubr.f32.gmra.mrb[0].mxu0 %v1580
      %v1761 = vpop.f32.mrb[0].mxu0
      %v1762 = vadd.f32 0.0, %v1761
      %v1763 = vpop.f32.mrb[0].mxu0
      %1764 = vmatprep.mubr.f32.mxu0 0.0
      %1765 = vmatmul.mubr.f32.gmra.mrb[0].mxu0 %v1582
      %v1766 = vpop.f32.mrb[0].mxu0
      %v1767 = vadd.f32 0.0, %v1766
      %v1768 = vpop.f32.mrb[0].mxu0
      %1769 = vmatprep.mubr.f32.mxu0 0.0
      %1770 = vmatmul.mubr.f32.gmra.mrb[0].mxu0 %v1584
      %v1771 = vpop.f32.mrb[0].mxu0
      %v1772 = vadd.f32 0.0, %v1771
      %v1773 = vpop.f32.mrb[0].mxu0
      %1774 = vmatprep.mubr.f32.mxu0 0.0
      %1775 = vmatmul.mubr.f32.gmra.mrb[0].mxu0 %v1586
      %v1776 = vpop.f32.mrb[0].mxu0
      %v1777 = vadd.f32 0.0, %v1776
      %v1778 = vpop.f32.mrb[0].mxu0
      %1779 = vmatprep.mubr.f32.mxu0 0.0
      %1780 = vmatmul.mubr.f32.gmra.mrb[0].mxu0 %v1588
      %v1781 = vpop.f32.mrb[0].mxu0
      %v1782 = vadd.f32 0.0, %v1781
      %v1783 = vpop.f32.mrb[0].mxu0
      %1784 = vmatprep.mubr.f32.mxu0 0.0
      %1785 = vmatmul.mubr.f32.gmra.mrb[0].mxu0 %v1590
      %v1786 = vpop.f32.mrb[0].mxu0
      %v1787 = vadd.f32 0.0, %v1786
      %v1788 = vpop.f32.mrb[0].mxu0
      %1789 = vmatprep.mubr.f32.mxu0 0.0
      %1790 = vmatmul.mubr.f32.gmra.mrb[0].mxu0 %v1592
      %v1791 = vpop.f32.mrb[0].mxu0
      %v1792 = vadd.f32 0.0, %v1791
      %v1793 = vpop.f32.mrb[0].mxu0
      %1794 = vmatprep.mubr.f32.mxu0 0.0
      %1795 = vmatmul.mubr.f32.gmra.mrb[0].mxu0 %v1594
      %v1796 = vpop.f32.mrb[0].mxu0
      %v1797 = vadd.f32 0.0, %v1796
      %v1798 = vpop.f32.mrb[0].mxu0
      %1799 = vmatprep.mubr.f32.mxu0 0.0
      %1800 = vmatmul.mubr.f32.gmra.mrb[0].mxu0 %v1596
      %v1801 = vpop.f32.mrb[0].mxu0
      %v1802 = vadd.f32 0.0, %v1801
      %v1803 = vpop.f32.mrb[0].mxu0
      %1804 = vmatprep.mubr.f32.mxu0 0.0
      %1805 = vmatmul.mubr.f32.gmra.mrb[0].mxu0 %v1598
      %v1806 = vpop.f32.mrb[0].mxu0
      %v1807 = vadd.f32 0.0, %v1806
      %v1808 = vpop.f32.mrb[0].mxu0
      %1809 = vmatprep.mubr.f32.mxu0 0.0
      %1810 = vmatmul.mubr.f32.gmra.mrb[0].mxu0 %v1600
      %v1811 = vpop.f32.mrb[0].mxu0
      %v1812 = vadd.f32 0.0, %v1811
      %v1813 = vpop.f32.mrb[0].mxu0
      %1814 = vmatprep.mubr.f32.mxu0 0.0
      %1815 = vmatmul.mubr.f32.gmra.mrb[0].mxu0 %v1602
      %v1816 = vpop.f32.mrb[0].mxu0
      %v1817 = vadd.f32 0.0, %v1816
      %v1818 = vpop.f32.mrb[0].mxu0
      %1819 = vmatprep.mubr.f32.mxu0 0.0
      %1820 = vmatmul.mubr.f32.gmra.mrb[0].mxu0 %v1604
      %v1821 = vpop.f32.mrb[0].mxu0
      %v1822 = vadd.f32 0.0, %v1821
      %v1823 = vpop.f32.mrb[0].mxu0
      %1824 = vmatprep.mubr.f32.mxu0 0.0
      %1825 = vmatmul.mubr.f32.gmra.mrb[0].mxu0 %v1606
      %v1826 = vpop.f32.mrb[0].mxu0
      %v1827 = vadd.f32 0.0, %v1826
      %v1828 = vpop.f32.mrb[0].mxu0
      %1829 = vmatprep.mubr.f32.mxu0 0.0
      %1830 = vmatmul.mubr.f32.gmra.mrb[0].mxu0 %v1608
      %v1831 = vpop.f32.mrb[0].mxu0
      %v1832 = vadd.f32 0.0, %v1831
      %v1833 = vpop.f32.mrb[0].mxu0
      %1834 = vdwg.mxu0
      %s1835 = scalar_lea.vmem [#allocation2], 256
      %1836 = vst.msk [vmem:[%s1835] sm:$0xff] %vm1048, %v1677
      %1837 = vst.msk [vmem:[%s1835 + $0x8] sm:$0xff] %vm1048, %v1682
      %1838 = vst.msk [vmem:[%s1835 + $0x10] sm:$0xff] %vm1048, %v1687
      %1839 = vst.msk [vmem:[%s1835 + $0x18] sm:$0xff] %vm1048, %v1692
      %1840 = vst.msk [vmem:[%s1835 + $0x20] sm:$0xff] %vm1048, %v1697
      %1841 = vst.msk [vmem:[%s1835 + $0x28] sm:$0xff] %vm1048, %v1702
      %1842 = vst.msk [vmem:[%s1835 + $0x30] sm:$0xff] %vm1048, %v1707
      %1843 = vst.msk [vmem:[%s1835 + $0x38] sm:$0xff] %vm1048, %v1712
      %1844 = vst.msk [vmem:[%s1835 + $0x40] sm:$0xff] %vm1048, %v1717
      %1845 = vst.msk [vmem:[%s1835 + $0x48] sm:$0xff] %vm1048, %v1722
      %1846 = vst.msk [vmem:[%s1835 + $0x50] sm:$0xff] %vm1048, %v1727
      %1847 = vst.msk [vmem:[%s1835 + $0x58] sm:$0xff] %vm1048, %v1732
      %1848 = vst.msk [vmem:[%s1835 + $0x60] sm:$0xff] %vm1048, %v1737
      %1849 = vst.msk [vmem:[%s1835 + $0x68] sm:$0xff] %vm1048, %v1742
      %1850 = vst.msk [vmem:[%s1835 + $0x70] sm:$0xff] %vm1048, %v1747
      %1851 = vst.msk [vmem:[%s1835 + $0x78] sm:$0xff] %vm1048, %v1752
      %1852 = vst.msk [vmem:[%s1835 + $0x80] sm:$0xff] %vm1048, %v1757
      %1853 = vst.msk [vmem:[%s1835 + $0x88] sm:$0xff] %vm1048, %v1762
      %1854 = vst.msk [vmem:[%s1835 + $0x90] sm:$0xff] %vm1048, %v1767
      %1855 = vst.msk [vmem:[%s1835 + $0x98] sm:$0xff] %vm1048, %v1772
      %1856 = vst.msk [vmem:[%s1835 + $0xa0] sm:$0xff] %vm1048, %v1777
      %1857 = vst.msk [vmem:[%s1835 + $0xa8] sm:$0xff] %vm1048, %v1782
      %1858 = vst.msk [vmem:[%s1835 + $0xb0] sm:$0xff] %vm1048, %v1787
      %1859 = vst.msk [vmem:[%s1835 + $0xb8] sm:$0xff] %vm1048, %v1792
      %1860 = vst.msk [vmem:[%s1835 + $0xc0] sm:$0xff] %vm1048, %v1797
      %1861 = vst.msk [vmem:[%s1835 + $0xc8] sm:$0xff] %vm1048, %v1802
      %1862 = vst.msk [vmem:[%s1835 + $0xd0] sm:$0xff] %vm1048, %v1807
      %1863 = vst.msk [vmem:[%s1835 + $0xd8] sm:$0xff] %vm1048, %v1812
      %1864 = vst.msk [vmem:[%s1835 + $0xe0] sm:$0xff] %vm1048, %v1817
      %1865 = vst.msk [vmem:[%s1835 + $0xe8] sm:$0xff] %vm1048, %v1822
      %1866 = vst.msk [vmem:[%s1835 + $0xf0] sm:$0xff] %vm1048, %v1827
      %1867 = vst.msk [vmem:[%s1835 + $0xf8] sm:$0xff] %vm1048, %v1832
      %v1868 = vsel %vm1048, %v1677, 0.0
      %v1869 = vsel %vm1048, %v1682, 0.0
      %v1870 = vadd.f32 %v1868, %v1869
      %v1871 = vsel %vm1048, %v1687, 0.0
      %v1872 = vadd.f32 %v1870, %v1871
      %v1873 = vsel %vm1048, %v1692, 0.0
      %v1874 = vadd.f32 %v1872, %v1873
      %v1875 = vsel %vm1048, %v1697, 0.0
      %v1876 = vadd.f32 %v1874, %v1875
      %v1877 = vsel %vm1048, %v1702, 0.0
      %v1878 = vadd.f32 %v1876, %v1877
      %v1879 = vsel %vm1048, %v1707, 0.0
      %v1880 = vadd.f32 %v1878, %v1879
      %v1881 = vsel %vm1048, %v1712, 0.0
      %v1882 = vadd.f32 %v1880, %v1881
      %v1883 = vsel %vm1048, %v1717, 0.0
      %v1884 = vadd.f32 %v1882, %v1883
      %v1885 = vsel %vm1048, %v1722, 0.0
      %v1886 = vadd.f32 %v1884, %v1885
      %v1887 = vsel %vm1048, %v1727, 0.0
      %v1888 = vadd.f32 %v1886, %v1887
      %v1889 = vsel %vm1048, %v1732, 0.0
      %v1890 = vadd.f32 %v1888, %v1889
      %v1891 = vsel %vm1048, %v1737, 0.0
      %v1892 = vadd.f32 %v1890, %v1891
      %v1893 = vsel %vm1048, %v1742, 0.0
      %v1894 = vadd.f32 %v1892, %v1893
      %v1895 = vsel %vm1048, %v1747, 0.0
      %v1896 = vadd.f32 %v1894, %v1895
      %v1897 = vsel %vm1048, %v1752, 0.0
      %v1898 = vadd.f32 %v1896, %v1897
      %v1899 = vsel %vm1048, %v1757, 0.0
      %v1900 = vadd.f32 %v1898, %v1899
      %v1901 = vsel %vm1048, %v1762, 0.0
      %v1902 = vadd.f32 %v1900, %v1901
      %v1903 = vsel %vm1048, %v1767, 0.0
      %v1904 = vadd.f32 %v1902, %v1903
      %v1905 = vsel %vm1048, %v1772, 0.0
      %v1906 = vadd.f32 %v1904, %v1905
      %v1907 = vsel %vm1048, %v1777, 0.0
      %v1908 = vadd.f32 %v1906, %v1907
      %v1909 = vsel %vm1048, %v1782, 0.0
      %v1910 = vadd.f32 %v1908, %v1909
      %v1911 = vsel %vm1048, %v1787, 0.0
      %v1912 = vadd.f32 %v1910, %v1911
      %v1913 = vsel %vm1048, %v1792, 0.0
      %v1914 = vadd.f32 %v1912, %v1913
      %v1915 = vsel %vm1048, %v1797, 0.0
      %v1916 = vadd.f32 %v1914, %v1915
      %v1917 = vsel %vm1048, %v1802, 0.0
      %v1918 = vadd.f32 %v1916, %v1917
      %v1919 = vsel %vm1048, %v1807, 0.0
      %v1920 = vadd.f32 %v1918, %v1919
      %v1921 = vsel %vm1048, %v1812, 0.0
      %v1922 = vadd.f32 %v1920, %v1921
      %v1923 = vsel %vm1048, %v1817, 0.0
      %v1924 = vadd.f32 %v1922, %v1923
      %v1925 = vsel %vm1048, %v1822, 0.0
      %v1926 = vadd.f32 %v1924, %v1925
      %v1927 = vsel %vm1048, %v1827, 0.0
      %v1928 = vadd.f32 %v1926, %v1927
      %v1929 = vsel %vm1048, %v1832, 0.0
      %v1930 = vadd.f32 %v1928, %v1929
      %v1931 = vrot.slane %v1930, 4
      %v1932 = vadd.f32 %v1930, %v1931
      %v1933 = vrot.slane %v1932, 2
      %v1934 = vadd.f32 %v1932, %v1933
      %v1935 = vrot.slane %v1934, 1
      %v1936 = vadd.f32 %v1934, %v1935
      %v1937 = vadd.f32 %v1150, %v1936
      %v1938 = vmul.f32 %v1677, %v1677
      %v1939 = vmul.f32 %v1682, %v1682
      %v1940 = vmul.f32 %v1687, %v1687
      %v1941 = vmul.f32 %v1692, %v1692
      %v1942 = vmul.f32 %v1697, %v1697
      %v1943 = vmul.f32 %v1702, %v1702
      %v1944 = vmul.f32 %v1707, %v1707
      %v1945 = vmul.f32 %v1712, %v1712
      %v1946 = vmul.f32 %v1717, %v1717
      %v1947 = vmul.f32 %v1722, %v1722
      %v1948 = vmul.f32 %v1727, %v1727
      %v1949 = vmul.f32 %v1732, %v1732
      %v1950 = vmul.f32 %v1737, %v1737
      %v1951 = vmul.f32 %v1742, %v1742
      %v1952 = vmul.f32 %v1747, %v1747
      %v1953 = vmul.f32 %v1752, %v1752
      %v1954 = vmul.f32 %v1757, %v1757
      %v1955 = vmul.f32 %v1762, %v1762
      %v1956 = vmul.f32 %v1767, %v1767
      %v1957 = vmul.f32 %v1772, %v1772
      %v1958 = vmul.f32 %v1777, %v1777
      %v1959 = vmul.f32 %v1782, %v1782
      %v1960 = vmul.f32 %v1787, %v1787
      %v1961 = vmul.f32 %v1792, %v1792
      %v1962 = vmul.f32 %v1797, %v1797
      %v1963 = vmul.f32 %v1802, %v1802
      %v1964 = vmul.f32 %v1807, %v1807
      %v1965 = vmul.f32 %v1812, %v1812
      %v1966 = vmul.f32 %v1817, %v1817
      %v1967 = vmul.f32 %v1822, %v1822
      %v1968 = vmul.f32 %v1827, %v1827
      %v1969 = vmul.f32 %v1832, %v1832
      %v1970 = vsel %vm1048, %v1938, 0.0
      %v1971 = vsel %vm1048, %v1939, 0.0
      %v1972 = vadd.f32 %v1970, %v1971
      %v1973 = vsel %vm1048, %v1940, 0.0
      %v1974 = vadd.f32 %v1972, %v1973
      %v1975 = vsel %vm1048, %v1941, 0.0
      %v1976 = vadd.f32 %v1974, %v1975
      %v1977 = vsel %vm1048, %v1942, 0.0
      %v1978 = vadd.f32 %v1976, %v1977
      %v1979 = vsel %vm1048, %v1943, 0.0
      %v1980 = vadd.f32 %v1978, %v1979
      %v1981 = vsel %vm1048, %v1944, 0.0
      %v1982 = vadd.f32 %v1980, %v1981
      %v1983 = vsel %vm1048, %v1945, 0.0
      %v1984 = vadd.f32 %v1982, %v1983
      %v1985 = vsel %vm1048, %v1946, 0.0
      %v1986 = vadd.f32 %v1984, %v1985
      %v1987 = vsel %vm1048, %v1947, 0.0
      %v1988 = vadd.f32 %v1986, %v1987
      %v1989 = vsel %vm1048, %v1948, 0.0
      %v1990 = vadd.f32 %v1988, %v1989
      %v1991 = vsel %vm1048, %v1949, 0.0
      %v1992 = vadd.f32 %v1990, %v1991
      %v1993 = vsel %vm1048, %v1950, 0.0
      %v1994 = vadd.f32 %v1992, %v1993
      %v1995 = vsel %vm1048, %v1951, 0.0
      %v1996 = vadd.f32 %v1994, %v1995
      %v1997 = vsel %vm1048, %v1952, 0.0
      %v1998 = vadd.f32 %v1996, %v1997
      %v1999 = vsel %vm1048, %v1953, 0.0
      %v2000 = vadd.f32 %v1998, %v1999
      %v2001 = vsel %vm1048, %v1954, 0.0
      %v2002 = vadd.f32 %v2000, %v2001
      %v2003 = vsel %vm1048, %v1955, 0.0
      %v2004 = vadd.f32 %v2002, %v2003
      %v2005 = vsel %vm1048, %v1956, 0.0
      %v2006 = vadd.f32 %v2004, %v2005
      %v2007 = vsel %vm1048, %v1957, 0.0
      %v2008 = vadd.f32 %v2006, %v2007
      %v2009 = vsel %vm1048, %v1958, 0.0
      %v2010 = vadd.f32 %v2008, %v2009
      %v2011 = vsel %vm1048, %v1959, 0.0
      %v2012 = vadd.f32 %v2010, %v2011
      %v2013 = vsel %vm1048, %v1960, 0.0
      %v2014 = vadd.f32 %v2012, %v2013
      %v2015 = vsel %vm1048, %v1961, 0.0
      %v2016 = vadd.f32 %v2014, %v2015
      %v2017 = vsel %vm1048, %v1962, 0.0
      %v2018 = vadd.f32 %v2016, %v2017
      %v2019 = vsel %vm1048, %v1963, 0.0
      %v2020 = vadd.f32 %v2018, %v2019
      %v2021 = vsel %vm1048, %v1964, 0.0
      %v2022 = vadd.f32 %v2020, %v2021
      %v2023 = vsel %vm1048, %v1965, 0.0
      %v2024 = vadd.f32 %v2022, %v2023
      %v2025 = vsel %vm1048, %v1966, 0.0
      %v2026 = vadd.f32 %v2024, %v2025
      %v2027 = vsel %vm1048, %v1967, 0.0
      %v2028 = vadd.f32 %v2026, %v2027
      %v2029 = vsel %vm1048, %v1968, 0.0
      %v2030 = vadd.f32 %v2028, %v2029
      %v2031 = vsel %vm1048, %v1969, 0.0
      %v2032 = vadd.f32 %v2030, %v2031
      %v2033 = vrot.slane %v2032, 4
      %v2034 = vadd.f32 %v2032, %v2033
      %v2035 = vrot.slane %v2034, 2
      %v2036 = vadd.f32 %v2034, %v2035
      %v2037 = vrot.slane %v2036, 1
      %v2038 = vadd.f32 %v2036, %v2037
      %v2039 = vadd.f32 %v1252, %v2038
      %2040 = vrot.lane.b32.xlu0 %v524, 8
      %v2041 = vpop.permute.xlu0 %2040
      %2042 = vrot.lane.b32.xlu0 %v526, 8
      %v2043 = vpop.permute.xlu0 %2042
      %2048 = vrot.lane.b32.xlu0 %v195, 16
      %v2049 = vpop.permute.xlu0 %2048
      %2050 = vrot.lane.b32.xlu0 %v196, 16
      %v2051 = vpop.permute.xlu0 %2050
      %v2055 = vrot.slane %v195, 1
      %v2056 = vrot.slane %v196, 1
      %v2057 = vsel %vm246, %v2055, %v2056
      %v2058 = vrot.slane %v197, 1
      %v2059 = vsel %vm246, %v2056, %v2058
      %2060 = vrot.lane.b32.xlu0 %v2057, 24
      %v2061 = vpop.permute.xlu0 %2060
      %2062 = vrot.lane.b32.xlu0 %v2059, 24
      %v2063 = vpop.permute.xlu0 %2062
      %v2066 = vsel %vm623, %v192, %v2041
      %v2067 = vsel %vm623, %v193, %v2043
      %v2068 = vsel %vm656, %v2066, %v2049
      %v2069 = vsel %vm656, %v2067, %v2051
      %v2070 = vsel %vm689, %v2068, %v2061
      %v2071 = vsel %vm689, %v2069, %v2063
      %s2072 = scalar_lea.vmem %s1, 64
      %v2073 = vld [vmem:[%s2072] sm:$0xff]
      %v2074 = vld [vmem:[%s2072 + $0x8] sm:$0xff]
      %v2075 = vld [vmem:[%s2072 + $0x10] sm:$0xff]
      %v2076 = vld [vmem:[%s2072 + $0x18] sm:$0xff]
      %v2078 = vsel %vm726, %v2070, 0
      %v2081 = vsel %vm726, %v2071, 0
      %2083 = vmatprep.subr.mxu0 0.0
      %2084 = vmatpush1.msra.mxu0 %v2073
      %2085 = vmatprep.subr.mxu0 0.0
      %2086 = vmatpush1.msra.mxu0 %v2074
      %2087 = vmatprep.subr.mxu0 0.0
      %2088 = vmatpush1.msra.mxu0 %v2075
      %2089 = vmatprep.subr.mxu0 0.0
      %2090 = vmatpush1.msra.mxu0 %v2076
      %2091 = vmatprep.subr.mxu0 0.0
      %2092 = vmatpush1.msra.mxu0 0.0
      %2093 = vmatprep.subr.mxu0 0.0
      %2094 = vmatpush1.msra.mxu0 0.0
      %2095 = vmatprep.subr.mxu0 0.0
      %2096 = vmatpush1.msra.mxu0 0.0
      %2097 = vmatprep.subr.mxu0 0.0
      %2098 = vmatpush1.msra.mxu0 0.0
      %2099 = vmatprep.subr.mxu0 0.0
      %2100 = vmatpush1.msra.mxu0 0.0
      %2101 = vmatprep.subr.mxu0 0.0
      %2102 = vmatpush1.msra.mxu0 0.0
      %2103 = vmatprep.subr.mxu0 0.0
      %2104 = vmatpush1.msra.mxu0 0.0
      %2105 = vmatprep.subr.mxu0 0.0
      %2106 = vmatpush1.msra.mxu0 0.0
      %2107 = vmatprep.subr.mxu0 0.0
      %2108 = vmatpush1.msra.mxu0 0.0
      %2109 = vmatprep.subr.mxu0 0.0
      %2110 = vmatpush1.msra.mxu0 0.0
      %2111 = vmatprep.subr.mxu0 0.0
      %2112 = vmatpush1.msra.mxu0 0.0
      %2113 = vmatprep.subr.mxu0 0.0
      %2114 = vmatpush1.msra.mxu0 0.0
      %2115 = vmatprep.subr.mxu0 0.0
      %2116 = vmatpush1.msra.mxu0 0.0
      %2117 = vmatprep.subr.mxu0 0.0
      %2118 = vmatpush1.msra.mxu0 0.0
      %2119 = vmatprep.subr.mxu0 0.0
      %2120 = vmatpush1.msra.mxu0 0.0
      %2121 = vmatprep.subr.mxu0 0.0
      %2122 = vmatpush1.msra.mxu0 0.0
      %2123 = vmatprep.subr.mxu0 0.0
      %2124 = vmatpush1.msra.mxu0 0.0
      %2125 = vmatprep.subr.mxu0 0.0
      %2126 = vmatpush1.msra.mxu0 0.0
      %2127 = vmatprep.subr.mxu0 0.0
      %2128 = vmatpush1.msra.mxu0 0.0
      %2129 = vmatprep.subr.mxu0 0.0
      %2130 = vmatpush1.msra.mxu0 0.0
      %2131 = vmatprep.subr.mxu0 0.0
      %2132 = vmatpush1.msra.mxu0 0.0
      %2133 = vmatprep.subr.mxu0 0.0
      %2134 = vmatpush1.msra.mxu0 0.0
      %2135 = vmatprep.subr.mxu0 0.0
      %2136 = vmatpush1.msra.mxu0 0.0
      %2137 = vmatprep.subr.mxu0 0.0
      %2138 = vmatpush1.msra.mxu0 0.0
      %2139 = vmatprep.subr.mxu0 0.0
      %2140 = vmatpush1.msra.mxu0 0.0
      %2141 = vmatprep.subr.mxu0 0.0
      %2142 = vmatpush1.msra.mxu0 0.0
      %2143 = vmatprep.subr.mxu0 0.0
      %2144 = vmatpush1.msra.mxu0 0.0
      %2145 = vmatprep.subr.mxu0 0.0
      %2146 = vmatpush1.msra.mxu0 0.0
      %2147 = vmatprep.mubr.f32.mxu0 0.0
      %2148 = vmatmul.mubr.f32.gmra.mrb[0].mxu0 %v734
      %v2149 = vpop.f32.mrb[0].mxu0
      %v2150 = vadd.f32 0.0, %v2149
      %v2151 = vpop.f32.mrb[0].mxu0
      %2152 = vmatprep.mubr.f32.mxu0 0.0
      %2153 = vmatmul.mubr.f32.gmra.mrb[0].mxu0 %v737
      %v2154 = vpop.f32.mrb[0].mxu0
      %v2155 = vadd.f32 0.0, %v2154
      %v2156 = vpop.f32.mrb[0].mxu0
      %2157 = vmatprep.mubr.f32.mxu0 0.0
      %2158 = vmatmul.mubr.f32.gmra.mrb[0].mxu0 %v740
      %v2159 = vpop.f32.mrb[0].mxu0
      %v2160 = vadd.f32 0.0, %v2159
      %v2161 = vpop.f32.mrb[0].mxu0
      %2162 = vmatprep.mubr.f32.mxu0 0.0
      %2163 = vmatmul.mubr.f32.gmra.mrb[0].mxu0 %v743
      %v2164 = vpop.f32.mrb[0].mxu0
      %v2165 = vadd.f32 0.0, %v2164
      %v2166 = vpop.f32.mrb[0].mxu0
      %2167 = vmatprep.mubr.f32.mxu0 0.0
      %2168 = vmatmul.mubr.f32.gmra.mrb[0].mxu0 %v746
      %v2169 = vpop.f32.mrb[0].mxu0
      %v2170 = vadd.f32 0.0, %v2169
      %v2171 = vpop.f32.mrb[0].mxu0
      %2172 = vmatprep.mubr.f32.mxu0 0.0
      %2173 = vmatmul.mubr.f32.gmra.mrb[0].mxu0 %v749
      %v2174 = vpop.f32.mrb[0].mxu0
      %v2175 = vadd.f32 0.0, %v2174
      %v2176 = vpop.f32.mrb[0].mxu0
      %2177 = vmatprep.mubr.f32.mxu0 0.0
      %2178 = vmatmul.mubr.f32.gmra.mrb[0].mxu0 %v752
      %v2179 = vpop.f32.mrb[0].mxu0
      %v2180 = vadd.f32 0.0, %v2179
      %v2181 = vpop.f32.mrb[0].mxu0
      %2182 = vmatprep.mubr.f32.mxu0 0.0
      %2183 = vmatmul.mubr.f32.gmra.mrb[0].mxu0 %v755
      %v2184 = vpop.f32.mrb[0].mxu0
      %v2185 = vadd.f32 0.0, %v2184
      %v2186 = vpop.f32.mrb[0].mxu0
      %2187 = vmatprep.mubr.f32.mxu0 0.0
      %2188 = vmatmul.mubr.f32.gmra.mrb[0].mxu0 %v758
      %v2189 = vpop.f32.mrb[0].mxu0
      %v2190 = vadd.f32 0.0, %v2189
      %v2191 = vpop.f32.mrb[0].mxu0
      %2192 = vmatprep.mubr.f32.mxu0 0.0
      %2193 = vmatmul.mubr.f32.gmra.mrb[0].mxu0 %v761
      %v2194 = vpop.f32.mrb[0].mxu0
      %v2195 = vadd.f32 0.0, %v2194
      %v2196 = vpop.f32.mrb[0].mxu0
      %2197 = vmatprep.mubr.f32.mxu0 0.0
      %2198 = vmatmul.mubr.f32.gmra.mrb[0].mxu0 %v764
      %v2199 = vpop.f32.mrb[0].mxu0
      %v2200 = vadd.f32 0.0, %v2199
      %v2201 = vpop.f32.mrb[0].mxu0
      %2202 = vmatprep.mubr.f32.mxu0 0.0
      %2203 = vmatmul.mubr.f32.gmra.mrb[0].mxu0 %v767
      %v2204 = vpop.f32.mrb[0].mxu0
      %v2205 = vadd.f32 0.0, %v2204
      %v2206 = vpop.f32.mrb[0].mxu0
      %2207 = vmatprep.mubr.f32.mxu0 0.0
      %2208 = vmatmul.mubr.f32.gmra.mrb[0].mxu0 %v770
      %v2209 = vpop.f32.mrb[0].mxu0
      %v2210 = vadd.f32 0.0, %v2209
      %v2211 = vpop.f32.mrb[0].mxu0
      %2212 = vmatprep.mubr.f32.mxu0 0.0
      %2213 = vmatmul.mubr.f32.gmra.mrb[0].mxu0 %v773
      %v2214 = vpop.f32.mrb[0].mxu0
      %v2215 = vadd.f32 0.0, %v2214
      %v2216 = vpop.f32.mrb[0].mxu0
      %2217 = vmatprep.mubr.f32.mxu0 0.0
      %2218 = vmatmul.mubr.f32.gmra.mrb[0].mxu0 %v776
      %v2219 = vpop.f32.mrb[0].mxu0
      %v2220 = vadd.f32 0.0, %v2219
      %v2221 = vpop.f32.mrb[0].mxu0
      %2222 = vmatprep.mubr.f32.mxu0 0.0
      %2223 = vmatmul.mubr.f32.gmra.mrb[0].mxu0 %v779
      %v2224 = vpop.f32.mrb[0].mxu0
      %v2225 = vadd.f32 0.0, %v2224
      %v2226 = vpop.f32.mrb[0].mxu0
      %2227 = vmatprep.mubr.f32.mxu0 0.0
      %2228 = vmatmul.mubr.f32.gmra.mrb[0].mxu0 %v782
      %v2229 = vpop.f32.mrb[0].mxu0
      %v2230 = vadd.f32 0.0, %v2229
      %v2231 = vpop.f32.mrb[0].mxu0
      %2232 = vmatprep.mubr.f32.mxu0 0.0
      %2233 = vmatmul.mubr.f32.gmra.mrb[0].mxu0 %v785
      %v2234 = vpop.f32.mrb[0].mxu0
      %v2235 = vadd.f32 0.0, %v2234
      %v2236 = vpop.f32.mrb[0].mxu0
      %2237 = vmatprep.mubr.f32.mxu0 0.0
      %2238 = vmatmul.mubr.f32.gmra.mrb[0].mxu0 %v788
      %v2239 = vpop.f32.mrb[0].mxu0
      %v2240 = vadd.f32 0.0, %v2239
      %v2241 = vpop.f32.mrb[0].mxu0
      %2242 = vmatprep.mubr.f32.mxu0 0.0
      %2243 = vmatmul.mubr.f32.gmra.mrb[0].mxu0 %v791
      %v2244 = vpop.f32.mrb[0].mxu0
      %v2245 = vadd.f32 0.0, %v2244
      %v2246 = vpop.f32.mrb[0].mxu0
      %2247 = vmatprep.mubr.f32.mxu0 0.0
      %2248 = vmatmul.mubr.f32.gmra.mrb[0].mxu0 %v794
      %v2249 = vpop.f32.mrb[0].mxu0
      %v2250 = vadd.f32 0.0, %v2249
      %v2251 = vpop.f32.mrb[0].mxu0
      %2252 = vmatprep.mubr.f32.mxu0 0.0
      %2253 = vmatmul.mubr.f32.gmra.mrb[0].mxu0 %v797
      %v2254 = vpop.f32.mrb[0].mxu0
      %v2255 = vadd.f32 0.0, %v2254
      %v2256 = vpop.f32.mrb[0].mxu0
      %2257 = vmatprep.mubr.f32.mxu0 0.0
      %2258 = vmatmul.mubr.f32.gmra.mrb[0].mxu0 %v800
      %v2259 = vpop.f32.mrb[0].mxu0
      %v2260 = vadd.f32 0.0, %v2259
      %v2261 = vpop.f32.mrb[0].mxu0
      %2262 = vmatprep.mubr.f32.mxu0 0.0
      %2263 = vmatmul.mubr.f32.gmra.mrb[0].mxu0 %v803
      %v2264 = vpop.f32.mrb[0].mxu0
      %v2265 = vadd.f32 0.0, %v2264
      %v2266 = vpop.f32.mrb[0].mxu0
      %2267 = vmatprep.mubr.f32.mxu0 0.0
      %2268 = vmatmul.mubr.f32.gmra.mrb[0].mxu0 %v806
      %v2269 = vpop.f32.mrb[0].mxu0
      %v2270 = vadd.f32 0.0, %v2269
      %v2271 = vpop.f32.mrb[0].mxu0
      %2272 = vmatprep.mubr.f32.mxu0 0.0
      %2273 = vmatmul.mubr.f32.gmra.mrb[0].mxu0 %v809
      %v2274 = vpop.f32.mrb[0].mxu0
      %v2275 = vadd.f32 0.0, %v2274
      %v2276 = vpop.f32.mrb[0].mxu0
      %2277 = vmatprep.mubr.f32.mxu0 0.0
      %2278 = vmatmul.mubr.f32.gmra.mrb[0].mxu0 %v812
      %v2279 = vpop.f32.mrb[0].mxu0
      %v2280 = vadd.f32 0.0, %v2279
      %v2281 = vpop.f32.mrb[0].mxu0
      %2282 = vmatprep.mubr.f32.mxu0 0.0
      %2283 = vmatmul.mubr.f32.gmra.mrb[0].mxu0 %v815
      %v2284 = vpop.f32.mrb[0].mxu0
      %v2285 = vadd.f32 0.0, %v2284
      %v2286 = vpop.f32.mrb[0].mxu0
      %2287 = vmatprep.mubr.f32.mxu0 0.0
      %2288 = vmatmul.mubr.f32.gmra.mrb[0].mxu0 %v818
      %v2289 = vpop.f32.mrb[0].mxu0
      %v2290 = vadd.f32 0.0, %v2289
      %v2291 = vpop.f32.mrb[0].mxu0
      %2292 = vmatprep.mubr.f32.mxu0 0.0
      %2293 = vmatmul.mubr.f32.gmra.mrb[0].mxu0 %v821
      %v2294 = vpop.f32.mrb[0].mxu0
      %v2295 = vadd.f32 0.0, %v2294
      %v2296 = vpop.f32.mrb[0].mxu0
      %2297 = vmatprep.mubr.f32.mxu0 0.0
      %2298 = vmatmul.mubr.f32.gmra.mrb[0].mxu0 %v2078
      %v2299 = vpop.f32.mrb[0].mxu0
      %v2300 = vadd.f32 0.0, %v2299
      %v2301 = vpop.f32.mrb[0].mxu0
      %2302 = vmatprep.mubr.f32.mxu0 0.0
      %2303 = vmatmul.mubr.f32.gmra.mrb[0].mxu0 %v2081
      %v2304 = vpop.f32.mrb[0].mxu0
      %v2305 = vadd.f32 0.0, %v2304
      %v2306 = vpop.f32.mrb[0].mxu0
      %2307 = vdwg.mxu0
      %s2308 = scalar_lea.vmem [#allocation2], 512
      %2309 = vst.msk [vmem:[%s2308] sm:$0xff] %vm1048, %v2150
      %2310 = vst.msk [vmem:[%s2308 + $0x8] sm:$0xff] %vm1048, %v2155
      %2311 = vst.msk [vmem:[%s2308 + $0x10] sm:$0xff] %vm1048, %v2160
      %2312 = vst.msk [vmem:[%s2308 + $0x18] sm:$0xff] %vm1048, %v2165
      %2313 = vst.msk [vmem:[%s2308 + $0x20] sm:$0xff] %vm1048, %v2170
      %2314 = vst.msk [vmem:[%s2308 + $0x28] sm:$0xff] %vm1048, %v2175
      %2315 = vst.msk [vmem:[%s2308 + $0x30] sm:$0xff] %vm1048, %v2180
      %2316 = vst.msk [vmem:[%s2308 + $0x38] sm:$0xff] %vm1048, %v2185
      %2317 = vst.msk [vmem:[%s2308 + $0x40] sm:$0xff] %vm1048, %v2190
      %2318 = vst.msk [vmem:[%s2308 + $0x48] sm:$0xff] %vm1048, %v2195
      %2319 = vst.msk [vmem:[%s2308 + $0x50] sm:$0xff] %vm1048, %v2200
      %2320 = vst.msk [vmem:[%s2308 + $0x58] sm:$0xff] %vm1048, %v2205
      %2321 = vst.msk [vmem:[%s2308 + $0x60] sm:$0xff] %vm1048, %v2210
      %2322 = vst.msk [vmem:[%s2308 + $0x68] sm:$0xff] %vm1048, %v2215
      %2323 = vst.msk [vmem:[%s2308 + $0x70] sm:$0xff] %vm1048, %v2220
      %2324 = vst.msk [vmem:[%s2308 + $0x78] sm:$0xff] %vm1048, %v2225
      %2325 = vst.msk [vmem:[%s2308 + $0x80] sm:$0xff] %vm1048, %v2230
      %2326 = vst.msk [vmem:[%s2308 + $0x88] sm:$0xff] %vm1048, %v2235
      %2327 = vst.msk [vmem:[%s2308 + $0x90] sm:$0xff] %vm1048, %v2240
      %2328 = vst.msk [vmem:[%s2308 + $0x98] sm:$0xff] %vm1048, %v2245
      %2329 = vst.msk [vmem:[%s2308 + $0xa0] sm:$0xff] %vm1048, %v2250
      %2330 = vst.msk [vmem:[%s2308 + $0xa8] sm:$0xff] %vm1048, %v2255
      %2331 = vst.msk [vmem:[%s2308 + $0xb0] sm:$0xff] %vm1048, %v2260
      %2332 = vst.msk [vmem:[%s2308 + $0xb8] sm:$0xff] %vm1048, %v2265
      %2333 = vst.msk [vmem:[%s2308 + $0xc0] sm:$0xff] %vm1048, %v2270
      %2334 = vst.msk [vmem:[%s2308 + $0xc8] sm:$0xff] %vm1048, %v2275
      %2335 = vst.msk [vmem:[%s2308 + $0xd0] sm:$0xff] %vm1048, %v2280
      %2336 = vst.msk [vmem:[%s2308 + $0xd8] sm:$0xff] %vm1048, %v2285
      %2337 = vst.msk [vmem:[%s2308 + $0xe0] sm:$0xff] %vm1048, %v2290
      %2338 = vst.msk [vmem:[%s2308 + $0xe8] sm:$0xff] %vm1048, %v2295
      %2339 = vst.msk [vmem:[%s2308 + $0xf0] sm:$0xff] %vm1048, %v2300
      %2340 = vst.msk [vmem:[%s2308 + $0xf8] sm:$0xff] %vm1048, %v2305
      %v2341 = vsel %vm1048, %v2150, 0.0
      %v2342 = vsel %vm1048, %v2155, 0.0
      %v2343 = vadd.f32 %v2341, %v2342
      %v2344 = vsel %vm1048, %v2160, 0.0
      %v2345 = vadd.f32 %v2343, %v2344
      %v2346 = vsel %vm1048, %v2165, 0.0
      %v2347 = vadd.f32 %v2345, %v2346
      %v2348 = vsel %vm1048, %v2170, 0.0
      %v2349 = vadd.f32 %v2347, %v2348
      %v2350 = vsel %vm1048, %v2175, 0.0
      %v2351 = vadd.f32 %v2349, %v2350
      %v2352 = vsel %vm1048, %v2180, 0.0
      %v2353 = vadd.f32 %v2351, %v2352
      %v2354 = vsel %vm1048, %v2185, 0.0
      %v2355 = vadd.f32 %v2353, %v2354
      %v2356 = vsel %vm1048, %v2190, 0.0
      %v2357 = vadd.f32 %v2355, %v2356
      %v2358 = vsel %vm1048, %v2195, 0.0
      %v2359 = vadd.f32 %v2357, %v2358
      %v2360 = vsel %vm1048, %v2200, 0.0
      %v2361 = vadd.f32 %v2359, %v2360
      %v2362 = vsel %vm1048, %v2205, 0.0
      %v2363 = vadd.f32 %v2361, %v2362
      %v2364 = vsel %vm1048, %v2210, 0.0
      %v2365 = vadd.f32 %v2363, %v2364
      %v2366 = vsel %vm1048, %v2215, 0.0
      %v2367 = vadd.f32 %v2365, %v2366
      %v2368 = vsel %vm1048, %v2220, 0.0
      %v2369 = vadd.f32 %v2367, %v2368
      %v2370 = vsel %vm1048, %v2225, 0.0
      %v2371 = vadd.f32 %v2369, %v2370
      %v2372 = vsel %vm1048, %v2230, 0.0
      %v2373 = vadd.f32 %v2371, %v2372
      %v2374 = vsel %vm1048, %v2235, 0.0
      %v2375 = vadd.f32 %v2373, %v2374
      %v2376 = vsel %vm1048, %v2240, 0.0
      %v2377 = vadd.f32 %v2375, %v2376
      %v2378 = vsel %vm1048, %v2245, 0.0
      %v2379 = vadd.f32 %v2377, %v2378
      %v2380 = vsel %vm1048, %v2250, 0.0
      %v2381 = vadd.f32 %v2379, %v2380
      %v2382 = vsel %vm1048, %v2255, 0.0
      %v2383 = vadd.f32 %v2381, %v2382
      %v2384 = vsel %vm1048, %v2260, 0.0
      %v2385 = vadd.f32 %v2383, %v2384
      %v2386 = vsel %vm1048, %v2265, 0.0
      %v2387 = vadd.f32 %v2385, %v2386
      %v2388 = vsel %vm1048, %v2270, 0.0
      %v2389 = vadd.f32 %v2387, %v2388
      %v2390 = vsel %vm1048, %v2275, 0.0
      %v2391 = vadd.f32 %v2389, %v2390
      %v2392 = vsel %vm1048, %v2280, 0.0
      %v2393 = vadd.f32 %v2391, %v2392
      %v2394 = vsel %vm1048, %v2285, 0.0
      %v2395 = vadd.f32 %v2393, %v2394
      %v2396 = vsel %vm1048, %v2290, 0.0
      %v2397 = vadd.f32 %v2395, %v2396
      %v2398 = vsel %vm1048, %v2295, 0.0
      %v2399 = vadd.f32 %v2397, %v2398
      %v2400 = vsel %vm1048, %v2300, 0.0
      %v2401 = vadd.f32 %v2399, %v2400
      %v2402 = vsel %vm1048, %v2305, 0.0
      %v2403 = vadd.f32 %v2401, %v2402
      %v2404 = vrot.slane %v2403, 4
      %v2405 = vadd.f32 %v2403, %v2404
      %v2406 = vrot.slane %v2405, 2
      %v2407 = vadd.f32 %v2405, %v2406
      %v2408 = vrot.slane %v2407, 1
      %v2409 = vadd.f32 %v2407, %v2408
      %v2410 = vadd.f32 %v1937, %v2409
      %v2411 = vmul.f32 %v2150, %v2150
      %v2412 = vmul.f32 %v2155, %v2155
      %v2413 = vmul.f32 %v2160, %v2160
      %v2414 = vmul.f32 %v2165, %v2165
      %v2415 = vmul.f32 %v2170, %v2170
      %v2416 = vmul.f32 %v2175, %v2175
      %v2417 = vmul.f32 %v2180, %v2180
      %v2418 = vmul.f32 %v2185, %v2185
      %v2419 = vmul.f32 %v2190, %v2190
      %v2420 = vmul.f32 %v2195, %v2195
      %v2421 = vmul.f32 %v2200, %v2200
      %v2422 = vmul.f32 %v2205, %v2205
      %v2423 = vmul.f32 %v2210, %v2210
      %v2424 = vmul.f32 %v2215, %v2215
      %v2425 = vmul.f32 %v2220, %v2220
      %v2426 = vmul.f32 %v2225, %v2225
      %v2427 = vmul.f32 %v2230, %v2230
      %v2428 = vmul.f32 %v2235, %v2235
      %v2429 = vmul.f32 %v2240, %v2240
      %v2430 = vmul.f32 %v2245, %v2245
      %v2431 = vmul.f32 %v2250, %v2250
      %v2432 = vmul.f32 %v2255, %v2255
      %v2433 = vmul.f32 %v2260, %v2260
      %v2434 = vmul.f32 %v2265, %v2265
      %v2435 = vmul.f32 %v2270, %v2270
      %v2436 = vmul.f32 %v2275, %v2275
      %v2437 = vmul.f32 %v2280, %v2280
      %v2438 = vmul.f32 %v2285, %v2285
      %v2439 = vmul.f32 %v2290, %v2290
      %v2440 = vmul.f32 %v2295, %v2295
      %v2441 = vmul.f32 %v2300, %v2300
      %v2442 = vmul.f32 %v2305, %v2305
      %v2443 = vsel %vm1048, %v2411, 0.0
      %v2444 = vsel %vm1048, %v2412, 0.0
      %v2445 = vadd.f32 %v2443, %v2444
      %v2446 = vsel %vm1048, %v2413, 0.0
      %v2447 = vadd.f32 %v2445, %v2446
      %v2448 = vsel %vm1048, %v2414, 0.0
      %v2449 = vadd.f32 %v2447, %v2448
      %v2450 = vsel %vm1048, %v2415, 0.0
      %v2451 = vadd.f32 %v2449, %v2450
      %v2452 = vsel %vm1048, %v2416, 0.0
      %v2453 = vadd.f32 %v2451, %v2452
      %v2454 = vsel %vm1048, %v2417, 0.0
      %v2455 = vadd.f32 %v2453, %v2454
      %v2456 = vsel %vm1048, %v2418, 0.0
      %v2457 = vadd.f32 %v2455, %v2456
      %v2458 = vsel %vm1048, %v2419, 0.0
      %v2459 = vadd.f32 %v2457, %v2458
      %v2460 = vsel %vm1048, %v2420, 0.0
      %v2461 = vadd.f32 %v2459, %v2460
      %v2462 = vsel %vm1048, %v2421, 0.0
      %v2463 = vadd.f32 %v2461, %v2462
      %v2464 = vsel %vm1048, %v2422, 0.0
      %v2465 = vadd.f32 %v2463, %v2464
      %v2466 = vsel %vm1048, %v2423, 0.0
      %v2467 = vadd.f32 %v2465, %v2466
      %v2468 = vsel %vm1048, %v2424, 0.0
      %v2469 = vadd.f32 %v2467, %v2468
      %v2470 = vsel %vm1048, %v2425, 0.0
      %v2471 = vadd.f32 %v2469, %v2470
      %v2472 = vsel %vm1048, %v2426, 0.0
      %v2473 = vadd.f32 %v2471, %v2472
      %v2474 = vsel %vm1048, %v2427, 0.0
      %v2475 = vadd.f32 %v2473, %v2474
      %v2476 = vsel %vm1048, %v2428, 0.0
      %v2477 = vadd.f32 %v2475, %v2476
      %v2478 = vsel %vm1048, %v2429, 0.0
      %v2479 = vadd.f32 %v2477, %v2478
      %v2480 = vsel %vm1048, %v2430, 0.0
      %v2481 = vadd.f32 %v2479, %v2480
      %v2482 = vsel %vm1048, %v2431, 0.0
      %v2483 = vadd.f32 %v2481, %v2482
      %v2484 = vsel %vm1048, %v2432, 0.0
      %v2485 = vadd.f32 %v2483, %v2484
      %v2486 = vsel %vm1048, %v2433, 0.0
      %v2487 = vadd.f32 %v2485, %v2486
      %v2488 = vsel %vm1048, %v2434, 0.0
      %v2489 = vadd.f32 %v2487, %v2488
      %v2490 = vsel %vm1048, %v2435, 0.0
      %v2491 = vadd.f32 %v2489, %v2490
      %v2492 = vsel %vm1048, %v2436, 0.0
      %v2493 = vadd.f32 %v2491, %v2492
      %v2494 = vsel %vm1048, %v2437, 0.0
      %v2495 = vadd.f32 %v2493, %v2494
      %v2496 = vsel %vm1048, %v2438, 0.0
      %v2497 = vadd.f32 %v2495, %v2496
      %v2498 = vsel %vm1048, %v2439, 0.0
      %v2499 = vadd.f32 %v2497, %v2498
      %v2500 = vsel %vm1048, %v2440, 0.0
      %v2501 = vadd.f32 %v2499, %v2500
      %v2502 = vsel %vm1048, %v2441, 0.0
      %v2503 = vadd.f32 %v2501, %v2502
      %v2504 = vsel %vm1048, %v2442, 0.0
      %v2505 = vadd.f32 %v2503, %v2504
      %v2506 = vrot.slane %v2505, 4
      %v2507 = vadd.f32 %v2505, %v2506
      %v2508 = vrot.slane %v2507, 2
      %v2509 = vadd.f32 %v2507, %v2508
      %v2510 = vrot.slane %v2509, 1
      %v2511 = vadd.f32 %v2509, %v2510
      %v2512 = vadd.f32 %v2039, %v2511
      %2513 = vrot.lane.b32.xlu0 %v525, 8
      %v2514 = vpop.permute.xlu0 %2513
      %2516 = vrot.lane.b32.xlu0 %v197, 16
      %v2517 = vpop.permute.xlu0 %2516
      %2519 = vrot.lane.b32.xlu0 %v2058, 24
      %v2520 = vpop.permute.xlu0 %2519
      %v2522 = vsel %vm623, %v194, %v2514
      %v2523 = vsel %vm656, %v2522, %v2517
      %v2524 = vsel %vm689, %v2523, %v2520
      %v2526 = vrot.slane %v2070, 1
      %v2527 = vrot.slane %v2071, 1
      %v2528 = vsel %vm246, %v2526, %v2527
      %v2529 = vrot.slane %v2524, 1
      %v2530 = vsel %vm246, %v2527, %v2529
      %s2531 = scalar_lea.vmem %s1, 96
      %v2532 = vld [vmem:[%s2531] sm:$0xff]
      %v2533 = vld [vmem:[%s2531 + $0x8] sm:$0xff]
      %v2534 = vld [vmem:[%s2531 + $0x10] sm:$0xff]
      %v2535 = vld [vmem:[%s2531 + $0x18] sm:$0xff]
      %v2536 = vsel %vm726, %v2528, 0
      %v2538 = vsel %vm726, %v2530, 0
      %2540 = vmatprep.subr.mxu0 0.0
      %2541 = vmatpush1.msra.mxu0 %v2532
      %2542 = vmatprep.subr.mxu0 0.0
      %2543 = vmatpush1.msra.mxu0 %v2533
      %2544 = vmatprep.subr.mxu0 0.0
      %2545 = vmatpush1.msra.mxu0 %v2534
      %2546 = vmatprep.subr.mxu0 0.0
      %2547 = vmatpush1.msra.mxu0 %v2535
      %2548 = vmatprep.subr.mxu0 0.0
      %2549 = vmatpush1.msra.mxu0 0.0
      %2550 = vmatprep.subr.mxu0 0.0
      %2551 = vmatpush1.msra.mxu0 0.0
      %2552 = vmatprep.subr.mxu0 0.0
      %2553 = vmatpush1.msra.mxu0 0.0
      %2554 = vmatprep.subr.mxu0 0.0
      %2555 = vmatpush1.msra.mxu0 0.0
      %2556 = vmatprep.subr.mxu0 0.0
      %2557 = vmatpush1.msra.mxu0 0.0
      %2558 = vmatprep.subr.mxu0 0.0
      %2559 = vmatpush1.msra.mxu0 0.0
      %2560 = vmatprep.subr.mxu0 0.0
      %2561 = vmatpush1.msra.mxu0 0.0
      %2562 = vmatprep.subr.mxu0 0.0
      %2563 = vmatpush1.msra.mxu0 0.0
      %2564 = vmatprep.subr.mxu0 0.0
      %2565 = vmatpush1.msra.mxu0 0.0
      %2566 = vmatprep.subr.mxu0 0.0
      %2567 = vmatpush1.msra.mxu0 0.0
      %2568 = vmatprep.subr.mxu0 0.0
      %2569 = vmatpush1.msra.mxu0 0.0
      %2570 = vmatprep.subr.mxu0 0.0
      %2571 = vmatpush1.msra.mxu0 0.0
      %2572 = vmatprep.subr.mxu0 0.0
      %2573 = vmatpush1.msra.mxu0 0.0
      %2574 = vmatprep.subr.mxu0 0.0
      %2575 = vmatpush1.msra.mxu0 0.0
      %2576 = vmatprep.subr.mxu0 0.0
      %2577 = vmatpush1.msra.mxu0 0.0
      %2578 = vmatprep.subr.mxu0 0.0
      %2579 = vmatpush1.msra.mxu0 0.0
      %2580 = vmatprep.subr.mxu0 0.0
      %2581 = vmatpush1.msra.mxu0 0.0
      %2582 = vmatprep.subr.mxu0 0.0
      %2583 = vmatpush1.msra.mxu0 0.0
      %2584 = vmatprep.subr.mxu0 0.0
      %2585 = vmatpush1.msra.mxu0 0.0
      %2586 = vmatprep.subr.mxu0 0.0
      %2587 = vmatpush1.msra.mxu0 0.0
      %2588 = vmatprep.subr.mxu0 0.0
      %2589 = vmatpush1.msra.mxu0 0.0
      %2590 = vmatprep.subr.mxu0 0.0
      %2591 = vmatpush1.msra.mxu0 0.0
      %2592 = vmatprep.subr.mxu0 0.0
      %2593 = vmatpush1.msra.mxu0 0.0
      %2594 = vmatprep.subr.mxu0 0.0
      %2595 = vmatpush1.msra.mxu0 0.0
      %2596 = vmatprep.subr.mxu0 0.0
      %2597 = vmatpush1.msra.mxu0 0.0
      %2598 = vmatprep.subr.mxu0 0.0
      %2599 = vmatpush1.msra.mxu0 0.0
      %2600 = vmatprep.subr.mxu0 0.0
      %2601 = vmatpush1.msra.mxu0 0.0
      %2602 = vmatprep.subr.mxu0 0.0
      %2603 = vmatpush1.msra.mxu0 0.0
      %2604 = vmatprep.mubr.f32.mxu0 0.0
      %2605 = vmatmul.mubr.f32.gmra.mrb[0].mxu0 %v1550
      %v2606 = vpop.f32.mrb[0].mxu0
      %v2607 = vadd.f32 0.0, %v2606
      %v2608 = vpop.f32.mrb[0].mxu0
      %2609 = vmatprep.mubr.f32.mxu0 0.0
      %2610 = vmatmul.mubr.f32.gmra.mrb[0].mxu0 %v1552
      %v2611 = vpop.f32.mrb[0].mxu0
      %v2612 = vadd.f32 0.0, %v2611
      %v2613 = vpop.f32.mrb[0].mxu0
      %2614 = vmatprep.mubr.f32.mxu0 0.0
      %2615 = vmatmul.mubr.f32.gmra.mrb[0].mxu0 %v1554
      %v2616 = vpop.f32.mrb[0].mxu0
      %v2617 = vadd.f32 0.0, %v2616
      %v2618 = vpop.f32.mrb[0].mxu0
      %2619 = vmatprep.mubr.f32.mxu0 0.0
      %2620 = vmatmul.mubr.f32.gmra.mrb[0].mxu0 %v1556
      %v2621 = vpop.f32.mrb[0].mxu0
      %v2622 = vadd.f32 0.0, %v2621
      %v2623 = vpop.f32.mrb[0].mxu0
      %2624 = vmatprep.mubr.f32.mxu0 0.0
      %2625 = vmatmul.mubr.f32.gmra.mrb[0].mxu0 %v1558
      %v2626 = vpop.f32.mrb[0].mxu0
      %v2627 = vadd.f32 0.0, %v2626
      %v2628 = vpop.f32.mrb[0].mxu0
      %2629 = vmatprep.mubr.f32.mxu0 0.0
      %2630 = vmatmul.mubr.f32.gmra.mrb[0].mxu0 %v1560
      %v2631 = vpop.f32.mrb[0].mxu0
      %v2632 = vadd.f32 0.0, %v2631
      %v2633 = vpop.f32.mrb[0].mxu0
      %2634 = vmatprep.mubr.f32.mxu0 0.0
      %2635 = vmatmul.mubr.f32.gmra.mrb[0].mxu0 %v1562
      %v2636 = vpop.f32.mrb[0].mxu0
      %v2637 = vadd.f32 0.0, %v2636
      %v2638 = vpop.f32.mrb[0].mxu0
      %2639 = vmatprep.mubr.f32.mxu0 0.0
      %2640 = vmatmul.mubr.f32.gmra.mrb[0].mxu0 %v1564
      %v2641 = vpop.f32.mrb[0].mxu0
      %v2642 = vadd.f32 0.0, %v2641
      %v2643 = vpop.f32.mrb[0].mxu0
      %2644 = vmatprep.mubr.f32.mxu0 0.0
      %2645 = vmatmul.mubr.f32.gmra.mrb[0].mxu0 %v1566
      %v2646 = vpop.f32.mrb[0].mxu0
      %v2647 = vadd.f32 0.0, %v2646
      %v2648 = vpop.f32.mrb[0].mxu0
      %2649 = vmatprep.mubr.f32.mxu0 0.0
      %2650 = vmatmul.mubr.f32.gmra.mrb[0].mxu0 %v1568
      %v2651 = vpop.f32.mrb[0].mxu0
      %v2652 = vadd.f32 0.0, %v2651
      %v2653 = vpop.f32.mrb[0].mxu0
      %2654 = vmatprep.mubr.f32.mxu0 0.0
      %2655 = vmatmul.mubr.f32.gmra.mrb[0].mxu0 %v1570
      %v2656 = vpop.f32.mrb[0].mxu0
      %v2657 = vadd.f32 0.0, %v2656
      %v2658 = vpop.f32.mrb[0].mxu0
      %2659 = vmatprep.mubr.f32.mxu0 0.0
      %2660 = vmatmul.mubr.f32.gmra.mrb[0].mxu0 %v1572
      %v2661 = vpop.f32.mrb[0].mxu0
      %v2662 = vadd.f32 0.0, %v2661
      %v2663 = vpop.f32.mrb[0].mxu0
      %2664 = vmatprep.mubr.f32.mxu0 0.0
      %2665 = vmatmul.mubr.f32.gmra.mrb[0].mxu0 %v1574
      %v2666 = vpop.f32.mrb[0].mxu0
      %v2667 = vadd.f32 0.0, %v2666
      %v2668 = vpop.f32.mrb[0].mxu0
      %2669 = vmatprep.mubr.f32.mxu0 0.0
      %2670 = vmatmul.mubr.f32.gmra.mrb[0].mxu0 %v1576
      %v2671 = vpop.f32.mrb[0].mxu0
      %v2672 = vadd.f32 0.0, %v2671
      %v2673 = vpop.f32.mrb[0].mxu0
      %2674 = vmatprep.mubr.f32.mxu0 0.0
      %2675 = vmatmul.mubr.f32.gmra.mrb[0].mxu0 %v1578
      %v2676 = vpop.f32.mrb[0].mxu0
      %v2677 = vadd.f32 0.0, %v2676
      %v2678 = vpop.f32.mrb[0].mxu0
      %2679 = vmatprep.mubr.f32.mxu0 0.0
      %2680 = vmatmul.mubr.f32.gmra.mrb[0].mxu0 %v1580
      %v2681 = vpop.f32.mrb[0].mxu0
      %v2682 = vadd.f32 0.0, %v2681
      %v2683 = vpop.f32.mrb[0].mxu0
      %2684 = vmatprep.mubr.f32.mxu0 0.0
      %2685 = vmatmul.mubr.f32.gmra.mrb[0].mxu0 %v1582
      %v2686 = vpop.f32.mrb[0].mxu0
      %v2687 = vadd.f32 0.0, %v2686
      %v2688 = vpop.f32.mrb[0].mxu0
      %2689 = vmatprep.mubr.f32.mxu0 0.0
      %2690 = vmatmul.mubr.f32.gmra.mrb[0].mxu0 %v1584
      %v2691 = vpop.f32.mrb[0].mxu0
      %v2692 = vadd.f32 0.0, %v2691
      %v2693 = vpop.f32.mrb[0].mxu0
      %2694 = vmatprep.mubr.f32.mxu0 0.0
      %2695 = vmatmul.mubr.f32.gmra.mrb[0].mxu0 %v1586
      %v2696 = vpop.f32.mrb[0].mxu0
      %v2697 = vadd.f32 0.0, %v2696
      %v2698 = vpop.f32.mrb[0].mxu0
      %2699 = vmatprep.mubr.f32.mxu0 0.0
      %2700 = vmatmul.mubr.f32.gmra.mrb[0].mxu0 %v1588
      %v2701 = vpop.f32.mrb[0].mxu0
      %v2702 = vadd.f32 0.0, %v2701
      %v2703 = vpop.f32.mrb[0].mxu0
      %2704 = vmatprep.mubr.f32.mxu0 0.0
      %2705 = vmatmul.mubr.f32.gmra.mrb[0].mxu0 %v1590
      %v2706 = vpop.f32.mrb[0].mxu0
      %v2707 = vadd.f32 0.0, %v2706
      %v2708 = vpop.f32.mrb[0].mxu0
      %2709 = vmatprep.mubr.f32.mxu0 0.0
      %2710 = vmatmul.mubr.f32.gmra.mrb[0].mxu0 %v1592
      %v2711 = vpop.f32.mrb[0].mxu0
      %v2712 = vadd.f32 0.0, %v2711
      %v2713 = vpop.f32.mrb[0].mxu0
      %2714 = vmatprep.mubr.f32.mxu0 0.0
      %2715 = vmatmul.mubr.f32.gmra.mrb[0].mxu0 %v1594
      %v2716 = vpop.f32.mrb[0].mxu0
      %v2717 = vadd.f32 0.0, %v2716
      %v2718 = vpop.f32.mrb[0].mxu0
      %2719 = vmatprep.mubr.f32.mxu0 0.0
      %2720 = vmatmul.mubr.f32.gmra.mrb[0].mxu0 %v1596
      %v2721 = vpop.f32.mrb[0].mxu0
      %v2722 = vadd.f32 0.0, %v2721
      %v2723 = vpop.f32.mrb[0].mxu0
      %2724 = vmatprep.mubr.f32.mxu0 0.0
      %2725 = vmatmul.mubr.f32.gmra.mrb[0].mxu0 %v1598
      %v2726 = vpop.f32.mrb[0].mxu0
      %v2727 = vadd.f32 0.0, %v2726
      %v2728 = vpop.f32.mrb[0].mxu0
      %2729 = vmatprep.mubr.f32.mxu0 0.0
      %2730 = vmatmul.mubr.f32.gmra.mrb[0].mxu0 %v1600
      %v2731 = vpop.f32.mrb[0].mxu0
      %v2732 = vadd.f32 0.0, %v2731
      %v2733 = vpop.f32.mrb[0].mxu0
      %2734 = vmatprep.mubr.f32.mxu0 0.0
      %2735 = vmatmul.mubr.f32.gmra.mrb[0].mxu0 %v1602
      %v2736 = vpop.f32.mrb[0].mxu0
      %v2737 = vadd.f32 0.0, %v2736
      %v2738 = vpop.f32.mrb[0].mxu0
      %2739 = vmatprep.mubr.f32.mxu0 0.0
      %2740 = vmatmul.mubr.f32.gmra.mrb[0].mxu0 %v1604
      %v2741 = vpop.f32.mrb[0].mxu0
      %v2742 = vadd.f32 0.0, %v2741
      %v2743 = vpop.f32.mrb[0].mxu0
      %2744 = vmatprep.mubr.f32.mxu0 0.0
      %2745 = vmatmul.mubr.f32.gmra.mrb[0].mxu0 %v1606
      %v2746 = vpop.f32.mrb[0].mxu0
      %v2747 = vadd.f32 0.0, %v2746
      %v2748 = vpop.f32.mrb[0].mxu0
      %2749 = vmatprep.mubr.f32.mxu0 0.0
      %2750 = vmatmul.mubr.f32.gmra.mrb[0].mxu0 %v1608
      %v2751 = vpop.f32.mrb[0].mxu0
      %v2752 = vadd.f32 0.0, %v2751
      %v2753 = vpop.f32.mrb[0].mxu0
      %2754 = vmatprep.mubr.f32.mxu0 0.0
      %2755 = vmatmul.mubr.f32.gmra.mrb[0].mxu0 %v2536
      %v2756 = vpop.f32.mrb[0].mxu0
      %v2757 = vadd.f32 0.0, %v2756
      %v2758 = vpop.f32.mrb[0].mxu0
      %2759 = vmatprep.mubr.f32.mxu0 0.0
      %2760 = vmatmul.mubr.f32.gmra.mrb[0].mxu0 %v2538
      %v2761 = vpop.f32.mrb[0].mxu0
      %v2762 = vadd.f32 0.0, %v2761
      %v2763 = vpop.f32.mrb[0].mxu0
      %2764 = vdwg.mxu0
      %s2765 = scalar_lea.vmem [#allocation2], 768
      %2766 = vst.msk [vmem:[%s2765] sm:$0xff] %vm1048, %v2607
      %2767 = vst.msk [vmem:[%s2765 + $0x8] sm:$0xff] %vm1048, %v2612
      %2768 = vst.msk [vmem:[%s2765 + $0x10] sm:$0xff] %vm1048, %v2617
      %2769 = vst.msk [vmem:[%s2765 + $0x18] sm:$0xff] %vm1048, %v2622
      %2770 = vst.msk [vmem:[%s2765 + $0x20] sm:$0xff] %vm1048, %v2627
      %2771 = vst.msk [vmem:[%s2765 + $0x28] sm:$0xff] %vm1048, %v2632
      %2772 = vst.msk [vmem:[%s2765 + $0x30] sm:$0xff] %vm1048, %v2637
      %2773 = vst.msk [vmem:[%s2765 + $0x38] sm:$0xff] %vm1048, %v2642
      %2774 = vst.msk [vmem:[%s2765 + $0x40] sm:$0xff] %vm1048, %v2647
      %2775 = vst.msk [vmem:[%s2765 + $0x48] sm:$0xff] %vm1048, %v2652
      %2776 = vst.msk [vmem:[%s2765 + $0x50] sm:$0xff] %vm1048, %v2657
      %2777 = vst.msk [vmem:[%s2765 + $0x58] sm:$0xff] %vm1048, %v2662
      %2778 = vst.msk [vmem:[%s2765 + $0x60] sm:$0xff] %vm1048, %v2667
      %2779 = vst.msk [vmem:[%s2765 + $0x68] sm:$0xff] %vm1048, %v2672
      %2780 = vst.msk [vmem:[%s2765 + $0x70] sm:$0xff] %vm1048, %v2677
      %2781 = vst.msk [vmem:[%s2765 + $0x78] sm:$0xff] %vm1048, %v2682
      %2782 = vst.msk [vmem:[%s2765 + $0x80] sm:$0xff] %vm1048, %v2687
      %2783 = vst.msk [vmem:[%s2765 + $0x88] sm:$0xff] %vm1048, %v2692
      %2784 = vst.msk [vmem:[%s2765 + $0x90] sm:$0xff] %vm1048, %v2697
      %2785 = vst.msk [vmem:[%s2765 + $0x98] sm:$0xff] %vm1048, %v2702
      %2786 = vst.msk [vmem:[%s2765 + $0xa0] sm:$0xff] %vm1048, %v2707
      %2787 = vst.msk [vmem:[%s2765 + $0xa8] sm:$0xff] %vm1048, %v2712
      %2788 = vst.msk [vmem:[%s2765 + $0xb0] sm:$0xff] %vm1048, %v2717
      %2789 = vst.msk [vmem:[%s2765 + $0xb8] sm:$0xff] %vm1048, %v2722
      %2790 = vst.msk [vmem:[%s2765 + $0xc0] sm:$0xff] %vm1048, %v2727
      %2791 = vst.msk [vmem:[%s2765 + $0xc8] sm:$0xff] %vm1048, %v2732
      %2792 = vst.msk [vmem:[%s2765 + $0xd0] sm:$0xff] %vm1048, %v2737
      %2793 = vst.msk [vmem:[%s2765 + $0xd8] sm:$0xff] %vm1048, %v2742
      %2794 = vst.msk [vmem:[%s2765 + $0xe0] sm:$0xff] %vm1048, %v2747
      %2795 = vst.msk [vmem:[%s2765 + $0xe8] sm:$0xff] %vm1048, %v2752
      %2796 = vst.msk [vmem:[%s2765 + $0xf0] sm:$0xff] %vm1048, %v2757
      %2797 = vst.msk [vmem:[%s2765 + $0xf8] sm:$0xff] %vm1048, %v2762
      %v2798 = vsel %vm1048, %v2607, 0.0
      %v2799 = vsel %vm1048, %v2612, 0.0
      %v2800 = vadd.f32 %v2798, %v2799
      %v2801 = vsel %vm1048, %v2617, 0.0
      %v2802 = vadd.f32 %v2800, %v2801
      %v2803 = vsel %vm1048, %v2622, 0.0
      %v2804 = vadd.f32 %v2802, %v2803
      %v2805 = vsel %vm1048, %v2627, 0.0
      %v2806 = vadd.f32 %v2804, %v2805
      %v2807 = vsel %vm1048, %v2632, 0.0
      %v2808 = vadd.f32 %v2806, %v2807
      %v2809 = vsel %vm1048, %v2637, 0.0
      %v2810 = vadd.f32 %v2808, %v2809
      %v2811 = vsel %vm1048, %v2642, 0.0
      %v2812 = vadd.f32 %v2810, %v2811
      %v2813 = vsel %vm1048, %v2647, 0.0
      %v2814 = vadd.f32 %v2812, %v2813
      %v2815 = vsel %vm1048, %v2652, 0.0
      %v2816 = vadd.f32 %v2814, %v2815
      %v2817 = vsel %vm1048, %v2657, 0.0
      %v2818 = vadd.f32 %v2816, %v2817
      %v2819 = vsel %vm1048, %v2662, 0.0
      %v2820 = vadd.f32 %v2818, %v2819
      %v2821 = vsel %vm1048, %v2667, 0.0
      %v2822 = vadd.f32 %v2820, %v2821
      %v2823 = vsel %vm1048, %v2672, 0.0
      %v2824 = vadd.f32 %v2822, %v2823
      %v2825 = vsel %vm1048, %v2677, 0.0
      %v2826 = vadd.f32 %v2824, %v2825
      %v2827 = vsel %vm1048, %v2682, 0.0
      %v2828 = vadd.f32 %v2826, %v2827
      %v2829 = vsel %vm1048, %v2687, 0.0
      %v2830 = vadd.f32 %v2828, %v2829
      %v2831 = vsel %vm1048, %v2692, 0.0
      %v2832 = vadd.f32 %v2830, %v2831
      %v2833 = vsel %vm1048, %v2697, 0.0
      %v2834 = vadd.f32 %v2832, %v2833
      %v2835 = vsel %vm1048, %v2702, 0.0
      %v2836 = vadd.f32 %v2834, %v2835
      %v2837 = vsel %vm1048, %v2707, 0.0
      %v2838 = vadd.f32 %v2836, %v2837
      %v2839 = vsel %vm1048, %v2712, 0.0
      %v2840 = vadd.f32 %v2838, %v2839
      %v2841 = vsel %vm1048, %v2717, 0.0
      %v2842 = vadd.f32 %v2840, %v2841
      %v2843 = vsel %vm1048, %v2722, 0.0
      %v2844 = vadd.f32 %v2842, %v2843
      %v2845 = vsel %vm1048, %v2727, 0.0
      %v2846 = vadd.f32 %v2844, %v2845
      %v2847 = vsel %vm1048, %v2732, 0.0
      %v2848 = vadd.f32 %v2846, %v2847
      %v2849 = vsel %vm1048, %v2737, 0.0
      %v2850 = vadd.f32 %v2848, %v2849
      %v2851 = vsel %vm1048, %v2742, 0.0
      %v2852 = vadd.f32 %v2850, %v2851
      %v2853 = vsel %vm1048, %v2747, 0.0
      %v2854 = vadd.f32 %v2852, %v2853
      %v2855 = vsel %vm1048, %v2752, 0.0
      %v2856 = vadd.f32 %v2854, %v2855
      %v2857 = vsel %vm1048, %v2757, 0.0
      %v2858 = vadd.f32 %v2856, %v2857
      %v2859 = vsel %vm1048, %v2762, 0.0
      %v2860 = vadd.f32 %v2858, %v2859
      %v2861 = vrot.slane %v2860, 4
      %v2862 = vadd.f32 %v2860, %v2861
      %v2863 = vrot.slane %v2862, 2
      %v2864 = vadd.f32 %v2862, %v2863
      %v2865 = vrot.slane %v2864, 1
      %v2866 = vadd.f32 %v2864, %v2865
      %v2867 = vadd.f32 %v2410, %v2866
      %v2868 = vmul.f32 %v2607, %v2607
      %v2869 = vmul.f32 %v2612, %v2612
      %v2870 = vmul.f32 %v2617, %v2617
      %v2871 = vmul.f32 %v2622, %v2622
      %v2872 = vmul.f32 %v2627, %v2627
      %v2873 = vmul.f32 %v2632, %v2632
      %v2874 = vmul.f32 %v2637, %v2637
      %v2875 = vmul.f32 %v2642, %v2642
      %v2876 = vmul.f32 %v2647, %v2647
      %v2877 = vmul.f32 %v2652, %v2652
      %v2878 = vmul.f32 %v2657, %v2657
      %v2879 = vmul.f32 %v2662, %v2662
      %v2880 = vmul.f32 %v2667, %v2667
      %v2881 = vmul.f32 %v2672, %v2672
      %v2882 = vmul.f32 %v2677, %v2677
      %v2883 = vmul.f32 %v2682, %v2682
      %v2884 = vmul.f32 %v2687, %v2687
      %v2885 = vmul.f32 %v2692, %v2692
      %v2886 = vmul.f32 %v2697, %v2697
      %v2887 = vmul.f32 %v2702, %v2702
      %v2888 = vmul.f32 %v2707, %v2707
      %v2889 = vmul.f32 %v2712, %v2712
      %v2890 = vmul.f32 %v2717, %v2717
      %v2891 = vmul.f32 %v2722, %v2722
      %v2892 = vmul.f32 %v2727, %v2727
      %v2893 = vmul.f32 %v2732, %v2732
      %v2894 = vmul.f32 %v2737, %v2737
      %v2895 = vmul.f32 %v2742, %v2742
      %v2896 = vmul.f32 %v2747, %v2747
      %v2897 = vmul.f32 %v2752, %v2752
      %v2898 = vmul.f32 %v2757, %v2757
      %v2899 = vmul.f32 %v2762, %v2762
      %v2900 = vsel %vm1048, %v2868, 0.0
      %v2901 = vsel %vm1048, %v2869, 0.0
      %v2902 = vadd.f32 %v2900, %v2901
      %v2903 = vsel %vm1048, %v2870, 0.0
      %v2904 = vadd.f32 %v2902, %v2903
      %v2905 = vsel %vm1048, %v2871, 0.0
      %v2906 = vadd.f32 %v2904, %v2905
      %v2907 = vsel %vm1048, %v2872, 0.0
      %v2908 = vadd.f32 %v2906, %v2907
      %v2909 = vsel %vm1048, %v2873, 0.0
      %v2910 = vadd.f32 %v2908, %v2909
      %v2911 = vsel %vm1048, %v2874, 0.0
      %v2912 = vadd.f32 %v2910, %v2911
      %v2913 = vsel %vm1048, %v2875, 0.0
      %v2914 = vadd.f32 %v2912, %v2913
      %v2915 = vsel %vm1048, %v2876, 0.0
      %v2916 = vadd.f32 %v2914, %v2915
      %v2917 = vsel %vm1048, %v2877, 0.0
      %v2918 = vadd.f32 %v2916, %v2917
      %v2919 = vsel %vm1048, %v2878, 0.0
      %v2920 = vadd.f32 %v2918, %v2919
      %v2921 = vsel %vm1048, %v2879, 0.0
      %v2922 = vadd.f32 %v2920, %v2921
      %v2923 = vsel %vm1048, %v2880, 0.0
      %v2924 = vadd.f32 %v2922, %v2923
      %v2925 = vsel %vm1048, %v2881, 0.0
      %v2926 = vadd.f32 %v2924, %v2925
      %v2927 = vsel %vm1048, %v2882, 0.0
      %v2928 = vadd.f32 %v2926, %v2927
      %v2929 = vsel %vm1048, %v2883, 0.0
      %v2930 = vadd.f32 %v2928, %v2929
      %v2931 = vsel %vm1048, %v2884, 0.0
      %v2932 = vadd.f32 %v2930, %v2931
      %v2933 = vsel %vm1048, %v2885, 0.0
      %v2934 = vadd.f32 %v2932, %v2933
      %v2935 = vsel %vm1048, %v2886, 0.0
      %v2936 = vadd.f32 %v2934, %v2935
      %v2937 = vsel %vm1048, %v2887, 0.0
      %v2938 = vadd.f32 %v2936, %v2937
      %v2939 = vsel %vm1048, %v2888, 0.0
      %v2940 = vadd.f32 %v2938, %v2939
      %v2941 = vsel %vm1048, %v2889, 0.0
      %v2942 = vadd.f32 %v2940, %v2941
      %v2943 = vsel %vm1048, %v2890, 0.0
      %v2944 = vadd.f32 %v2942, %v2943
      %v2945 = vsel %vm1048, %v2891, 0.0
      %v2946 = vadd.f32 %v2944, %v2945
      %v2947 = vsel %vm1048, %v2892, 0.0
      %v2948 = vadd.f32 %v2946, %v2947
      %v2949 = vsel %vm1048, %v2893, 0.0
      %v2950 = vadd.f32 %v2948, %v2949
      %v2951 = vsel %vm1048, %v2894, 0.0
      %v2952 = vadd.f32 %v2950, %v2951
      %v2953 = vsel %vm1048, %v2895, 0.0
      %v2954 = vadd.f32 %v2952, %v2953
      %v2955 = vsel %vm1048, %v2896, 0.0
      %v2956 = vadd.f32 %v2954, %v2955
      %v2957 = vsel %vm1048, %v2897, 0.0
      %v2958 = vadd.f32 %v2956, %v2957
      %v2959 = vsel %vm1048, %v2898, 0.0
      %v2960 = vadd.f32 %v2958, %v2959
      %v2961 = vsel %vm1048, %v2899, 0.0
      %v2962 = vadd.f32 %v2960, %v2961
      %v2963 = vrot.slane %v2962, 4
      %v2964 = vadd.f32 %v2962, %v2963
      %v2965 = vrot.slane %v2964, 2
      %v2966 = vadd.f32 %v2964, %v2965
      %v2967 = vrot.slane %v2966, 1
      %v2968 = vadd.f32 %v2966, %v2967
      %v2969 = vadd.f32 %v2512, %v2968
      %v2970 = vmul.f32 %v2867, 0.0009765625
      %v2971 = vmul.f32 %v2969, 0.0009765625
      %v2972 = vmul.f32 %v2970, %v2970
      %v2973 = vsub.f32 %v2971, %v2972
      %v2974 = vadd.f32 %v2973, 1e-05
      %v2975 = vrsqrt.pop %v2974
      %v2976 = vld [vmem:[#allocation2] sm:$0xff]
      %v2977 = vld [vmem:[#allocation2 + $0x8] sm:$0xff]
      %v2978 = vld [vmem:[#allocation2 + $0x10] sm:$0xff]
      %v2979 = vld [vmem:[#allocation2 + $0x18] sm:$0xff]
      %v2980 = vld [vmem:[#allocation2 + $0x20] sm:$0xff]
      %v2981 = vld [vmem:[#allocation2 + $0x28] sm:$0xff]
      %v2982 = vld [vmem:[#allocation2 + $0x30] sm:$0xff]
      %v2983 = vld [vmem:[#allocation2 + $0x38] sm:$0xff]
      %v2984 = vld [vmem:[#allocation2 + $0x40] sm:$0xff]
      %v2985 = vld [vmem:[#allocation2 + $0x48] sm:$0xff]
      %v2986 = vld [vmem:[#allocation2 + $0x50] sm:$0xff]
      %v2987 = vld [vmem:[#allocation2 + $0x58] sm:$0xff]
      %v2988 = vld [vmem:[#allocation2 + $0x60] sm:$0xff]
      %v2989 = vld [vmem:[#allocation2 + $0x68] sm:$0xff]
      %v2990 = vld [vmem:[#allocation2 + $0x70] sm:$0xff]
      %v2991 = vld [vmem:[#allocation2 + $0x78] sm:$0xff]
      %v2992 = vld [vmem:[#allocation2 + $0x80] sm:$0xff]
      %v2993 = vld [vmem:[#allocation2 + $0x88] sm:$0xff]
      %v2994 = vld [vmem:[#allocation2 + $0x90] sm:$0xff]
      %v2995 = vld [vmem:[#allocation2 + $0x98] sm:$0xff]
      %v2996 = vld [vmem:[#allocation2 + $0xa0] sm:$0xff]
      %v2997 = vld [vmem:[#allocation2 + $0xa8] sm:$0xff]
      %v2998 = vld [vmem:[#allocation2 + $0xb0] sm:$0xff]
      %v2999 = vld [vmem:[#allocation2 + $0xb8] sm:$0xff]
      %v3000 = vld [vmem:[#allocation2 + $0xc0] sm:$0xff]
      %v3001 = vld [vmem:[#allocation2 + $0xc8] sm:$0xff]
      %v3002 = vld [vmem:[#allocation2 + $0xd0] sm:$0xff]
      %v3003 = vld [vmem:[#allocation2 + $0xd8] sm:$0xff]
      %v3004 = vld [vmem:[#allocation2 + $0xe0] sm:$0xff]
      %v3005 = vld [vmem:[#allocation2 + $0xe8] sm:$0xff]
      %v3006 = vld [vmem:[#allocation2 + $0xf0] sm:$0xff]
      %v3007 = vld [vmem:[#allocation2 + $0xf8] sm:$0xff]
      %v3008 = vsub.f32 %v2976, %v2970
      %v3009 = vsub.f32 %v2977, %v2970
      %v3010 = vsub.f32 %v2978, %v2970
      %v3011 = vsub.f32 %v2979, %v2970
      %v3012 = vsub.f32 %v2980, %v2970
      %v3013 = vsub.f32 %v2981, %v2970
      %v3014 = vsub.f32 %v2982, %v2970
      %v3015 = vsub.f32 %v2983, %v2970
      %v3016 = vsub.f32 %v2984, %v2970
      %v3017 = vsub.f32 %v2985, %v2970
      %v3018 = vsub.f32 %v2986, %v2970
      %v3019 = vsub.f32 %v2987, %v2970
      %v3020 = vsub.f32 %v2988, %v2970
      %v3021 = vsub.f32 %v2989, %v2970
      %v3022 = vsub.f32 %v2990, %v2970
      %v3023 = vsub.f32 %v2991, %v2970
      %v3024 = vsub.f32 %v2992, %v2970
      %v3025 = vsub.f32 %v2993, %v2970
      %v3026 = vsub.f32 %v2994, %v2970
      %v3027 = vsub.f32 %v2995, %v2970
      %v3028 = vsub.f32 %v2996, %v2970
      %v3029 = vsub.f32 %v2997, %v2970
      %v3030 = vsub.f32 %v2998, %v2970
      %v3031 = vsub.f32 %v2999, %v2970
      %v3032 = vsub.f32 %v3000, %v2970
      %v3033 = vsub.f32 %v3001, %v2970
      %v3034 = vsub.f32 %v3002, %v2970
      %v3035 = vsub.f32 %v3003, %v2970
      %v3036 = vsub.f32 %v3004, %v2970
      %v3037 = vsub.f32 %v3005, %v2970
      %v3038 = vsub.f32 %v3006, %v2970
      %v3039 = vsub.f32 %v3007, %v2970
      %v3040 = vmul.f32 %v3008, %v2975
      %v3041 = vmul.f32 %v3009, %v2975
      %v3042 = vmul.f32 %v3010, %v2975
      %v3043 = vmul.f32 %v3011, %v2975
      %v3044 = vmul.f32 %v3012, %v2975
      %v3045 = vmul.f32 %v3013, %v2975
      %v3046 = vmul.f32 %v3014, %v2975
      %v3047 = vmul.f32 %v3015, %v2975
      %v3048 = vmul.f32 %v3016, %v2975
      %v3049 = vmul.f32 %v3017, %v2975
      %v3050 = vmul.f32 %v3018, %v2975
      %v3051 = vmul.f32 %v3019, %v2975
      %v3052 = vmul.f32 %v3020, %v2975
      %v3053 = vmul.f32 %v3021, %v2975
      %v3054 = vmul.f32 %v3022, %v2975
      %v3055 = vmul.f32 %v3023, %v2975
      %v3056 = vmul.f32 %v3024, %v2975
      %v3057 = vmul.f32 %v3025, %v2975
      %v3058 = vmul.f32 %v3026, %v2975
      %v3059 = vmul.f32 %v3027, %v2975
      %v3060 = vmul.f32 %v3028, %v2975
      %v3061 = vmul.f32 %v3029, %v2975
      %v3062 = vmul.f32 %v3030, %v2975
      %v3063 = vmul.f32 %v3031, %v2975
      %v3064 = vmul.f32 %v3032, %v2975
      %v3065 = vmul.f32 %v3033, %v2975
      %v3066 = vmul.f32 %v3034, %v2975
      %v3067 = vmul.f32 %v3035, %v2975
      %v3068 = vmul.f32 %v3036, %v2975
      %v3069 = vmul.f32 %v3037, %v2975
      %v3070 = vmul.f32 %v3038, %v2975
      %v3071 = vmul.f32 %v3039, %v2975
      %v3072 = vmax.f32 %v3040, 0.0
      %v3073 = vmax.f32 %v3041, 0.0
      %v3074 = vmax.f32 %v3042, 0.0
      %v3075 = vmax.f32 %v3043, 0.0
      %v3076 = vmax.f32 %v3044, 0.0
      %v3077 = vmax.f32 %v3045, 0.0
      %v3078 = vmax.f32 %v3046, 0.0
      %v3079 = vmax.f32 %v3047, 0.0
      %v3080 = vmax.f32 %v3048, 0.0
      %v3081 = vmax.f32 %v3049, 0.0
      %v3082 = vmax.f32 %v3050, 0.0
      %v3083 = vmax.f32 %v3051, 0.0
      %v3084 = vmax.f32 %v3052, 0.0
      %v3085 = vmax.f32 %v3053, 0.0
      %v3086 = vmax.f32 %v3054, 0.0
      %v3087 = vmax.f32 %v3055, 0.0
      %v3088 = vmax.f32 %v3056, 0.0
      %v3089 = vmax.f32 %v3057, 0.0
      %v3090 = vmax.f32 %v3058, 0.0
      %v3091 = vmax.f32 %v3059, 0.0
      %v3092 = vmax.f32 %v3060, 0.0
      %v3093 = vmax.f32 %v3061, 0.0
      %v3094 = vmax.f32 %v3062, 0.0
      %v3095 = vmax.f32 %v3063, 0.0
      %v3096 = vmax.f32 %v3064, 0.0
      %v3097 = vmax.f32 %v3065, 0.0
      %v3098 = vmax.f32 %v3066, 0.0
      %v3099 = vmax.f32 %v3067, 0.0
      %v3100 = vmax.f32 %v3068, 0.0
      %v3101 = vmax.f32 %v3069, 0.0
      %v3102 = vmax.f32 %v3070, 0.0
      %v3103 = vmax.f32 %v3071, 0.0
      %3104 = vst.msk [vmem:[%s143] sm:$0xff] %vm1048, %v3072
      %3105 = vst.msk [vmem:[%s143 + $0x8] sm:$0xff] %vm1048, %v3073
      %3106 = vst.msk [vmem:[%s143 + $0x10] sm:$0xff] %vm1048, %v3074
      %3107 = vst.msk [vmem:[%s143 + $0x18] sm:$0xff] %vm1048, %v3075
      %3108 = vst.msk [vmem:[%s143 + $0x20] sm:$0xff] %vm1048, %v3076
      %3109 = vst.msk [vmem:[%s143 + $0x28] sm:$0xff] %vm1048, %v3077
      %3110 = vst.msk [vmem:[%s143 + $0x30] sm:$0xff] %vm1048, %v3078
      %3111 = vst.msk [vmem:[%s143 + $0x38] sm:$0xff] %vm1048, %v3079
      %3112 = vst.msk [vmem:[%s143 + $0x40] sm:$0xff] %vm1048, %v3080
      %3113 = vst.msk [vmem:[%s143 + $0x48] sm:$0xff] %vm1048, %v3081
      %3114 = vst.msk [vmem:[%s143 + $0x50] sm:$0xff] %vm1048, %v3082
      %3115 = vst.msk [vmem:[%s143 + $0x58] sm:$0xff] %vm1048, %v3083
      %3116 = vst.msk [vmem:[%s143 + $0x60] sm:$0xff] %vm1048, %v3084
      %3117 = vst.msk [vmem:[%s143 + $0x68] sm:$0xff] %vm1048, %v3085
      %3118 = vst.msk [vmem:[%s143 + $0x70] sm:$0xff] %vm1048, %v3086
      %3119 = vst.msk [vmem:[%s143 + $0x78] sm:$0xff] %vm1048, %v3087
      %3120 = vst.msk [vmem:[%s143 + $0x80] sm:$0xff] %vm1048, %v3088
      %3121 = vst.msk [vmem:[%s143 + $0x88] sm:$0xff] %vm1048, %v3089
      %3122 = vst.msk [vmem:[%s143 + $0x90] sm:$0xff] %vm1048, %v3090
      %3123 = vst.msk [vmem:[%s143 + $0x98] sm:$0xff] %vm1048, %v3091
      %3124 = vst.msk [vmem:[%s143 + $0xa0] sm:$0xff] %vm1048, %v3092
      %3125 = vst.msk [vmem:[%s143 + $0xa8] sm:$0xff] %vm1048, %v3093
      %3126 = vst.msk [vmem:[%s143 + $0xb0] sm:$0xff] %vm1048, %v3094
      %3127 = vst.msk [vmem:[%s143 + $0xb8] sm:$0xff] %vm1048, %v3095
      %3128 = vst.msk [vmem:[%s143 + $0xc0] sm:$0xff] %vm1048, %v3096
      %3129 = vst.msk [vmem:[%s143 + $0xc8] sm:$0xff] %vm1048, %v3097
      %3130 = vst.msk [vmem:[%s143 + $0xd0] sm:$0xff] %vm1048, %v3098
      %3131 = vst.msk [vmem:[%s143 + $0xd8] sm:$0xff] %vm1048, %v3099
      %3132 = vst.msk [vmem:[%s143 + $0xe0] sm:$0xff] %vm1048, %v3100
      %3133 = vst.msk [vmem:[%s143 + $0xe8] sm:$0xff] %vm1048, %v3101
      %3134 = vst.msk [vmem:[%s143 + $0xf0] sm:$0xff] %vm1048, %v3102
      %3135 = vst.msk [vmem:[%s143 + $0xf8] sm:$0xff] %vm1048, %v3103
      %v3136 = vld [vmem:[%s1835] sm:$0xff]
      %v3137 = vld [vmem:[%s1835 + $0x8] sm:$0xff]
      %v3138 = vld [vmem:[%s1835 + $0x10] sm:$0xff]
      %v3139 = vld [vmem:[%s1835 + $0x18] sm:$0xff]
      %v3140 = vld [vmem:[%s1835 + $0x20] sm:$0xff]
      %v3141 = vld [vmem:[%s1835 + $0x28] sm:$0xff]
      %v3142 = vld [vmem:[%s1835 + $0x30] sm:$0xff]
      %v3143 = vld [vmem:[%s1835 + $0x38] sm:$0xff]
      %v3144 = vld [vmem:[%s1835 + $0x40] sm:$0xff]
      %v3145 = vld [vmem:[%s1835 + $0x48] sm:$0xff]
      %v3146 = vld [vmem:[%s1835 + $0x50] sm:$0xff]
      %v3147 = vld [vmem:[%s1835 + $0x58] sm:$0xff]
      %v3148 = vld [vmem:[%s1835 + $0x60] sm:$0xff]
      %v3149 = vld [vmem:[%s1835 + $0x68] sm:$0xff]
      %v3150 = vld [vmem:[%s1835 + $0x70] sm:$0xff]
      %v3151 = vld [vmem:[%s1835 + $0x78] sm:$0xff]
      %v3152 = vld [vmem:[%s1835 + $0x80] sm:$0xff]
      %v3153 = vld [vmem:[%s1835 + $0x88] sm:$0xff]
      %v3154 = vld [vmem:[%s1835 + $0x90] sm:$0xff]
      %v3155 = vld [vmem:[%s1835 + $0x98] sm:$0xff]
      %v3156 = vld [vmem:[%s1835 + $0xa0] sm:$0xff]
      %v3157 = vld [vmem:[%s1835 + $0xa8] sm:$0xff]
      %v3158 = vld [vmem:[%s1835 + $0xb0] sm:$0xff]
      %v3159 = vld [vmem:[%s1835 + $0xb8] sm:$0xff]
      %v3160 = vld [vmem:[%s1835 + $0xc0] sm:$0xff]
      %v3161 = vld [vmem:[%s1835 + $0xc8] sm:$0xff]
      %v3162 = vld [vmem:[%s1835 + $0xd0] sm:$0xff]
      %v3163 = vld [vmem:[%s1835 + $0xd8] sm:$0xff]
      %v3164 = vld [vmem:[%s1835 + $0xe0] sm:$0xff]
      %v3165 = vld [vmem:[%s1835 + $0xe8] sm:$0xff]
      %v3166 = vld [vmem:[%s1835 + $0xf0] sm:$0xff]
      %v3167 = vld [vmem:[%s1835 + $0xf8] sm:$0xff]
      %v3168 = vsub.f32 %v3136, %v2970
      %v3169 = vsub.f32 %v3137, %v2970
      %v3170 = vsub.f32 %v3138, %v2970
      %v3171 = vsub.f32 %v3139, %v2970
      %v3172 = vsub.f32 %v3140, %v2970
      %v3173 = vsub.f32 %v3141, %v2970
      %v3174 = vsub.f32 %v3142, %v2970
      %v3175 = vsub.f32 %v3143, %v2970
      %v3176 = vsub.f32 %v3144, %v2970
      %v3177 = vsub.f32 %v3145, %v2970
      %v3178 = vsub.f32 %v3146, %v2970
      %v3179 = vsub.f32 %v3147, %v2970
      %v3180 = vsub.f32 %v3148, %v2970
      %v3181 = vsub.f32 %v3149, %v2970
      %v3182 = vsub.f32 %v3150, %v2970
      %v3183 = vsub.f32 %v3151, %v2970
      %v3184 = vsub.f32 %v3152, %v2970
      %v3185 = vsub.f32 %v3153, %v2970
      %v3186 = vsub.f32 %v3154, %v2970
      %v3187 = vsub.f32 %v3155, %v2970
      %v3188 = vsub.f32 %v3156, %v2970
      %v3189 = vsub.f32 %v3157, %v2970
      %v3190 = vsub.f32 %v3158, %v2970
      %v3191 = vsub.f32 %v3159, %v2970
      %v3192 = vsub.f32 %v3160, %v2970
      %v3193 = vsub.f32 %v3161, %v2970
      %v3194 = vsub.f32 %v3162, %v2970
      %v3195 = vsub.f32 %v3163, %v2970
      %v3196 = vsub.f32 %v3164, %v2970
      %v3197 = vsub.f32 %v3165, %v2970
      %v3198 = vsub.f32 %v3166, %v2970
      %v3199 = vsub.f32 %v3167, %v2970
      %v3200 = vmul.f32 %v3168, %v2975
      %v3201 = vmul.f32 %v3169, %v2975
      %v3202 = vmul.f32 %v3170, %v2975
      %v3203 = vmul.f32 %v3171, %v2975
      %v3204 = vmul.f32 %v3172, %v2975
      %v3205 = vmul.f32 %v3173, %v2975
      %v3206 = vmul.f32 %v3174, %v2975
      %v3207 = vmul.f32 %v3175, %v2975
      %v3208 = vmul.f32 %v3176, %v2975
      %v3209 = vmul.f32 %v3177, %v2975
      %v3210 = vmul.f32 %v3178, %v2975
      %v3211 = vmul.f32 %v3179, %v2975
      %v3212 = vmul.f32 %v3180, %v2975
      %v3213 = vmul.f32 %v3181, %v2975
      %v3214 = vmul.f32 %v3182, %v2975
      %v3215 = vmul.f32 %v3183, %v2975
      %v3216 = vmul.f32 %v3184, %v2975
      %v3217 = vmul.f32 %v3185, %v2975
      %v3218 = vmul.f32 %v3186, %v2975
      %v3219 = vmul.f32 %v3187, %v2975
      %v3220 = vmul.f32 %v3188, %v2975
      %v3221 = vmul.f32 %v3189, %v2975
      %v3222 = vmul.f32 %v3190, %v2975
      %v3223 = vmul.f32 %v3191, %v2975
      %v3224 = vmul.f32 %v3192, %v2975
      %v3225 = vmul.f32 %v3193, %v2975
      %v3226 = vmul.f32 %v3194, %v2975
      %v3227 = vmul.f32 %v3195, %v2975
      %v3228 = vmul.f32 %v3196, %v2975
      %v3229 = vmul.f32 %v3197, %v2975
      %v3230 = vmul.f32 %v3198, %v2975
      %v3231 = vmul.f32 %v3199, %v2975
      %v3232 = vmax.f32 %v3200, 0.0
      %v3233 = vmax.f32 %v3201, 0.0
      %v3234 = vmax.f32 %v3202, 0.0
      %v3235 = vmax.f32 %v3203, 0.0
      %v3236 = vmax.f32 %v3204, 0.0
      %v3237 = vmax.f32 %v3205, 0.0
      %v3238 = vmax.f32 %v3206, 0.0
      %v3239 = vmax.f32 %v3207, 0.0
      %v3240 = vmax.f32 %v3208, 0.0
      %v3241 = vmax.f32 %v3209, 0.0
      %v3242 = vmax.f32 %v3210, 0.0
      %v3243 = vmax.f32 %v3211, 0.0
      %v3244 = vmax.f32 %v3212, 0.0
      %v3245 = vmax.f32 %v3213, 0.0
      %v3246 = vmax.f32 %v3214, 0.0
      %v3247 = vmax.f32 %v3215, 0.0
      %v3248 = vmax.f32 %v3216, 0.0
      %v3249 = vmax.f32 %v3217, 0.0
      %v3250 = vmax.f32 %v3218, 0.0
      %v3251 = vmax.f32 %v3219, 0.0
      %v3252 = vmax.f32 %v3220, 0.0
      %v3253 = vmax.f32 %v3221, 0.0
      %v3254 = vmax.f32 %v3222, 0.0
      %v3255 = vmax.f32 %v3223, 0.0
      %v3256 = vmax.f32 %v3224, 0.0
      %v3257 = vmax.f32 %v3225, 0.0
      %v3258 = vmax.f32 %v3226, 0.0
      %v3259 = vmax.f32 %v3227, 0.0
      %v3260 = vmax.f32 %v3228, 0.0
      %v3261 = vmax.f32 %v3229, 0.0
      %v3262 = vmax.f32 %v3230, 0.0
      %v3263 = vmax.f32 %v3231, 0.0
      %s3264 = scalar_lea.vmem %s143, 256
      %3265 = vst.msk [vmem:[%s3264] sm:$0xff] %vm1048, %v3232
      %3266 = vst.msk [vmem:[%s3264 + $0x8] sm:$0xff] %vm1048, %v3233
      %3267 = vst.msk [vmem:[%s3264 + $0x10] sm:$0xff] %vm1048, %v3234
      %3268 = vst.msk [vmem:[%s3264 + $0x18] sm:$0xff] %vm1048, %v3235
      %3269 = vst.msk [vmem:[%s3264 + $0x20] sm:$0xff] %vm1048, %v3236
      %3270 = vst.msk [vmem:[%s3264 + $0x28] sm:$0xff] %vm1048, %v3237
      %3271 = vst.msk [vmem:[%s3264 + $0x30] sm:$0xff] %vm1048, %v3238
      %3272 = vst.msk [vmem:[%s3264 + $0x38] sm:$0xff] %vm1048, %v3239
      %3273 = vst.msk [vmem:[%s3264 + $0x40] sm:$0xff] %vm1048, %v3240
      %3274 = vst.msk [vmem:[%s3264 + $0x48] sm:$0xff] %vm1048, %v3241
      %3275 = vst.msk [vmem:[%s3264 + $0x50] sm:$0xff] %vm1048, %v3242
      %3276 = vst.msk [vmem:[%s3264 + $0x58] sm:$0xff] %vm1048, %v3243
      %3277 = vst.msk [vmem:[%s3264 + $0x60] sm:$0xff] %vm1048, %v3244
      %3278 = vst.msk [vmem:[%s3264 + $0x68] sm:$0xff] %vm1048, %v3245
      %3279 = vst.msk [vmem:[%s3264 + $0x70] sm:$0xff] %vm1048, %v3246
      %3280 = vst.msk [vmem:[%s3264 + $0x78] sm:$0xff] %vm1048, %v3247
      %3281 = vst.msk [vmem:[%s3264 + $0x80] sm:$0xff] %vm1048, %v3248
      %3282 = vst.msk [vmem:[%s3264 + $0x88] sm:$0xff] %vm1048, %v3249
      %3283 = vst.msk [vmem:[%s3264 + $0x90] sm:$0xff] %vm1048, %v3250
      %3284 = vst.msk [vmem:[%s3264 + $0x98] sm:$0xff] %vm1048, %v3251
      %3285 = vst.msk [vmem:[%s3264 + $0xa0] sm:$0xff] %vm1048, %v3252
      %3286 = vst.msk [vmem:[%s3264 + $0xa8] sm:$0xff] %vm1048, %v3253
      %3287 = vst.msk [vmem:[%s3264 + $0xb0] sm:$0xff] %vm1048, %v3254
      %3288 = vst.msk [vmem:[%s3264 + $0xb8] sm:$0xff] %vm1048, %v3255
      %3289 = vst.msk [vmem:[%s3264 + $0xc0] sm:$0xff] %vm1048, %v3256
      %3290 = vst.msk [vmem:[%s3264 + $0xc8] sm:$0xff] %vm1048, %v3257
      %3291 = vst.msk [vmem:[%s3264 + $0xd0] sm:$0xff] %vm1048, %v3258
      %3292 = vst.msk [vmem:[%s3264 + $0xd8] sm:$0xff] %vm1048, %v3259
      %3293 = vst.msk [vmem:[%s3264 + $0xe0] sm:$0xff] %vm1048, %v3260
      %3294 = vst.msk [vmem:[%s3264 + $0xe8] sm:$0xff] %vm1048, %v3261
      %3295 = vst.msk [vmem:[%s3264 + $0xf0] sm:$0xff] %vm1048, %v3262
      %3296 = vst.msk [vmem:[%s3264 + $0xf8] sm:$0xff] %vm1048, %v3263
      %v3297 = vld [vmem:[%s2308] sm:$0xff]
      %v3298 = vld [vmem:[%s2308 + $0x8] sm:$0xff]
      %v3299 = vld [vmem:[%s2308 + $0x10] sm:$0xff]
      %v3300 = vld [vmem:[%s2308 + $0x18] sm:$0xff]
      %v3301 = vld [vmem:[%s2308 + $0x20] sm:$0xff]
      %v3302 = vld [vmem:[%s2308 + $0x28] sm:$0xff]
      %v3303 = vld [vmem:[%s2308 + $0x30] sm:$0xff]
      %v3304 = vld [vmem:[%s2308 + $0x38] sm:$0xff]
      %v3305 = vld [vmem:[%s2308 + $0x40] sm:$0xff]
      %v3306 = vld [vmem:[%s2308 + $0x48] sm:$0xff]
      %v3307 = vld [vmem:[%s2308 + $0x50] sm:$0xff]
      %v3308 = vld [vmem:[%s2308 + $0x58] sm:$0xff]
      %v3309 = vld [vmem:[%s2308 + $0x60] sm:$0xff]
      %v3310 = vld [vmem:[%s2308 + $0x68] sm:$0xff]
      %v3311 = vld [vmem:[%s2308 + $0x70] sm:$0xff]
      %v3312 = vld [vmem:[%s2308 + $0x78] sm:$0xff]
      %v3313 = vld [vmem:[%s2308 + $0x80] sm:$0xff]
      %v3314 = vld [vmem:[%s2308 + $0x88] sm:$0xff]
      %v3315 = vld [vmem:[%s2308 + $0x90] sm:$0xff]
      %v3316 = vld [vmem:[%s2308 + $0x98] sm:$0xff]
      %v3317 = vld [vmem:[%s2308 + $0xa0] sm:$0xff]
      %v3318 = vld [vmem:[%s2308 + $0xa8] sm:$0xff]
      %v3319 = vld [vmem:[%s2308 + $0xb0] sm:$0xff]
      %v3320 = vld [vmem:[%s2308 + $0xb8] sm:$0xff]
      %v3321 = vld [vmem:[%s2308 + $0xc0] sm:$0xff]
      %v3322 = vld [vmem:[%s2308 + $0xc8] sm:$0xff]
      %v3323 = vld [vmem:[%s2308 + $0xd0] sm:$0xff]
      %v3324 = vld [vmem:[%s2308 + $0xd8] sm:$0xff]
      %v3325 = vld [vmem:[%s2308 + $0xe0] sm:$0xff]
      %v3326 = vld [vmem:[%s2308 + $0xe8] sm:$0xff]
      %v3327 = vld [vmem:[%s2308 + $0xf0] sm:$0xff]
      %v3328 = vld [vmem:[%s2308 + $0xf8] sm:$0xff]
      %v3329 = vsub.f32 %v3297, %v2970
      %v3330 = vsub.f32 %v3298, %v2970
      %v3331 = vsub.f32 %v3299, %v2970
      %v3332 = vsub.f32 %v3300, %v2970
      %v3333 = vsub.f32 %v3301, %v2970
      %v3334 = vsub.f32 %v3302, %v2970
      %v3335 = vsub.f32 %v3303, %v2970
      %v3336 = vsub.f32 %v3304, %v2970
      %v3337 = vsub.f32 %v3305, %v2970
      %v3338 = vsub.f32 %v3306, %v2970
      %v3339 = vsub.f32 %v3307, %v2970
      %v3340 = vsub.f32 %v3308, %v2970
      %v3341 = vsub.f32 %v3309, %v2970
      %v3342 = vsub.f32 %v3310, %v2970
      %v3343 = vsub.f32 %v3311, %v2970
      %v3344 = vsub.f32 %v3312, %v2970
      %v3345 = vsub.f32 %v3313, %v2970
      %v3346 = vsub.f32 %v3314, %v2970
      %v3347 = vsub.f32 %v3315, %v2970
      %v3348 = vsub.f32 %v3316, %v2970
      %v3349 = vsub.f32 %v3317, %v2970
      %v3350 = vsub.f32 %v3318, %v2970
      %v3351 = vsub.f32 %v3319, %v2970
      %v3352 = vsub.f32 %v3320, %v2970
      %v3353 = vsub.f32 %v3321, %v2970
      %v3354 = vsub.f32 %v3322, %v2970
      %v3355 = vsub.f32 %v3323, %v2970
      %v3356 = vsub.f32 %v3324, %v2970
      %v3357 = vsub.f32 %v3325, %v2970
      %v3358 = vsub.f32 %v3326, %v2970
      %v3359 = vsub.f32 %v3327, %v2970
      %v3360 = vsub.f32 %v3328, %v2970
      %v3361 = vmul.f32 %v3329, %v2975
      %v3362 = vmul.f32 %v3330, %v2975
      %v3363 = vmul.f32 %v3331, %v2975
      %v3364 = vmul.f32 %v3332, %v2975
      %v3365 = vmul.f32 %v3333, %v2975
      %v3366 = vmul.f32 %v3334, %v2975
      %v3367 = vmul.f32 %v3335, %v2975
      %v3368 = vmul.f32 %v3336, %v2975
      %v3369 = vmul.f32 %v3337, %v2975
      %v3370 = vmul.f32 %v3338, %v2975
      %v3371 = vmul.f32 %v3339, %v2975
      %v3372 = vmul.f32 %v3340, %v2975
      %v3373 = vmul.f32 %v3341, %v2975
      %v3374 = vmul.f32 %v3342, %v2975
      %v3375 = vmul.f32 %v3343, %v2975
      %v3376 = vmul.f32 %v3344, %v2975
      %v3377 = vmul.f32 %v3345, %v2975
      %v3378 = vmul.f32 %v3346, %v2975
      %v3379 = vmul.f32 %v3347, %v2975
      %v3380 = vmul.f32 %v3348, %v2975
      %v3381 = vmul.f32 %v3349, %v2975
      %v3382 = vmul.f32 %v3350, %v2975
      %v3383 = vmul.f32 %v3351, %v2975
      %v3384 = vmul.f32 %v3352, %v2975
      %v3385 = vmul.f32 %v3353, %v2975
      %v3386 = vmul.f32 %v3354, %v2975
      %v3387 = vmul.f32 %v3355, %v2975
      %v3388 = vmul.f32 %v3356, %v2975
      %v3389 = vmul.f32 %v3357, %v2975
      %v3390 = vmul.f32 %v3358, %v2975
      %v3391 = vmul.f32 %v3359, %v2975
      %v3392 = vmul.f32 %v3360, %v2975
      %v3393 = vmax.f32 %v3361, 0.0
      %v3394 = vmax.f32 %v3362, 0.0
      %v3395 = vmax.f32 %v3363, 0.0
      %v3396 = vmax.f32 %v3364, 0.0
      %v3397 = vmax.f32 %v3365, 0.0
      %v3398 = vmax.f32 %v3366, 0.0
      %v3399 = vmax.f32 %v3367, 0.0
      %v3400 = vmax.f32 %v3368, 0.0
      %v3401 = vmax.f32 %v3369, 0.0
      %v3402 = vmax.f32 %v3370, 0.0
      %v3403 = vmax.f32 %v3371, 0.0
      %v3404 = vmax.f32 %v3372, 0.0
      %v3405 = vmax.f32 %v3373, 0.0
      %v3406 = vmax.f32 %v3374, 0.0
      %v3407 = vmax.f32 %v3375, 0.0
      %v3408 = vmax.f32 %v3376, 0.0
      %v3409 = vmax.f32 %v3377, 0.0
      %v3410 = vmax.f32 %v3378, 0.0
      %v3411 = vmax.f32 %v3379, 0.0
      %v3412 = vmax.f32 %v3380, 0.0
      %v3413 = vmax.f32 %v3381, 0.0
      %v3414 = vmax.f32 %v3382, 0.0
      %v3415 = vmax.f32 %v3383, 0.0
      %v3416 = vmax.f32 %v3384, 0.0
      %v3417 = vmax.f32 %v3385, 0.0
      %v3418 = vmax.f32 %v3386, 0.0
      %v3419 = vmax.f32 %v3387, 0.0
      %v3420 = vmax.f32 %v3388, 0.0
      %v3421 = vmax.f32 %v3389, 0.0
      %v3422 = vmax.f32 %v3390, 0.0
      %v3423 = vmax.f32 %v3391, 0.0
      %v3424 = vmax.f32 %v3392, 0.0
      %s3425 = scalar_lea.vmem %s143, 512
      %3426 = vst.msk [vmem:[%s3425] sm:$0xff] %vm1048, %v3393
      %3427 = vst.msk [vmem:[%s3425 + $0x8] sm:$0xff] %vm1048, %v3394
      %3428 = vst.msk [vmem:[%s3425 + $0x10] sm:$0xff] %vm1048, %v3395
      %3429 = vst.msk [vmem:[%s3425 + $0x18] sm:$0xff] %vm1048, %v3396
      %3430 = vst.msk [vmem:[%s3425 + $0x20] sm:$0xff] %vm1048, %v3397
      %3431 = vst.msk [vmem:[%s3425 + $0x28] sm:$0xff] %vm1048, %v3398
      %3432 = vst.msk [vmem:[%s3425 + $0x30] sm:$0xff] %vm1048, %v3399
      %3433 = vst.msk [vmem:[%s3425 + $0x38] sm:$0xff] %vm1048, %v3400
      %3434 = vst.msk [vmem:[%s3425 + $0x40] sm:$0xff] %vm1048, %v3401
      %3435 = vst.msk [vmem:[%s3425 + $0x48] sm:$0xff] %vm1048, %v3402
      %3436 = vst.msk [vmem:[%s3425 + $0x50] sm:$0xff] %vm1048, %v3403
      %3437 = vst.msk [vmem:[%s3425 + $0x58] sm:$0xff] %vm1048, %v3404
      %3438 = vst.msk [vmem:[%s3425 + $0x60] sm:$0xff] %vm1048, %v3405
      %3439 = vst.msk [vmem:[%s3425 + $0x68] sm:$0xff] %vm1048, %v3406
      %3440 = vst.msk [vmem:[%s3425 + $0x70] sm:$0xff] %vm1048, %v3407
      %3441 = vst.msk [vmem:[%s3425 + $0x78] sm:$0xff] %vm1048, %v3408
      %3442 = vst.msk [vmem:[%s3425 + $0x80] sm:$0xff] %vm1048, %v3409
      %3443 = vst.msk [vmem:[%s3425 + $0x88] sm:$0xff] %vm1048, %v3410
      %3444 = vst.msk [vmem:[%s3425 + $0x90] sm:$0xff] %vm1048, %v3411
      %3445 = vst.msk [vmem:[%s3425 + $0x98] sm:$0xff] %vm1048, %v3412
      %3446 = vst.msk [vmem:[%s3425 + $0xa0] sm:$0xff] %vm1048, %v3413
      %3447 = vst.msk [vmem:[%s3425 + $0xa8] sm:$0xff] %vm1048, %v3414
      %3448 = vst.msk [vmem:[%s3425 + $0xb0] sm:$0xff] %vm1048, %v3415
      %3449 = vst.msk [vmem:[%s3425 + $0xb8] sm:$0xff] %vm1048, %v3416
      %3450 = vst.msk [vmem:[%s3425 + $0xc0] sm:$0xff] %vm1048, %v3417
      %3451 = vst.msk [vmem:[%s3425 + $0xc8] sm:$0xff] %vm1048, %v3418
      %3452 = vst.msk [vmem:[%s3425 + $0xd0] sm:$0xff] %vm1048, %v3419
      %3453 = vst.msk [vmem:[%s3425 + $0xd8] sm:$0xff] %vm1048, %v3420
      %3454 = vst.msk [vmem:[%s3425 + $0xe0] sm:$0xff] %vm1048, %v3421
      %3455 = vst.msk [vmem:[%s3425 + $0xe8] sm:$0xff] %vm1048, %v3422
      %3456 = vst.msk [vmem:[%s3425 + $0xf0] sm:$0xff] %vm1048, %v3423
      %3457 = vst.msk [vmem:[%s3425 + $0xf8] sm:$0xff] %vm1048, %v3424
      %v3458 = vld [vmem:[%s2765] sm:$0xff]
      %v3459 = vld [vmem:[%s2765 + $0x8] sm:$0xff]
      %v3460 = vld [vmem:[%s2765 + $0x10] sm:$0xff]
      %v3461 = vld [vmem:[%s2765 + $0x18] sm:$0xff]
      %v3462 = vld [vmem:[%s2765 + $0x20] sm:$0xff]
      %v3463 = vld [vmem:[%s2765 + $0x28] sm:$0xff]
      %v3464 = vld [vmem:[%s2765 + $0x30] sm:$0xff]
      %v3465 = vld [vmem:[%s2765 + $0x38] sm:$0xff]
      %v3466 = vld [vmem:[%s2765 + $0x40] sm:$0xff]
      %v3467 = vld [vmem:[%s2765 + $0x48] sm:$0xff]
      %v3468 = vld [vmem:[%s2765 + $0x50] sm:$0xff]
      %v3469 = vld [vmem:[%s2765 + $0x58] sm:$0xff]
      %v3470 = vld [vmem:[%s2765 + $0x60] sm:$0xff]
      %v3471 = vld [vmem:[%s2765 + $0x68] sm:$0xff]
      %v3472 = vld [vmem:[%s2765 + $0x70] sm:$0xff]
      %v3473 = vld [vmem:[%s2765 + $0x78] sm:$0xff]
      %v3474 = vld [vmem:[%s2765 + $0x80] sm:$0xff]
      %v3475 = vld [vmem:[%s2765 + $0x88] sm:$0xff]
      %v3476 = vld [vmem:[%s2765 + $0x90] sm:$0xff]
      %v3477 = vld [vmem:[%s2765 + $0x98] sm:$0xff]
      %v3478 = vld [vmem:[%s2765 + $0xa0] sm:$0xff]
      %v3479 = vld [vmem:[%s2765 + $0xa8] sm:$0xff]
      %v3480 = vld [vmem:[%s2765 + $0xb0] sm:$0xff]
      %v3481 = vld [vmem:[%s2765 + $0xb8] sm:$0xff]
      %v3482 = vld [vmem:[%s2765 + $0xc0] sm:$0xff]
      %v3483 = vld [vmem:[%s2765 + $0xc8] sm:$0xff]
      %v3484 = vld [vmem:[%s2765 + $0xd0] sm:$0xff]
      %v3485 = vld [vmem:[%s2765 + $0xd8] sm:$0xff]
      %v3486 = vld [vmem:[%s2765 + $0xe0] sm:$0xff]
      %v3487 = vld [vmem:[%s2765 + $0xe8] sm:$0xff]
      %v3488 = vld [vmem:[%s2765 + $0xf0] sm:$0xff]
      %v3489 = vld [vmem:[%s2765 + $0xf8] sm:$0xff]
      %v3490 = vsub.f32 %v3458, %v2970
      %v3491 = vsub.f32 %v3459, %v2970
      %v3492 = vsub.f32 %v3460, %v2970
      %v3493 = vsub.f32 %v3461, %v2970
      %v3494 = vsub.f32 %v3462, %v2970
      %v3495 = vsub.f32 %v3463, %v2970
      %v3496 = vsub.f32 %v3464, %v2970
      %v3497 = vsub.f32 %v3465, %v2970
      %v3498 = vsub.f32 %v3466, %v2970
      %v3499 = vsub.f32 %v3467, %v2970
      %v3500 = vsub.f32 %v3468, %v2970
      %v3501 = vsub.f32 %v3469, %v2970
      %v3502 = vsub.f32 %v3470, %v2970
      %v3503 = vsub.f32 %v3471, %v2970
      %v3504 = vsub.f32 %v3472, %v2970
      %v3505 = vsub.f32 %v3473, %v2970
      %v3506 = vsub.f32 %v3474, %v2970
      %v3507 = vsub.f32 %v3475, %v2970
      %v3508 = vsub.f32 %v3476, %v2970
      %v3509 = vsub.f32 %v3477, %v2970
      %v3510 = vsub.f32 %v3478, %v2970
      %v3511 = vsub.f32 %v3479, %v2970
      %v3512 = vsub.f32 %v3480, %v2970
      %v3513 = vsub.f32 %v3481, %v2970
      %v3514 = vsub.f32 %v3482, %v2970
      %v3515 = vsub.f32 %v3483, %v2970
      %v3516 = vsub.f32 %v3484, %v2970
      %v3517 = vsub.f32 %v3485, %v2970
      %v3518 = vsub.f32 %v3486, %v2970
      %v3519 = vsub.f32 %v3487, %v2970
      %v3520 = vsub.f32 %v3488, %v2970
      %v3521 = vsub.f32 %v3489, %v2970
      %v3522 = vmul.f32 %v3490, %v2975
      %v3523 = vmul.f32 %v3491, %v2975
      %v3524 = vmul.f32 %v3492, %v2975
      %v3525 = vmul.f32 %v3493, %v2975
      %v3526 = vmul.f32 %v3494, %v2975
      %v3527 = vmul.f32 %v3495, %v2975
      %v3528 = vmul.f32 %v3496, %v2975
      %v3529 = vmul.f32 %v3497, %v2975
      %v3530 = vmul.f32 %v3498, %v2975
      %v3531 = vmul.f32 %v3499, %v2975
      %v3532 = vmul.f32 %v3500, %v2975
      %v3533 = vmul.f32 %v3501, %v2975
      %v3534 = vmul.f32 %v3502, %v2975
      %v3535 = vmul.f32 %v3503, %v2975
      %v3536 = vmul.f32 %v3504, %v2975
      %v3537 = vmul.f32 %v3505, %v2975
      %v3538 = vmul.f32 %v3506, %v2975
      %v3539 = vmul.f32 %v3507, %v2975
      %v3540 = vmul.f32 %v3508, %v2975
      %v3541 = vmul.f32 %v3509, %v2975
      %v3542 = vmul.f32 %v3510, %v2975
      %v3543 = vmul.f32 %v3511, %v2975
      %v3544 = vmul.f32 %v3512, %v2975
      %v3545 = vmul.f32 %v3513, %v2975
      %v3546 = vmul.f32 %v3514, %v2975
      %v3547 = vmul.f32 %v3515, %v2975
      %v3548 = vmul.f32 %v3516, %v2975
      %v3549 = vmul.f32 %v3517, %v2975
      %v3550 = vmul.f32 %v3518, %v2975
      %v3551 = vmul.f32 %v3519, %v2975
      %v3552 = vmul.f32 %v3520, %v2975
      %v3553 = vmul.f32 %v3521, %v2975
      %v3554 = vmax.f32 %v3522, 0.0
      %v3555 = vmax.f32 %v3523, 0.0
      %v3556 = vmax.f32 %v3524, 0.0
      %v3557 = vmax.f32 %v3525, 0.0
      %v3558 = vmax.f32 %v3526, 0.0
      %v3559 = vmax.f32 %v3527, 0.0
      %v3560 = vmax.f32 %v3528, 0.0
      %v3561 = vmax.f32 %v3529, 0.0
      %v3562 = vmax.f32 %v3530, 0.0
      %v3563 = vmax.f32 %v3531, 0.0
      %v3564 = vmax.f32 %v3532, 0.0
      %v3565 = vmax.f32 %v3533, 0.0
      %v3566 = vmax.f32 %v3534, 0.0
      %v3567 = vmax.f32 %v3535, 0.0
      %v3568 = vmax.f32 %v3536, 0.0
      %v3569 = vmax.f32 %v3537, 0.0
      %v3570 = vmax.f32 %v3538, 0.0
      %v3571 = vmax.f32 %v3539, 0.0
      %v3572 = vmax.f32 %v3540, 0.0
      %v3573 = vmax.f32 %v3541, 0.0
      %v3574 = vmax.f32 %v3542, 0.0
      %v3575 = vmax.f32 %v3543, 0.0
      %v3576 = vmax.f32 %v3544, 0.0
      %v3577 = vmax.f32 %v3545, 0.0
      %v3578 = vmax.f32 %v3546, 0.0
      %v3579 = vmax.f32 %v3547, 0.0
      %v3580 = vmax.f32 %v3548, 0.0
      %v3581 = vmax.f32 %v3549, 0.0
      %v3582 = vmax.f32 %v3550, 0.0
      %v3583 = vmax.f32 %v3551, 0.0
      %v3584 = vmax.f32 %v3552, 0.0
      %v3585 = vmax.f32 %v3553, 0.0
      %s3586 = scalar_lea.vmem %s143, 768
      %3587 = vst.msk [vmem:[%s3586] sm:$0xff] %vm1048, %v3554
      %3588 = vst.msk [vmem:[%s3586 + $0x8] sm:$0xff] %vm1048, %v3555
      %3589 = vst.msk [vmem:[%s3586 + $0x10] sm:$0xff] %vm1048, %v3556
      %3590 = vst.msk [vmem:[%s3586 + $0x18] sm:$0xff] %vm1048, %v3557
      %3591 = vst.msk [vmem:[%s3586 + $0x20] sm:$0xff] %vm1048, %v3558
      %3592 = vst.msk [vmem:[%s3586 + $0x28] sm:$0xff] %vm1048, %v3559
      %3593 = vst.msk [vmem:[%s3586 + $0x30] sm:$0xff] %vm1048, %v3560
      %3594 = vst.msk [vmem:[%s3586 + $0x38] sm:$0xff] %vm1048, %v3561
      %3595 = vst.msk [vmem:[%s3586 + $0x40] sm:$0xff] %vm1048, %v3562
      %3596 = vst.msk [vmem:[%s3586 + $0x48] sm:$0xff] %vm1048, %v3563
      %3597 = vst.msk [vmem:[%s3586 + $0x50] sm:$0xff] %vm1048, %v3564
      %3598 = vst.msk [vmem:[%s3586 + $0x58] sm:$0xff] %vm1048, %v3565
      %3599 = vst.msk [vmem:[%s3586 + $0x60] sm:$0xff] %vm1048, %v3566
      %3600 = vst.msk [vmem:[%s3586 + $0x68] sm:$0xff] %vm1048, %v3567
      %3601 = vst.msk [vmem:[%s3586 + $0x70] sm:$0xff] %vm1048, %v3568
      %3602 = vst.msk [vmem:[%s3586 + $0x78] sm:$0xff] %vm1048, %v3569
      %3603 = vst.msk [vmem:[%s3586 + $0x80] sm:$0xff] %vm1048, %v3570
      %3604 = vst.msk [vmem:[%s3586 + $0x88] sm:$0xff] %vm1048, %v3571
      %3605 = vst.msk [vmem:[%s3586 + $0x90] sm:$0xff] %vm1048, %v3572
      %3606 = vst.msk [vmem:[%s3586 + $0x98] sm:$0xff] %vm1048, %v3573
      %3607 = vst.msk [vmem:[%s3586 + $0xa0] sm:$0xff] %vm1048, %v3574
      %3608 = vst.msk [vmem:[%s3586 + $0xa8] sm:$0xff] %vm1048, %v3575
      %3609 = vst.msk [vmem:[%s3586 + $0xb0] sm:$0xff] %vm1048, %v3576
      %3610 = vst.msk [vmem:[%s3586 + $0xb8] sm:$0xff] %vm1048, %v3577
      %3611 = vst.msk [vmem:[%s3586 + $0xc0] sm:$0xff] %vm1048, %v3578
      %3612 = vst.msk [vmem:[%s3586 + $0xc8] sm:$0xff] %vm1048, %v3579
      %3613 = vst.msk [vmem:[%s3586 + $0xd0] sm:$0xff] %vm1048, %v3580
      %3614 = vst.msk [vmem:[%s3586 + $0xd8] sm:$0xff] %vm1048, %v3581
      %3615 = vst.msk [vmem:[%s3586 + $0xe0] sm:$0xff] %vm1048, %v3582
      %3616 = vst.msk [vmem:[%s3586 + $0xe8] sm:$0xff] %vm1048, %v3583
      %3617 = vst.msk [vmem:[%s3586 + $0xf0] sm:$0xff] %vm1048, %v3584
      %3618 = vst.msk [vmem:[%s3586 + $0xf8] sm:$0xff] %vm1048, %v3585
      %p3619 = scmp.lt.s32.totalorder %s13, 1
      %s3620 = scalar_select %p3619, %s13, 1
      %s3621 = smul.addr %s3620, 128
      %s3622 = smul.addr %s3621, 8
      %s3623 = scalar_lea.vmem %s2, %s3622
      // Predicated region
      $region29: #{unet_decompress.1} parent=27 // pred_check
        %p3624 = pneg %p78
      $region30: #{unet_decompress.1} parent=27 // pred_check_branch
        %3626 = sbr.rel (%p3624) target = $region32
      $region31: #{unet_decompress.1} parent=27 // pred_region
        _
      $region32: #{unet_decompress.1} parent=27 // pred_fallthru
        _
    $region28: #{unet_decompress.1} parent=5 // pred_fallthru
      _
    %p3627 = scmp.le.s32.totalorder 2, %s8
    // Predicated region
    $region33: #{unet_decompress.1} parent=5 // pred_check
      %p3628 = pneg %p3627
    $region34: #{unet_decompress.1} parent=5 // pred_check_branch
      %3630 = sbr.rel (%p3628) target = $region36
    $region35: #{unet_decompress.1} parent=5 // pred_region
      %s3631 = ssub.s32 %s8, 2
      // Predicated region
      $region37: #{unet_decompress.1} parent=35 // pred_check
        %p3632 = pneg %p84
      $region38: #{unet_decompress.1} parent=35 // pred_check_branch
        %3634 = sbr.rel (%p3632) target = $region40
      $region39: #{unet_decompress.1} parent=35 // pred_region
        %p3635 = scmp.lt.s32.totalorder %s14, 1
        %s3636 = scalar_select %p3635, %s14, 1
        %s3637 = smul.addr %s3636, 128
        %s3638 = smul.addr %s3637, 8
        %s3639 = scalar_lea.vmem %s2, %s3638
      $region40: #{unet_decompress.1} parent=35 // pred_fallthru
        _
    $region36: #{unet_decompress.1} parent=5 // pred_fallthru
      _
  $region6: #{unet_decompress.1} parent=0 // loop_footer
    %s12 = sadd.s32 1, %s8
  $region7: #{unet_decompress.1} parent=0 // loop_footer_branch
    %7 = sbr.rel target = $region3
  $region8: #{unet_decompress.1} parent=0 // loop_exit
    _

</llo_original>
